<compile_context>
chip_gen: v7x
topology: tpu7x:2x2x1
jax: 0.10.0
libtpu: 0.0.40
codegen_flags: <defaults>
</compile_context>

<pallas_src>
import functools

import numpy as np
import jax
import jax.numpy as jnp
from jax.experimental import pallas as pl
from jax.experimental.pallas import tpu as pltpu


# ---------------------------------------------------------------------------
# Fixed LeNet geometry (the torch module requires 3x32x32 inputs).
# ---------------------------------------------------------------------------
_K = 5                         # both convs are 5x5 'valid'
_C1_IN, _C1_OUT = 3, 6
_C2_IN, _C2_OUT = 6, 16
_H1 = _W1 = 32                 # conv1 input spatial
_HO1 = _WO1 = _H1 - _K + 1     # 28
_HP1 = _WP1 = _HO1 // 2        # 14 (after 2x2/2 pool)
_H2 = _W2 = _HP1               # 14 conv2 input spatial
_HO2 = _WO2 = _H2 - _K + 1     # 10
_HP2 = _WP2 = _HO2 // 2        # 5
_CP = 16                       # channel pad -> im2col row slabs are (16,128)-tile aligned
_L1 = _HO1 * _W1               # 896: flat conv1 output width (incl. wrap columns)
_L2 = _HO2 * _W2               # 140: flat conv2 output width
_LC1 = _L1 - (_W1 + 1)         # 863: width after the 4-way shifted max
_LC2 = _L2 - (_W2 + 1)         # 125
_XPAD1 = _H1 * _W1 + 128       # 1152 >= 1024 + max offset (4*32+4), multiple of 128
_XPAD2 = 256                   # >= 196 + max offset (4*14+4), multiple of 128
_NFEAT = _C2_OUT * _HP2 * _WP2 # 400


def _pool_select_matrix(W, Ho, Wo, out_cols):
    """0/1 matrix that picks flat columns (2*py)*W + 2*px out of the 4-way
    shifted-max row, turning the stride-2 downsample into a small matmul."""
    Hp, Wp = Ho // 2, Wo // 2
    Lc = Ho * W - (W + 1)
    sel = np.zeros((Lc, out_cols), np.float32)
    for py in range(Hp):
        for px in range(Wp):
            sel[(2 * py) * W + 2 * px, py * Wp + px] = 1.0
    return sel


# ---------------------------------------------------------------------------
# Fused conv stage: conv1 + bias + ReLU + pool1 + conv2 + bias + ReLU + pool2
# + flatten, for a block of `bt` images per grid step.
# ---------------------------------------------------------------------------
def _features_kernel(x_ref, e1_ref, w1_ref, b1_ref, sel1_ref,
                     w2_ref, b2_ref, sel2_ref, o_ref, col1, col2):
    bt = x_ref.shape[0]

    @pl.loop(0, bt)
    def _per_image(i):
        # ---- stage image i: f32 -> bf16 cast in VMEM, channel pad 3 -> 16 via
        # ---- a tiny 0/1 embedding matmul, lane pad with zeros so every
        # ---- (ky,kx) lane-slice of the flattened image stays in bounds.
        xi = x_ref[i].astype(jnp.bfloat16)                       # (3, 1024)
        xr = jnp.dot(e1_ref[...], xi,
                     preferred_element_type=jnp.float32)         # (16, 1024)
        xv = jnp.concatenate(
            [xr, jnp.zeros((_CP, _XPAD1 - _H1 * _W1), jnp.float32)], axis=1)
        xv = xv.astype(jnp.bfloat16)                             # (16, 1152)

        # ---- conv1 as ONE stacked im2col GEMM (K = 25*16 = 400) ----
        j = 0
        for ky in range(_K):
            for kx in range(_K):
                d = ky * _W1 + kx
                col1[j * _CP:(j + 1) * _CP, :] = xv[:, d:d + _L1]
                j += 1
        acc1 = jnp.dot(w1_ref[...], col1[...],
                       preferred_element_type=jnp.float32)       # (16, 896)
        acc1 = jnp.maximum(acc1 + b1_ref[...], 0.0)              # bias + ReLU (f32)

        # ---- 2x2/2 maxpool: shifted max + 0/1 stride-2 selection matmul.
        # sel1 also zero-pads the pooled row to conv2's padded lane width.
        m1 = jnp.maximum(jnp.maximum(acc1[:, 0:_LC1], acc1[:, 1:1 + _LC1]),
                         jnp.maximum(acc1[:, _W1:_W1 + _LC1],
                                     acc1[:, _W1 + 1:_W1 + 1 + _LC1]))
        pooled1 = jnp.dot(m1.astype(jnp.bfloat16), sel1_ref[...],
                          preferred_element_type=jnp.float32)    # (16, 256)

        # ---- conv2 on the pooled activation (never leaves VMEM) ----
        x2v = pooled1.astype(jnp.bfloat16)                       # (16, 256)
        j = 0
        for ky in range(_K):
            for kx in range(_K):
                d = ky * _W2 + kx
                col2[j * _CP:(j + 1) * _CP, :] = x2v[:, d:d + _L2]
                j += 1
        acc2 = jnp.dot(w2_ref[...], col2[...],
                       preferred_element_type=jnp.float32)       # (16, 140)
        acc2 = jnp.maximum(acc2 + b2_ref[...], 0.0)
        m2 = jnp.maximum(jnp.maximum(acc2[:, 0:_LC2], acc2[:, 1:1 + _LC2]),
                         jnp.maximum(acc2[:, _W2:_W2 + _LC2],
                                     acc2[:, _W2 + 1:_W2 + 1 + _LC2]))
        pooled2 = jnp.dot(m2.astype(jnp.bfloat16), sel2_ref[...],
                          preferred_element_type=jnp.float32)    # (16, 25)

        # ---- flatten to torch's .view(-1, 400) order into a lane-dense row ----
        for c in range(_C2_OUT):
            o_ref[i, :, c * 25:(c + 1) * 25] = pooled2[c:c + 1, :]


def conv_features(x_flat, e1, w1, b1, sel1, w2, b2, sel2, *, bt):
    """x_flat: (B, 3, 1024) f32 -> flattened features (B, 1, 400) f32."""
    B = x_flat.shape[0]
    return pl.pallas_call(
        _features_kernel,
        out_shape=jax.ShapeDtypeStruct((B, 1, _NFEAT), jnp.float32),
        grid=(pl.cdiv(B, bt),),
        in_specs=[
            pl.BlockSpec((bt, _C1_IN, _H1 * _W1), lambda g: (g, 0, 0)),
            pl.BlockSpec((_CP, _C1_IN), lambda g: (0, 0)),
            pl.BlockSpec((_CP, _K * _K * _CP), lambda g: (0, 0)),
            pl.BlockSpec((_CP, 1), lambda g: (0, 0)),
            pl.BlockSpec((_LC1, _XPAD2), lambda g: (0, 0)),
            pl.BlockSpec((_C2_OUT, _K * _K * _CP), lambda g: (0, 0)),
            pl.BlockSpec((_C2_OUT, 1), lambda g: (0, 0)),
            pl.BlockSpec((_LC2, _HP2 * _WP2), lambda g: (0, 0)),
        ],
        out_specs=pl.BlockSpec((bt, 1, _NFEAT), lambda g: (g, 0, 0)),
        scratch_shapes=[
            pltpu.VMEM((_K * _K * _CP, _L1), jnp.bfloat16),   # conv1 im2col (400, 896)
            pltpu.VMEM((_K * _K * _CP, _L2), jnp.bfloat16),   # conv2 im2col (400, 140)
        ],
        compiler_params=pltpu.CompilerParams(
            dimension_semantics=("parallel",),
            vmem_limit_bytes=32 * 1024 * 1024),
    )(x_flat, e1, w1, b1, sel1, w2, b2, sel2)


# ---------------------------------------------------------------------------
# Fused MLP head: fc1 -> ReLU -> fc2 -> ReLU -> fc3 (intermediates stay in VMEM).
# ---------------------------------------------------------------------------
def _mlp_kernel(a_ref, w1_ref, b1_ref, w2_ref, b2_ref, w3_ref, b3_ref, o_ref):
    a = a_ref[...].astype(jnp.bfloat16)
    h = jnp.dot(a, w1_ref[...], preferred_element_type=jnp.float32)
    h = jnp.maximum(h + b1_ref[...], 0.0)
    h = jnp.dot(h.astype(jnp.bfloat16), w2_ref[...],
                preferred_element_type=jnp.float32)
    h = jnp.maximum(h + b2_ref[...], 0.0)
    out = jnp.dot(h.astype(jnp.bfloat16), w3_ref[...],
                  preferred_element_type=jnp.float32) + b3_ref[...]
    o_ref[...] = out.astype(o_ref.dtype)


def mlp_head(a, w1, b1, w2, b2, w3, b3, *, bm):
    """a: (B, 400) f32; w*: (in, out) bf16; b*: (1, out) f32 -> (B, 10) f32."""
    B, K = a.shape
    N = w3.shape[1]
    full2d = lambda arr: pl.BlockSpec(arr.shape, lambda i: (0, 0))
    return pl.pallas_call(
        _mlp_kernel,
        out_shape=jax.ShapeDtypeStruct((B, N), jnp.float32),
        grid=(pl.cdiv(B, bm),),
        in_specs=[pl.BlockSpec((bm, K), lambda i: (i, 0)),
                  full2d(w1), full2d(b1), full2d(w2), full2d(b2),
                  full2d(w3), full2d(b3)],
        out_specs=pl.BlockSpec((bm, N), lambda i: (i, 0)),
        compiler_params=pltpu.CompilerParams(
            dimension_semantics=("parallel",),
            vmem_limit_bytes=32 * 1024 * 1024),
    )(a, w1, b1, w2, b2, w3, b3)


# ---------------------------------------------------------------------------
# Parameters (torch layout) + one-time re-layout for the kernels.
# ---------------------------------------------------------------------------
def init_params(key):
    def uinit(k, shape, fan_in):
        bound = 1.0 / np.sqrt(fan_in)
        return jax.random.uniform(k, shape, jnp.float32, -bound, bound)
    ks = jax.random.split(key, 10)
    return {
        "conv1_w": uinit(ks[0], (6, 3, 5, 5), 3 * 25),
        "conv1_b": uinit(ks[1], (6,), 3 * 25),
        "conv2_w": uinit(ks[2], (16, 6, 5, 5), 6 * 25),
        "conv2_b": uinit(ks[3], (16,), 6 * 25),
        "fc1_w": uinit(ks[4], (120, 400), 400),   # torch Linear: (out, in)
        "fc1_b": uinit(ks[5], (120,), 400),
        "fc2_w": uinit(ks[6], (84, 120), 120),
        "fc2_b": uinit(ks[7], (84,), 120),
        "fc3_w": uinit(ks[8], (10, 84), 84),
        "fc3_b": uinit(ks[9], (10,), 84),
    }


def prepare_params(p):
    """One-time re-layout of torch-shaped params into kernel-friendly layouts
    (2-D bf16 im2col weights with channel padding, bf16 selection matrices)."""
    def conv_w(w, cout_pad):          # OIHW -> (cout_pad, 25*16) bf16
        cout, cin, k, _ = w.shape
        wt = jnp.transpose(w, (0, 2, 3, 1)).reshape(cout, k * k, cin)
        wt = jnp.pad(wt, ((0, cout_pad - cout), (0, 0), (0, _CP - cin)))
        return wt.reshape(cout_pad, k * k * _CP).astype(jnp.bfloat16)

    def conv_b(b, cout_pad):
        return jnp.pad(b.reshape(-1, 1),
                       ((0, cout_pad - b.shape[0]), (0, 0))).astype(jnp.float32)

    return {
        "chan_embed": jnp.asarray(np.eye(_CP, _C1_IN, dtype=np.float32),
                                  dtype=jnp.bfloat16),
        "conv1_w": conv_w(p["conv1_w"], _CP),     # Cout padded 6->16 (zero rows)
        "conv1_b": conv_b(p["conv1_b"], _CP),
        "sel1": jnp.asarray(_pool_select_matrix(_W1, _HO1, _WO1, _XPAD2),
                            dtype=jnp.bfloat16),
        "conv2_w": conv_w(p["conv2_w"], _C2_OUT),
        "conv2_b": conv_b(p["conv2_b"], _C2_OUT),
        "sel2": jnp.asarray(_pool_select_matrix(_W2, _HO2, _WO2, _HP2 * _WP2),
                            dtype=jnp.bfloat16),
        "fc1_w": p["fc1_w"].T.astype(jnp.bfloat16),   # (400, 120)
        "fc1_b": p["fc1_b"].reshape(1, -1).astype(jnp.float32),
        "fc2_w": p["fc2_w"].T.astype(jnp.bfloat16),   # (120, 84)
        "fc2_b": p["fc2_b"].reshape(1, -1).astype(jnp.float32),
        "fc3_w": p["fc3_w"].T.astype(jnp.bfloat16),   # (84, 10)
        "fc3_b": p["fc3_b"].reshape(1, -1).astype(jnp.float32),
    }


# ---------------------------------------------------------------------------
# Forward passes.
# ---------------------------------------------------------------------------
def net_forward(x, kp, *, bt=None, bm=None):
    """x: (B, 3, 32, 32) f32 NCHW; kp: prepare_params(...) -> logits (B, 10) f32."""
    B, C, H, W = x.shape
    assert (C, H, W) == (_C1_IN, _H1, _W1), "Net requires 3x32x32 inputs"
    if bt is None:
        bt = min(B, 64)      # images per conv grid step (pick <= B//2 if you want
                             # >=2 grid steps for v7x dual-TensorCore sharding)
    if bm is None:
        bm = 256 if B >= 256 else min(B, 128)   # fc row tile (256 fills v6e/v7x MXU)

    x_flat = x.reshape(B, C, H * W)             # free reshape; bf16 cast is in-kernel
    feats = conv_features(x_flat, kp["chan_embed"], kp["conv1_w"], kp["conv1_b"],
                          kp["sel1"], kp["conv2_w"], kp["conv2_b"], kp["sel2"],
                          bt=bt)
    feats = feats.reshape(B, _NFEAT)            # drop unit dim (free)
    return mlp_head(feats, kp["fc1_w"], kp["fc1_b"], kp["fc2_w"], kp["fc2_b"],
                    kp["fc3_w"], kp["fc3_b"], bm=bm)


def net_forward_reference(x, p):
    """Pure-JAX reference (torch-layout params) with the same bf16-input /
    f32-accumulate matmul precision as the Pallas kernels."""
    dn = ("NCHW", "OIHW", "NCHW")

    def conv_block(y, w, b):
        y = jax.lax.conv_general_dilated(
            y.astype(jnp.bfloat16), w.astype(jnp.bfloat16), (1, 1), "VALID",
            dimension_numbers=dn, preferred_element_type=jnp.float32)
        y = jax.nn.relu(y + b[None, :, None, None])
        return jax.lax.reduce_window(y, -jnp.inf, jax.lax.max,
                                     (1, 1, 2, 2), (1, 1, 2, 2), "VALID")

    def lin(a, w, b):   # torch Linear with (out, in) weights
        return jnp.dot(a.astype(jnp.bfloat16), w.T.astype(jnp.bfloat16),
                       preferred_element_type=jnp.float32) + b

    y = conv_block(x, p["conv1_w"], p["conv1_b"])
    y = conv_block(y, p["conv2_w"], p["conv2_b"])
    y = y.reshape(y.shape[0], -1)
    y = jax.nn.relu(lin(y, p["fc1_w"], p["fc1_b"]))
    y = jax.nn.relu(lin(y, p["fc2_w"], p["fc2_b"]))
    return lin(y, p["fc3_w"], p["fc3_b"])


if __name__ == "__main__":
    torch_params = init_params(jax.random.PRNGKey(42))
    kernel_params = prepare_params(torch_params)          # one-time re-layout

    # 1) Small batch (single grid step in both kernels).
    x = jax.random.normal(jax.random.PRNGKey(0), (2, 3, 32, 32), jnp.float32)
    out = jax.block_until_ready(jax.jit(net_forward)(x, kernel_params))
    assert out.shape == (2, 10) and out.dtype == jnp.float32
    ref = jax.block_until_ready(jax.jit(net_forward_reference)(x, torch_params))
    np.testing.assert_allclose(np.asarray(out), np.asarray(ref),
                               rtol=2e-2, atol=2e-2)

    # 2) Multi-step + ragged grids: B=12 with bt=bm=8 -> 2 grid steps per
    #    kernel, last block partially out of bounds (masked on writeback).
    x2 = jax.random.normal(jax.random.PRNGKey(1), (12, 3, 32, 32), jnp.float32)
    fwd_ragged = jax.jit(functools.partial(net_forward, bt=8, bm=8))
    out2 = jax.block_until_ready(fwd_ragged(x2, kernel_params))
    ref2 = jax.block_until_ready(jax.jit(net_forward_reference)(x2, torch_params))
    np.testing.assert_allclose(np.asarray(out2), np.asarray(ref2),
                               rtol=2e-2, atol=2e-2)

    print("KERNEL_OK")
</pallas_src>

<mosaic_0001>
module attributes {stable_mosaic.version = 11 : i64} {
  func.func @_features_kernel(%arg0: i32, %arg1: memref<2x3x1024xf32, #tpu.memory_space<vmem>>, %arg2: memref<16x3xbf16, #tpu.memory_space<vmem>>, %arg3: memref<16x400xbf16, #tpu.memory_space<vmem>>, %arg4: memref<16x1xf32, #tpu.memory_space<vmem>>, %arg5: memref<863x256xbf16, #tpu.memory_space<vmem>>, %arg6: memref<16x400xbf16, #tpu.memory_space<vmem>>, %arg7: memref<16x1xf32, #tpu.memory_space<vmem>>, %arg8: memref<125x25xbf16, #tpu.memory_space<vmem>>, %arg9: memref<2x1x400xf32, #tpu.memory_space<vmem>>, %arg10: memref<400x896xbf16, #tpu.memory_space<vmem>>, %arg11: memref<400x140xbf16, #tpu.memory_space<vmem>>) attributes {dimension_semantics = [#tpu.dimension_semantics<parallel>], iteration_bounds = array<i64: 1>, scalar_prefetch = 0 : i64, scratch_operands = 2 : i64, tpu.core_type = #tpu.core_type<tc>, window_params = [{transform_indices = @transform_0, window_bounds = array<i64: 2, 3, 1024>}, {pipeline_mode = #tpu.pipeline_mode<synchronous>, transform_indices = @transform_1, window_bounds = array<i64: 16, 3>}, {pipeline_mode = #tpu.pipeline_mode<synchronous>, transform_indices = @transform_2, window_bounds = array<i64: 16, 400>}, {pipeline_mode = #tpu.pipeline_mode<synchronous>, transform_indices = @transform_3, window_bounds = array<i64: 16, 1>}, {pipeline_mode = #tpu.pipeline_mode<synchronous>, transform_indices = @transform_4, window_bounds = array<i64: 863, 256>}, {pipeline_mode = #tpu.pipeline_mode<synchronous>, transform_indices = @transform_5, window_bounds = array<i64: 16, 400>}, {pipeline_mode = #tpu.pipeline_mode<synchronous>, transform_indices = @transform_6, window_bounds = array<i64: 16, 1>}, {pipeline_mode = #tpu.pipeline_mode<synchronous>, transform_indices = @transform_7, window_bounds = array<i64: 125, 25>}, {transform_indices = @transform_8, window_bounds = array<i64: 2, 1, 400>}]} {
    %c0_i32 = arith.constant 0 : i32
    %c2_i32 = arith.constant 2 : i32
    %0 = arith.addi %c0_i32, %c2_i32 : i32
    %c1_i32 = arith.constant 1 : i32
    scf.for %arg12 = %c0_i32 to %0 step %c1_i32  : i32 {
      %c1_i32_1 = arith.constant 1 : i32
      %1 = arith.muli %arg12, %c1_i32_1 : i32
      %c0_i32_2 = arith.constant 0 : i32
      %2 = arith.addi %c0_i32_2, %1 : i32
      %3 = arith.index_cast %2 : i32 to index
      %c0 = arith.constant 0 : index
      %c0_3 = arith.constant 0 : index
      %4 = vector.load %arg1[%3, %c0, %c0_3] : memref<2x3x1024xf32, #tpu.memory_space<vmem>>, vector<1x3x1024xf32>
      %5 = vector.shape_cast %4 : vector<1x3x1024xf32> to vector<3x1024xf32>
      %6 = arith.truncf %5 : vector<3x1024xf32> to vector<3x1024xbf16>
      %c0_4 = arith.constant 0 : index
      %c0_5 = arith.constant 0 : index
      %7 = vector.load %arg2[%c0_4, %c0_5] : memref<16x3xbf16, #tpu.memory_space<vmem>>, vector<16x3xbf16>
      %cst = arith.constant dense<0.000000e+00> : vector<16x1024xf32>
      %8 = tpu.matmul %7, %6, %cst {dimension_numbers = #tpu.dot_dimension_numbers<[1], [0], [0], [1], [0, 0, 1, 1], [], []>} : vector<16x3xbf16>, vector<3x1024xbf16>, vector<16x1024xf32> -> vector<16x1024xf32>
      %cst_6 = arith.constant 0.000000e+00 : f32
      %9 = vector.broadcast %cst_6 : f32 to vector<16x128xf32>
      %10 = tpu.concatenate %8, %9 in 1 : vector<16x1024xf32>, vector<16x128xf32> -> vector<16x1152xf32>
      %11 = arith.truncf %10 : vector<16x1152xf32> to vector<16x1152xbf16>
      %12 = vector.extract_strided_slice %11 {offsets = [0, 0], sizes = [16, 896], strides = [1, 1]} : vector<16x1152xbf16> to vector<16x896xbf16>
      %c0_7 = arith.constant 0 : index
      %c0_8 = arith.constant 0 : index
      %13 = vector.load %arg10[%c0_7, %c0_8] : memref<400x896xbf16, #tpu.memory_space<vmem>>, vector<16x896xbf16>
      tpu.vector_store %arg10[%c0_7, %c0_8], %12 {strides = array<i32>} : memref<400x896xbf16, #tpu.memory_space<vmem>>, vector<16x896xbf16>,
      %14 = vector.extract_strided_slice %11 {offsets = [0, 1], sizes = [16, 896], strides = [1, 1]} : vector<16x1152xbf16> to vector<16x896xbf16>
      %c16 = arith.constant 16 : index
      %c0_9 = arith.constant 0 : index
      %15 = vector.load %arg10[%c16, %c0_9] : memref<400x896xbf16, #tpu.memory_space<vmem>>, vector<16x896xbf16>
      tpu.vector_store %arg10[%c16, %c0_9], %14 {strides = array<i32>} : memref<400x896xbf16, #tpu.memory_space<vmem>>, vector<16x896xbf16>,
      %16 = vector.extract_strided_slice %11 {offsets = [0, 2], sizes = [16, 896], strides = [1, 1]} : vector<16x1152xbf16> to vector<16x896xbf16>
      %c32 = arith.constant 32 : index
      %c0_10 = arith.constant 0 : index
      %17 = vector.load %arg10[%c32, %c0_10] : memref<400x896xbf16, #tpu.memory_space<vmem>>, vector<16x896xbf16>
      tpu.vector_store %arg10[%c32, %c0_10], %16 {strides = array<i32>} : memref<400x896xbf16, #tpu.memory_space<vmem>>, vector<16x896xbf16>,
      %18 = vector.extract_strided_slice %11 {offsets = [0, 3], sizes = [16, 896], strides = [1, 1]} : vector<16x1152xbf16> to vector<16x896xbf16>
      %c48 = arith.constant 48 : index
      %c0_11 = arith.constant 0 : index
      %19 = vector.load %arg10[%c48, %c0_11] : memref<400x896xbf16, #tpu.memory_space<vmem>>, vector<16x896xbf16>
      tpu.vector_store %arg10[%c48, %c0_11], %18 {strides = array<i32>} : memref<400x896xbf16, #tpu.memory_space<vmem>>, vector<16x896xbf16>,
      %20 = vector.extract_strided_slice %11 {offsets = [0, 4], sizes = [16, 896], strides = [1, 1]} : vector<16x1152xbf16> to vector<16x896xbf16>
      %c64 = arith.constant 64 : index
      %c0_12 = arith.constant 0 : index
      %21 = vector.load %arg10[%c64, %c0_12] : memref<400x896xbf16, #tpu.memory_space<vmem>>, vector<16x896xbf16>
      tpu.vector_store %arg10[%c64, %c0_12], %20 {strides = array<i32>} : memref<400x896xbf16, #tpu.memory_space<vmem>>, vector<16x896xbf16>,
      %22 = vector.extract_strided_slice %11 {offsets = [0, 32], sizes = [16, 896], strides = [1, 1]} : vector<16x1152xbf16> to vector<16x896xbf16>
      %c80 = arith.constant 80 : index
      %c0_13 = arith.constant 0 : index
      %23 = vector.load %arg10[%c80, %c0_13] : memref<400x896xbf16, #tpu.memory_space<vmem>>, vector<16x896xbf16>
      tpu.vector_store %arg10[%c80, %c0_13], %22 {strides = array<i32>} : memref<400x896xbf16, #tpu.memory_space<vmem>>, vector<16x896xbf16>,
      %24 = vector.extract_strided_slice %11 {offsets = [0, 33], sizes = [16, 896], strides = [1, 1]} : vector<16x1152xbf16> to vector<16x896xbf16>
      %c96 = arith.constant 96 : index
      %c0_14 = arith.constant 0 : index
      %25 = vector.load %arg10[%c96, %c0_14] : memref<400x896xbf16, #tpu.memory_space<vmem>>, vector<16x896xbf16>
      tpu.vector_store %arg10[%c96, %c0_14], %24 {strides = array<i32>} : memref<400x896xbf16, #tpu.memory_space<vmem>>, vector<16x896xbf16>,
      %26 = vector.extract_strided_slice %11 {offsets = [0, 34], sizes = [16, 896], strides = [1, 1]} : vector<16x1152xbf16> to vector<16x896xbf16>
      %c112 = arith.constant 112 : index
      %c0_15 = arith.constant 0 : index
      %27 = vector.load %arg10[%c112, %c0_15] : memref<400x896xbf16, #tpu.memory_space<vmem>>, vector<16x896xbf16>
      tpu.vector_store %arg10[%c112, %c0_15], %26 {strides = array<i32>} : memref<400x896xbf16, #tpu.memory_space<vmem>>, vector<16x896xbf16>,
      %28 = vector.extract_strided_slice %11 {offsets = [0, 35], sizes = [16, 896], strides = [1, 1]} : vector<16x1152xbf16> to vector<16x896xbf16>
      %c128 = arith.constant 128 : index
      %c0_16 = arith.constant 0 : index
      %29 = vector.load %arg10[%c128, %c0_16] : memref<400x896xbf16, #tpu.memory_space<vmem>>, vector<16x896xbf16>
      tpu.vector_store %arg10[%c128, %c0_16], %28 {strides = array<i32>} : memref<400x896xbf16, #tpu.memory_space<vmem>>, vector<16x896xbf16>,
      %30 = vector.extract_strided_slice %11 {offsets = [0, 36], sizes = [16, 896], strides = [1, 1]} : vector<16x1152xbf16> to vector<16x896xbf16>
      %c144 = arith.constant 144 : index
      %c0_17 = arith.constant 0 : index
      %31 = vector.load %arg10[%c144, %c0_17] : memref<400x896xbf16, #tpu.memory_space<vmem>>, vector<16x896xbf16>
      tpu.vector_store %arg10[%c144, %c0_17], %30 {strides = array<i32>} : memref<400x896xbf16, #tpu.memory_space<vmem>>, vector<16x896xbf16>,
      %32 = vector.extract_strided_slice %11 {offsets = [0, 64], sizes = [16, 896], strides = [1, 1]} : vector<16x1152xbf16> to vector<16x896xbf16>
      %c160 = arith.constant 160 : index
      %c0_18 = arith.constant 0 : index
      %33 = vector.load %arg10[%c160, %c0_18] : memref<400x896xbf16, #tpu.memory_space<vmem>>, vector<16x896xbf16>
      tpu.vector_store %arg10[%c160, %c0_18], %32 {strides = array<i32>} : memref<400x896xbf16, #tpu.memory_space<vmem>>, vector<16x896xbf16>,
      %34 = vector.extract_strided_slice %11 {offsets = [0, 65], sizes = [16, 896], strides = [1, 1]} : vector<16x1152xbf16> to vector<16x896xbf16>
      %c176 = arith.constant 176 : index
      %c0_19 = arith.constant 0 : index
      %35 = vector.load %arg10[%c176, %c0_19] : memref<400x896xbf16, #tpu.memory_space<vmem>>, vector<16x896xbf16>
      tpu.vector_store %arg10[%c176, %c0_19], %34 {strides = array<i32>} : memref<400x896xbf16, #tpu.memory_space<vmem>>, vector<16x896xbf16>,
      %36 = vector.extract_strided_slice %11 {offsets = [0, 66], sizes = [16, 896], strides = [1, 1]} : vector<16x1152xbf16> to vector<16x896xbf16>
      %c192 = arith.constant 192 : index
      %c0_20 = arith.constant 0 : index
      %37 = vector.load %arg10[%c192, %c0_20] : memref<400x896xbf16, #tpu.memory_space<vmem>>, vector<16x896xbf16>
      tpu.vector_store %arg10[%c192, %c0_20], %36 {strides = array<i32>} : memref<400x896xbf16, #tpu.memory_space<vmem>>, vector<16x896xbf16>,
      %38 = vector.extract_strided_slice %11 {offsets = [0, 67], sizes = [16, 896], strides = [1, 1]} : vector<16x1152xbf16> to vector<16x896xbf16>
      %c208 = arith.constant 208 : index
      %c0_21 = arith.constant 0 : index
      %39 = vector.load %arg10[%c208, %c0_21] : memref<400x896xbf16, #tpu.memory_space<vmem>>, vector<16x896xbf16>
      tpu.vector_store %arg10[%c208, %c0_21], %38 {strides = array<i32>} : memref<400x896xbf16, #tpu.memory_space<vmem>>, vector<16x896xbf16>,
      %40 = vector.extract_strided_slice %11 {offsets = [0, 68], sizes = [16, 896], strides = [1, 1]} : vector<16x1152xbf16> to vector<16x896xbf16>
      %c224 = arith.constant 224 : index
      %c0_22 = arith.constant 0 : index
      %41 = vector.load %arg10[%c224, %c0_22] : memref<400x896xbf16, #tpu.memory_space<vmem>>, vector<16x896xbf16>
      tpu.vector_store %arg10[%c224, %c0_22], %40 {strides = array<i32>} : memref<400x896xbf16, #tpu.memory_space<vmem>>, vector<16x896xbf16>,
      %42 = vector.extract_strided_slice %11 {offsets = [0, 96], sizes = [16, 896], strides = [1, 1]} : vector<16x1152xbf16> to vector<16x896xbf16>
      %c240 = arith.constant 240 : index
      %c0_23 = arith.constant 0 : index
      %43 = vector.load %arg10[%c240, %c0_23] : memref<400x896xbf16, #tpu.memory_space<vmem>>, vector<16x896xbf16>
      tpu.vector_store %arg10[%c240, %c0_23], %42 {strides = array<i32>} : memref<400x896xbf16, #tpu.memory_space<vmem>>, vector<16x896xbf16>,
      %44 = vector.extract_strided_slice %11 {offsets = [0, 97], sizes = [16, 896], strides = [1, 1]} : vector<16x1152xbf16> to vector<16x896xbf16>
      %c256 = arith.constant 256 : index
      %c0_24 = arith.constant 0 : index
      %45 = vector.load %arg10[%c256, %c0_24] : memref<400x896xbf16, #tpu.memory_space<vmem>>, vector<16x896xbf16>
      tpu.vector_store %arg10[%c256, %c0_24], %44 {strides = array<i32>} : memref<400x896xbf16, #tpu.memory_space<vmem>>, vector<16x896xbf16>,
      %46 = vector.extract_strided_slice %11 {offsets = [0, 98], sizes = [16, 896], strides = [1, 1]} : vector<16x1152xbf16> to vector<16x896xbf16>
      %c272 = arith.constant 272 : index
      %c0_25 = arith.constant 0 : index
      %47 = vector.load %arg10[%c272, %c0_25] : memref<400x896xbf16, #tpu.memory_space<vmem>>, vector<16x896xbf16>
      tpu.vector_store %arg10[%c272, %c0_25], %46 {strides = array<i32>} : memref<400x896xbf16, #tpu.memory_space<vmem>>, vector<16x896xbf16>,
      %48 = vector.extract_strided_slice %11 {offsets = [0, 99], sizes = [16, 896], strides = [1, 1]} : vector<16x1152xbf16> to vector<16x896xbf16>
      %c288 = arith.constant 288 : index
      %c0_26 = arith.constant 0 : index
      %49 = vector.load %arg10[%c288, %c0_26] : memref<400x896xbf16, #tpu.memory_space<vmem>>, vector<16x896xbf16>
      tpu.vector_store %arg10[%c288, %c0_26], %48 {strides = array<i32>} : memref<400x896xbf16, #tpu.memory_space<vmem>>, vector<16x896xbf16>,
      %50 = vector.extract_strided_slice %11 {offsets = [0, 100], sizes = [16, 896], strides = [1, 1]} : vector<16x1152xbf16> to vector<16x896xbf16>
      %c304 = arith.constant 304 : index
      %c0_27 = arith.constant 0 : index
      %51 = vector.load %arg10[%c304, %c0_27] : memref<400x896xbf16, #tpu.memory_space<vmem>>, vector<16x896xbf16>
      tpu.vector_store %arg10[%c304, %c0_27], %50 {strides = array<i32>} : memref<400x896xbf16, #tpu.memory_space<vmem>>, vector<16x896xbf16>,
      %52 = vector.extract_strided_slice %11 {offsets = [0, 128], sizes = [16, 896], strides = [1, 1]} : vector<16x1152xbf16> to vector<16x896xbf16>
      %c320 = arith.constant 320 : index
      %c0_28 = arith.constant 0 : index
      %53 = vector.load %arg10[%c320, %c0_28] : memref<400x896xbf16, #tpu.memory_space<vmem>>, vector<16x896xbf16>
      tpu.vector_store %arg10[%c320, %c0_28], %52 {strides = array<i32>} : memref<400x896xbf16, #tpu.memory_space<vmem>>, vector<16x896xbf16>,
      %54 = vector.extract_strided_slice %11 {offsets = [0, 129], sizes = [16, 896], strides = [1, 1]} : vector<16x1152xbf16> to vector<16x896xbf16>
      %c336 = arith.constant 336 : index
      %c0_29 = arith.constant 0 : index
      %55 = vector.load %arg10[%c336, %c0_29] : memref<400x896xbf16, #tpu.memory_space<vmem>>, vector<16x896xbf16>
      tpu.vector_store %arg10[%c336, %c0_29], %54 {strides = array<i32>} : memref<400x896xbf16, #tpu.memory_space<vmem>>, vector<16x896xbf16>,
      %56 = vector.extract_strided_slice %11 {offsets = [0, 130], sizes = [16, 896], strides = [1, 1]} : vector<16x1152xbf16> to vector<16x896xbf16>
      %c352 = arith.constant 352 : index
      %c0_30 = arith.constant 0 : index
      %57 = vector.load %arg10[%c352, %c0_30] : memref<400x896xbf16, #tpu.memory_space<vmem>>, vector<16x896xbf16>
      tpu.vector_store %arg10[%c352, %c0_30], %56 {strides = array<i32>} : memref<400x896xbf16, #tpu.memory_space<vmem>>, vector<16x896xbf16>,
      %58 = vector.extract_strided_slice %11 {offsets = [0, 131], sizes = [16, 896], strides = [1, 1]} : vector<16x1152xbf16> to vector<16x896xbf16>
      %c368 = arith.constant 368 : index
      %c0_31 = arith.constant 0 : index
      %59 = vector.load %arg10[%c368, %c0_31] : memref<400x896xbf16, #tpu.memory_space<vmem>>, vector<16x896xbf16>
      tpu.vector_store %arg10[%c368, %c0_31], %58 {strides = array<i32>} : memref<400x896xbf16, #tpu.memory_space<vmem>>, vector<16x896xbf16>,
      %60 = vector.extract_strided_slice %11 {offsets = [0, 132], sizes = [16, 896], strides = [1, 1]} : vector<16x1152xbf16> to vector<16x896xbf16>
      %c384 = arith.constant 384 : index
      %c0_32 = arith.constant 0 : index
      %61 = vector.load %arg10[%c384, %c0_32] : memref<400x896xbf16, #tpu.memory_space<vmem>>, vector<16x896xbf16>
      tpu.vector_store %arg10[%c384, %c0_32], %60 {strides = array<i32>} : memref<400x896xbf16, #tpu.memory_space<vmem>>, vector<16x896xbf16>,
      %c0_33 = arith.constant 0 : index
      %c0_34 = arith.constant 0 : index
      %62 = vector.load %arg3[%c0_33, %c0_34] : memref<16x400xbf16, #tpu.memory_space<vmem>>, vector<16x400xbf16>
      %c0_35 = arith.constant 0 : index
      %c0_36 = arith.constant 0 : index
      %63 = vector.load %arg10[%c0_35, %c0_36] : memref<400x896xbf16, #tpu.memory_space<vmem>>, vector<400x896xbf16>
      %cst_37 = arith.constant dense<0.000000e+00> : vector<16x896xf32>
      %64 = tpu.matmul %62, %63, %cst_37 {dimension_numbers = #tpu.dot_dimension_numbers<[1], [0], [0], [1], [0, 0, 1, 1], [], []>} : vector<16x400xbf16>, vector<400x896xbf16>, vector<16x896xf32> -> vector<16x896xf32>
      %c0_38 = arith.constant 0 : index
      %c0_39 = arith.constant 0 : index
      %65 = vector.load %arg4[%c0_38, %c0_39] : memref<16x1xf32, #tpu.memory_space<vmem>>, vector<16x1xf32>
      %66 = vector.broadcast %65 : vector<16x1xf32> to vector<16x896xf32>
      %67 = arith.addf %64, %66 : vector<16x896xf32>
      %cst_40 = arith.constant 0.000000e+00 : f32
      %68 = vector.broadcast %cst_40 : f32 to vector<16x896xf32>
      %69 = arith.maximumf %67, %68 : vector<16x896xf32>
      %70 = vector.extract_strided_slice %69 {offsets = [0, 0], sizes = [16, 863], strides = [1, 1]} : vector<16x896xf32> to vector<16x863xf32>
      %71 = vector.extract_strided_slice %69 {offsets = [0, 1], sizes = [16, 863], strides = [1, 1]} : vector<16x896xf32> to vector<16x863xf32>
      %72 = arith.maximumf %70, %71 : vector<16x863xf32>
      %73 = vector.extract_strided_slice %69 {offsets = [0, 32], sizes = [16, 863], strides = [1, 1]} : vector<16x896xf32> to vector<16x863xf32>
      %74 = vector.extract_strided_slice %69 {offsets = [0, 33], sizes = [16, 863], strides = [1, 1]} : vector<16x896xf32> to vector<16x863xf32>
      %75 = arith.maximumf %73, %74 : vector<16x863xf32>
      %76 = arith.maximumf %72, %75 : vector<16x863xf32>
      %77 = arith.truncf %76 : vector<16x863xf32> to vector<16x863xbf16>
      %c0_41 = arith.constant 0 : index
      %c0_42 = arith.constant 0 : index
      %78 = vector.load %arg5[%c0_41, %c0_42] : memref<863x256xbf16, #tpu.memory_space<vmem>>, vector<863x256xbf16>
      %cst_43 = arith.constant dense<0.000000e+00> : vector<16x256xf32>
      %79 = tpu.matmul %77, %78, %cst_43 {dimension_numbers = #tpu.dot_dimension_numbers<[1], [0], [0], [1], [0, 0, 1, 1], [], []>} : vector<16x863xbf16>, vector<863x256xbf16>, vector<16x256xf32> -> vector<16x256xf32>
      %80 = arith.truncf %79 : vector<16x256xf32> to vector<16x256xbf16>
      %81 = vector.extract_strided_slice %80 {offsets = [0, 0], sizes = [16, 140], strides = [1, 1]} : vector<16x256xbf16> to vector<16x140xbf16>
      %c0_44 = arith.constant 0 : index
      %c0_45 = arith.constant 0 : index
      %82 = vector.load %arg11[%c0_44, %c0_45] : memref<400x140xbf16, #tpu.memory_space<vmem>>, vector<16x140xbf16>
      tpu.vector_store %arg11[%c0_44, %c0_45], %81 {strides = array<i32>} : memref<400x140xbf16, #tpu.memory_space<vmem>>, vector<16x140xbf16>,
      %83 = vector.extract_strided_slice %80 {offsets = [0, 1], sizes = [16, 140], strides = [1, 1]} : vector<16x256xbf16> to vector<16x140xbf16>
      %c16_46 = arith.constant 16 : index
      %c0_47 = arith.constant 0 : index
      %84 = vector.load %arg11[%c16_46, %c0_47] : memref<400x140xbf16, #tpu.memory_space<vmem>>, vector<16x140xbf16>
      tpu.vector_store %arg11[%c16_46, %c0_47], %83 {strides = array<i32>} : memref<400x140xbf16, #tpu.memory_space<vmem>>, vector<16x140xbf16>,
      %85 = vector.extract_strided_slice %80 {offsets = [0, 2], sizes = [16, 140], strides = [1, 1]} : vector<16x256xbf16> to vector<16x140xbf16>
      %c32_48 = arith.constant 32 : index
      %c0_49 = arith.constant 0 : index
      %86 = vector.load %arg11[%c32_48, %c0_49] : memref<400x140xbf16, #tpu.memory_space<vmem>>, vector<16x140xbf16>
      tpu.vector_store %arg11[%c32_48, %c0_49], %85 {strides = array<i32>} : memref<400x140xbf16, #tpu.memory_space<vmem>>, vector<16x140xbf16>,
      %87 = vector.extract_strided_slice %80 {offsets = [0, 3], sizes = [16, 140], strides = [1, 1]} : vector<16x256xbf16> to vector<16x140xbf16>
      %c48_50 = arith.constant 48 : index
      %c0_51 = arith.constant 0 : index
      %88 = vector.load %arg11[%c48_50, %c0_51] : memref<400x140xbf16, #tpu.memory_space<vmem>>, vector<16x140xbf16>
      tpu.vector_store %arg11[%c48_50, %c0_51], %87 {strides = array<i32>} : memref<400x140xbf16, #tpu.memory_space<vmem>>, vector<16x140xbf16>,
      %89 = vector.extract_strided_slice %80 {offsets = [0, 4], sizes = [16, 140], strides = [1, 1]} : vector<16x256xbf16> to vector<16x140xbf16>
      %c64_52 = arith.constant 64 : index
      %c0_53 = arith.constant 0 : index
      %90 = vector.load %arg11[%c64_52, %c0_53] : memref<400x140xbf16, #tpu.memory_space<vmem>>, vector<16x140xbf16>
      tpu.vector_store %arg11[%c64_52, %c0_53], %89 {strides = array<i32>} : memref<400x140xbf16, #tpu.memory_space<vmem>>, vector<16x140xbf16>,
      %91 = vector.extract_strided_slice %80 {offsets = [0, 14], sizes = [16, 140], strides = [1, 1]} : vector<16x256xbf16> to vector<16x140xbf16>
      %c80_54 = arith.constant 80 : index
      %c0_55 = arith.constant 0 : index
      %92 = vector.load %arg11[%c80_54, %c0_55] : memref<400x140xbf16, #tpu.memory_space<vmem>>, vector<16x140xbf16>
      tpu.vector_store %arg11[%c80_54, %c0_55], %91 {strides = array<i32>} : memref<400x140xbf16, #tpu.memory_space<vmem>>, vector<16x140xbf16>,
      %93 = vector.extract_strided_slice %80 {offsets = [0, 15], sizes = [16, 140], strides = [1, 1]} : vector<16x256xbf16> to vector<16x140xbf16>
      %c96_56 = arith.constant 96 : index
      %c0_57 = arith.constant 0 : index
      %94 = vector.load %arg11[%c96_56, %c0_57] : memref<400x140xbf16, #tpu.memory_space<vmem>>, vector<16x140xbf16>
      tpu.vector_store %arg11[%c96_56, %c0_57], %93 {strides = array<i32>} : memref<400x140xbf16, #tpu.memory_space<vmem>>, vector<16x140xbf16>,
      %95 = vector.extract_strided_slice %80 {offsets = [0, 16], sizes = [16, 140], strides = [1, 1]} : vector<16x256xbf16> to vector<16x140xbf16>
      %c112_58 = arith.constant 112 : index
      %c0_59 = arith.constant 0 : index
      %96 = vector.load %arg11[%c112_58, %c0_59] : memref<400x140xbf16, #tpu.memory_space<vmem>>, vector<16x140xbf16>
      tpu.vector_store %arg11[%c112_58, %c0_59], %95 {strides = array<i32>} : memref<400x140xbf16, #tpu.memory_space<vmem>>, vector<16x140xbf16>,
      %97 = vector.extract_strided_slice %80 {offsets = [0, 17], sizes = [16, 140], strides = [1, 1]} : vector<16x256xbf16> to vector<16x140xbf16>
      %c128_60 = arith.constant 128 : index
      %c0_61 = arith.constant 0 : index
      %98 = vector.load %arg11[%c128_60, %c0_61] : memref<400x140xbf16, #tpu.memory_space<vmem>>, vector<16x140xbf16>
      tpu.vector_store %arg11[%c128_60, %c0_61], %97 {strides = array<i32>} : memref<400x140xbf16, #tpu.memory_space<vmem>>, vector<16x140xbf16>,
      %99 = vector.extract_strided_slice %80 {offsets = [0, 18], sizes = [16, 140], strides = [1, 1]} : vector<16x256xbf16> to vector<16x140xbf16>
      %c144_62 = arith.constant 144 : index
      %c0_63 = arith.constant 0 : index
      %100 = vector.load %arg11[%c144_62, %c0_63] : memref<400x140xbf16, #tpu.memory_space<vmem>>, vector<16x140xbf16>
      tpu.vector_store %arg11[%c144_62, %c0_63], %99 {strides = array<i32>} : memref<400x140xbf16, #tpu.memory_space<vmem>>, vector<16x140xbf16>,
      %101 = vector.extract_strided_slice %80 {offsets = [0, 28], sizes = [16, 140], strides = [1, 1]} : vector<16x256xbf16> to vector<16x140xbf16>
      %c160_64 = arith.constant 160 : index
      %c0_65 = arith.constant 0 : index
      %102 = vector.load %arg11[%c160_64, %c0_65] : memref<400x140xbf16, #tpu.memory_space<vmem>>, vector<16x140xbf16>
      tpu.vector_store %arg11[%c160_64, %c0_65], %101 {strides = array<i32>} : memref<400x140xbf16, #tpu.memory_space<vmem>>, vector<16x140xbf16>,
      %103 = vector.extract_strided_slice %80 {offsets = [0, 29], sizes = [16, 140], strides = [1, 1]} : vector<16x256xbf16> to vector<16x140xbf16>
      %c176_66 = arith.constant 176 : index
      %c0_67 = arith.constant 0 : index
      %104 = vector.load %arg11[%c176_66, %c0_67] : memref<400x140xbf16, #tpu.memory_space<vmem>>, vector<16x140xbf16>
      tpu.vector_store %arg11[%c176_66, %c0_67], %103 {strides = array<i32>} : memref<400x140xbf16, #tpu.memory_space<vmem>>, vector<16x140xbf16>,
      %105 = vector.extract_strided_slice %80 {offsets = [0, 30], sizes = [16, 140], strides = [1, 1]} : vector<16x256xbf16> to vector<16x140xbf16>
      %c192_68 = arith.constant 192 : index
      %c0_69 = arith.constant 0 : index
      %106 = vector.load %arg11[%c192_68, %c0_69] : memref<400x140xbf16, #tpu.memory_space<vmem>>, vector<16x140xbf16>
      tpu.vector_store %arg11[%c192_68, %c0_69], %105 {strides = array<i32>} : memref<400x140xbf16, #tpu.memory_space<vmem>>, vector<16x140xbf16>,
      %107 = vector.extract_strided_slice %80 {offsets = [0, 31], sizes = [16, 140], strides = [1, 1]} : vector<16x256xbf16> to vector<16x140xbf16>
      %c208_70 = arith.constant 208 : index
      %c0_71 = arith.constant 0 : index
      %108 = vector.load %arg11[%c208_70, %c0_71] : memref<400x140xbf16, #tpu.memory_space<vmem>>, vector<16x140xbf16>
      tpu.vector_store %arg11[%c208_70, %c0_71], %107 {strides = array<i32>} : memref<400x140xbf16, #tpu.memory_space<vmem>>, vector<16x140xbf16>,
      %109 = vector.extract_strided_slice %80 {offsets = [0, 32], sizes = [16, 140], strides = [1, 1]} : vector<16x256xbf16> to vector<16x140xbf16>
      %c224_72 = arith.constant 224 : index
      %c0_73 = arith.constant 0 : index
      %110 = vector.load %arg11[%c224_72, %c0_73] : memref<400x140xbf16, #tpu.memory_space<vmem>>, vector<16x140xbf16>
      tpu.vector_store %arg11[%c224_72, %c0_73], %109 {strides = array<i32>} : memref<400x140xbf16, #tpu.memory_space<vmem>>, vector<16x140xbf16>,
      %111 = vector.extract_strided_slice %80 {offsets = [0, 42], sizes = [16, 140], strides = [1, 1]} : vector<16x256xbf16> to vector<16x140xbf16>
      %c240_74 = arith.constant 240 : index
      %c0_75 = arith.constant 0 : index
      %112 = vector.load %arg11[%c240_74, %c0_75] : memref<400x140xbf16, #tpu.memory_space<vmem>>, vector<16x140xbf16>
      tpu.vector_store %arg11[%c240_74, %c0_75], %111 {strides = array<i32>} : memref<400x140xbf16, #tpu.memory_space<vmem>>, vector<16x140xbf16>,
      %113 = vector.extract_strided_slice %80 {offsets = [0, 43], sizes = [16, 140], strides = [1, 1]} : vector<16x256xbf16> to vector<16x140xbf16>
      %c256_76 = arith.constant 256 : index
      %c0_77 = arith.constant 0 : index
      %114 = vector.load %arg11[%c256_76, %c0_77] : memref<400x140xbf16, #tpu.memory_space<vmem>>, vector<16x140xbf16>
      tpu.vector_store %arg11[%c256_76, %c0_77], %113 {strides = array<i32>} : memref<400x140xbf16, #tpu.memory_space<vmem>>, vector<16x140xbf16>,
      %115 = vector.extract_strided_slice %80 {offsets = [0, 44], sizes = [16, 140], strides = [1, 1]} : vector<16x256xbf16> to vector<16x140xbf16>
      %c272_78 = arith.constant 272 : index
      %c0_79 = arith.constant 0 : index
      %116 = vector.load %arg11[%c272_78, %c0_79] : memref<400x140xbf16, #tpu.memory_space<vmem>>, vector<16x140xbf16>
      tpu.vector_store %arg11[%c272_78, %c0_79], %115 {strides = array<i32>} : memref<400x140xbf16, #tpu.memory_space<vmem>>, vector<16x140xbf16>,
      %117 = vector.extract_strided_slice %80 {offsets = [0, 45], sizes = [16, 140], strides = [1, 1]} : vector<16x256xbf16> to vector<16x140xbf16>
      %c288_80 = arith.constant 288 : index
      %c0_81 = arith.constant 0 : index
      %118 = vector.load %arg11[%c288_80, %c0_81] : memref<400x140xbf16, #tpu.memory_space<vmem>>, vector<16x140xbf16>
      tpu.vector_store %arg11[%c288_80, %c0_81], %117 {strides = array<i32>} : memref<400x140xbf16, #tpu.memory_space<vmem>>, vector<16x140xbf16>,
      %119 = vector.extract_strided_slice %80 {offsets = [0, 46], sizes = [16, 140], strides = [1, 1]} : vector<16x256xbf16> to vector<16x140xbf16>
      %c304_82 = arith.constant 304 : index
      %c0_83 = arith.constant 0 : index
      %120 = vector.load %arg11[%c304_82, %c0_83] : memref<400x140xbf16, #tpu.memory_space<vmem>>, vector<16x140xbf16>
      tpu.vector_store %arg11[%c304_82, %c0_83], %119 {strides = array<i32>} : memref<400x140xbf16, #tpu.memory_space<vmem>>, vector<16x140xbf16>,
      %121 = vector.extract_strided_slice %80 {offsets = [0, 56], sizes = [16, 140], strides = [1, 1]} : vector<16x256xbf16> to vector<16x140xbf16>
      %c320_84 = arith.constant 320 : index
      %c0_85 = arith.constant 0 : index
      %122 = vector.load %arg11[%c320_84, %c0_85] : memref<400x140xbf16, #tpu.memory_space<vmem>>, vector<16x140xbf16>
      tpu.vector_store %arg11[%c320_84, %c0_85], %121 {strides = array<i32>} : memref<400x140xbf16, #tpu.memory_space<vmem>>, vector<16x140xbf16>,
      %123 = vector.extract_strided_slice %80 {offsets = [0, 57], sizes = [16, 140], strides = [1, 1]} : vector<16x256xbf16> to vector<16x140xbf16>
      %c336_86 = arith.constant 336 : index
      %c0_87 = arith.constant 0 : index
      %124 = vector.load %arg11[%c336_86, %c0_87] : memref<400x140xbf16, #tpu.memory_space<vmem>>, vector<16x140xbf16>
      tpu.vector_store %arg11[%c336_86, %c0_87], %123 {strides = array<i32>} : memref<400x140xbf16, #tpu.memory_space<vmem>>, vector<16x140xbf16>,
      %125 = vector.extract_strided_slice %80 {offsets = [0, 58], sizes = [16, 140], strides = [1, 1]} : vector<16x256xbf16> to vector<16x140xbf16>
      %c352_88 = arith.constant 352 : index
      %c0_89 = arith.constant 0 : index
      %126 = vector.load %arg11[%c352_88, %c0_89] : memref<400x140xbf16, #tpu.memory_space<vmem>>, vector<16x140xbf16>
      tpu.vector_store %arg11[%c352_88, %c0_89], %125 {strides = array<i32>} : memref<400x140xbf16, #tpu.memory_space<vmem>>, vector<16x140xbf16>,
      %127 = vector.extract_strided_slice %80 {offsets = [0, 59], sizes = [16, 140], strides = [1, 1]} : vector<16x256xbf16> to vector<16x140xbf16>
      %c368_90 = arith.constant 368 : index
      %c0_91 = arith.constant 0 : index
      %128 = vector.load %arg11[%c368_90, %c0_91] : memref<400x140xbf16, #tpu.memory_space<vmem>>, vector<16x140xbf16>
      tpu.vector_store %arg11[%c368_90, %c0_91], %127 {strides = array<i32>} : memref<400x140xbf16, #tpu.memory_space<vmem>>, vector<16x140xbf16>,
      %129 = vector.extract_strided_slice %80 {offsets = [0, 60], sizes = [16, 140], strides = [1, 1]} : vector<16x256xbf16> to vector<16x140xbf16>
      %c384_92 = arith.constant 384 : index
      %c0_93 = arith.constant 0 : index
      %130 = vector.load %arg11[%c384_92, %c0_93] : memref<400x140xbf16, #tpu.memory_space<vmem>>, vector<16x140xbf16>
      tpu.vector_store %arg11[%c384_92, %c0_93], %129 {strides = array<i32>} : memref<400x140xbf16, #tpu.memory_space<vmem>>, vector<16x140xbf16>,
      %c0_94 = arith.constant 0 : index
      %c0_95 = arith.constant 0 : index
      %131 = vector.load %arg6[%c0_94, %c0_95] : memref<16x400xbf16, #tpu.memory_space<vmem>>, vector<16x400xbf16>
      %c0_96 = arith.constant 0 : index
      %c0_97 = arith.constant 0 : index
      %132 = vector.load %arg11[%c0_96, %c0_97] : memref<400x140xbf16, #tpu.memory_space<vmem>>, vector<400x140xbf16>
      %cst_98 = arith.constant dense<0.000000e+00> : vector<16x140xf32>
      %133 = tpu.matmul %131, %132, %cst_98 {dimension_numbers = #tpu.dot_dimension_numbers<[1], [0], [0], [1], [0, 0, 1, 1], [], []>} : vector<16x400xbf16>, vector<400x140xbf16>, vector<16x140xf32> -> vector<16x140xf32>
      %c0_99 = arith.constant 0 : index
      %c0_100 = arith.constant 0 : index
      %134 = vector.load %arg7[%c0_99, %c0_100] : memref<16x1xf32, #tpu.memory_space<vmem>>, vector<16x1xf32>
      %135 = vector.broadcast %134 : vector<16x1xf32> to vector<16x140xf32>
      %136 = arith.addf %133, %135 : vector<16x140xf32>
      %cst_101 = arith.constant 0.000000e+00 : f32
      %137 = vector.broadcast %cst_101 : f32 to vector<16x140xf32>
      %138 = arith.maximumf %136, %137 : vector<16x140xf32>
      %139 = vector.extract_strided_slice %138 {offsets = [0, 0], sizes = [16, 125], strides = [1, 1]} : vector<16x140xf32> to vector<16x125xf32>
      %140 = vector.extract_strided_slice %138 {offsets = [0, 1], sizes = [16, 125], strides = [1, 1]} : vector<16x140xf32> to vector<16x125xf32>
      %141 = arith.maximumf %139, %140 : vector<16x125xf32>
      %142 = vector.extract_strided_slice %138 {offsets = [0, 14], sizes = [16, 125], strides = [1, 1]} : vector<16x140xf32> to vector<16x125xf32>
      %143 = vector.extract_strided_slice %138 {offsets = [0, 15], sizes = [16, 125], strides = [1, 1]} : vector<16x140xf32> to vector<16x125xf32>
      %144 = arith.maximumf %142, %143 : vector<16x125xf32>
      %145 = arith.maximumf %141, %144 : vector<16x125xf32>
      %146 = arith.truncf %145 : vector<16x125xf32> to vector<16x125xbf16>
      %c0_102 = arith.constant 0 : index
      %c0_103 = arith.constant 0 : index
      %147 = vector.load %arg8[%c0_102, %c0_103] : memref<125x25xbf16, #tpu.memory_space<vmem>>, vector<125x25xbf16>
      %cst_104 = arith.constant dense<0.000000e+00> : vector<16x25xf32>
      %148 = tpu.matmul %146, %147, %cst_104 {dimension_numbers = #tpu.dot_dimension_numbers<[1], [0], [0], [1], [0, 0, 1, 1], [], []>} : vector<16x125xbf16>, vector<125x25xbf16>, vector<16x25xf32> -> vector<16x25xf32>
      %149 = vector.extract_strided_slice %148 {offsets = [0, 0], sizes = [1, 25], strides = [1, 1]} : vector<16x25xf32> to vector<1x25xf32>
      %150 = arith.index_cast %2 : i32 to index
      %c0_105 = arith.constant 0 : index
      %c0_106 = arith.constant 0 : index
      %151 = vector.load %arg9[%150, %c0_105, %c0_106] : memref<2x1x400xf32, #tpu.memory_space<vmem>>, vector<1x1x25xf32>
      %152 = vector.shape_cast %151 : vector<1x1x25xf32> to vector<1x25xf32>
      %153 = vector.shape_cast %149 : vector<1x25xf32> to vector<1x1x25xf32>
      tpu.vector_store %arg9[%150, %c0_105, %c0_106], %153 {strides = array<i32>} : memref<2x1x400xf32, #tpu.memory_space<vmem>>, vector<1x1x25xf32>,
      %154 = vector.extract_strided_slice %148 {offsets = [1, 0], sizes = [1, 25], strides = [1, 1]} : vector<16x25xf32> to vector<1x25xf32>
      %155 = arith.index_cast %2 : i32 to index
      %c0_107 = arith.constant 0 : index
      %c25 = arith.constant 25 : index
      %156 = vector.load %arg9[%155, %c0_107, %c25] : memref<2x1x400xf32, #tpu.memory_space<vmem>>, vector<1x1x25xf32>
      %157 = vector.shape_cast %156 : vector<1x1x25xf32> to vector<1x25xf32>
      %158 = vector.shape_cast %154 : vector<1x25xf32> to vector<1x1x25xf32>
      tpu.vector_store %arg9[%155, %c0_107, %c25], %158 {strides = array<i32>} : memref<2x1x400xf32, #tpu.memory_space<vmem>>, vector<1x1x25xf32>,
      %159 = vector.extract_strided_slice %148 {offsets = [2, 0], sizes = [1, 25], strides = [1, 1]} : vector<16x25xf32> to vector<1x25xf32>
      %160 = arith.index_cast %2 : i32 to index
      %c0_108 = arith.constant 0 : index
      %c50 = arith.constant 50 : index
      %161 = vector.load %arg9[%160, %c0_108, %c50] : memref<2x1x400xf32, #tpu.memory_space<vmem>>, vector<1x1x25xf32>
      %162 = vector.shape_cast %161 : vector<1x1x25xf32> to vector<1x25xf32>
      %163 = vector.shape_cast %159 : vector<1x25xf32> to vector<1x1x25xf32>
      tpu.vector_store %arg9[%160, %c0_108, %c50], %163 {strides = array<i32>} : memref<2x1x400xf32, #tpu.memory_space<vmem>>, vector<1x1x25xf32>,
      %164 = vector.extract_strided_slice %148 {offsets = [3, 0], sizes = [1, 25], strides = [1, 1]} : vector<16x25xf32> to vector<1x25xf32>
      %165 = arith.index_cast %2 : i32 to index
      %c0_109 = arith.constant 0 : index
      %c75 = arith.constant 75 : index
      %166 = vector.load %arg9[%165, %c0_109, %c75] : memref<2x1x400xf32, #tpu.memory_space<vmem>>, vector<1x1x25xf32>
      %167 = vector.shape_cast %166 : vector<1x1x25xf32> to vector<1x25xf32>
      %168 = vector.shape_cast %164 : vector<1x25xf32> to vector<1x1x25xf32>
      tpu.vector_store %arg9[%165, %c0_109, %c75], %168 {strides = array<i32>} : memref<2x1x400xf32, #tpu.memory_space<vmem>>, vector<1x1x25xf32>,
      %169 = vector.extract_strided_slice %148 {offsets = [4, 0], sizes = [1, 25], strides = [1, 1]} : vector<16x25xf32> to vector<1x25xf32>
      %170 = arith.index_cast %2 : i32 to index
      %c0_110 = arith.constant 0 : index
      %c100 = arith.constant 100 : index
      %171 = vector.load %arg9[%170, %c0_110, %c100] : memref<2x1x400xf32, #tpu.memory_space<vmem>>, vector<1x1x25xf32>
      %172 = vector.shape_cast %171 : vector<1x1x25xf32> to vector<1x25xf32>
      %173 = vector.shape_cast %169 : vector<1x25xf32> to vector<1x1x25xf32>
      tpu.vector_store %arg9[%170, %c0_110, %c100], %173 {strides = array<i32>} : memref<2x1x400xf32, #tpu.memory_space<vmem>>, vector<1x1x25xf32>,
      %174 = vector.extract_strided_slice %148 {offsets = [5, 0], sizes = [1, 25], strides = [1, 1]} : vector<16x25xf32> to vector<1x25xf32>
      %175 = arith.index_cast %2 : i32 to index
      %c0_111 = arith.constant 0 : index
      %c125 = arith.constant 125 : index
      %176 = vector.load %arg9[%175, %c0_111, %c125] : memref<2x1x400xf32, #tpu.memory_space<vmem>>, vector<1x1x25xf32>
      %177 = vector.shape_cast %176 : vector<1x1x25xf32> to vector<1x25xf32>
      %178 = vector.shape_cast %174 : vector<1x25xf32> to vector<1x1x25xf32>
      tpu.vector_store %arg9[%175, %c0_111, %c125], %178 {strides = array<i32>} : memref<2x1x400xf32, #tpu.memory_space<vmem>>, vector<1x1x25xf32>,
      %179 = vector.extract_strided_slice %148 {offsets = [6, 0], sizes = [1, 25], strides = [1, 1]} : vector<16x25xf32> to vector<1x25xf32>
      %180 = arith.index_cast %2 : i32 to index
      %c0_112 = arith.constant 0 : index
      %c150 = arith.constant 150 : index
      %181 = vector.load %arg9[%180, %c0_112, %c150] : memref<2x1x400xf32, #tpu.memory_space<vmem>>, vector<1x1x25xf32>
      %182 = vector.shape_cast %181 : vector<1x1x25xf32> to vector<1x25xf32>
      %183 = vector.shape_cast %179 : vector<1x25xf32> to vector<1x1x25xf32>
      tpu.vector_store %arg9[%180, %c0_112, %c150], %183 {strides = array<i32>} : memref<2x1x400xf32, #tpu.memory_space<vmem>>, vector<1x1x25xf32>,
      %184 = vector.extract_strided_slice %148 {offsets = [7, 0], sizes = [1, 25], strides = [1, 1]} : vector<16x25xf32> to vector<1x25xf32>
      %185 = arith.index_cast %2 : i32 to index
      %c0_113 = arith.constant 0 : index
      %c175 = arith.constant 175 : index
      %186 = vector.load %arg9[%185, %c0_113, %c175] : memref<2x1x400xf32, #tpu.memory_space<vmem>>, vector<1x1x25xf32>
      %187 = vector.shape_cast %186 : vector<1x1x25xf32> to vector<1x25xf32>
      %188 = vector.shape_cast %184 : vector<1x25xf32> to vector<1x1x25xf32>
      tpu.vector_store %arg9[%185, %c0_113, %c175], %188 {strides = array<i32>} : memref<2x1x400xf32, #tpu.memory_space<vmem>>, vector<1x1x25xf32>,
      %189 = vector.extract_strided_slice %148 {offsets = [8, 0], sizes = [1, 25], strides = [1, 1]} : vector<16x25xf32> to vector<1x25xf32>
      %190 = arith.index_cast %2 : i32 to index
      %c0_114 = arith.constant 0 : index
      %c200 = arith.constant 200 : index
      %191 = vector.load %arg9[%190, %c0_114, %c200] : memref<2x1x400xf32, #tpu.memory_space<vmem>>, vector<1x1x25xf32>
      %192 = vector.shape_cast %191 : vector<1x1x25xf32> to vector<1x25xf32>
      %193 = vector.shape_cast %189 : vector<1x25xf32> to vector<1x1x25xf32>
      tpu.vector_store %arg9[%190, %c0_114, %c200], %193 {strides = array<i32>} : memref<2x1x400xf32, #tpu.memory_space<vmem>>, vector<1x1x25xf32>,
      %194 = vector.extract_strided_slice %148 {offsets = [9, 0], sizes = [1, 25], strides = [1, 1]} : vector<16x25xf32> to vector<1x25xf32>
      %195 = arith.index_cast %2 : i32 to index
      %c0_115 = arith.constant 0 : index
      %c225 = arith.constant 225 : index
      %196 = vector.load %arg9[%195, %c0_115, %c225] : memref<2x1x400xf32, #tpu.memory_space<vmem>>, vector<1x1x25xf32>
      %197 = vector.shape_cast %196 : vector<1x1x25xf32> to vector<1x25xf32>
      %198 = vector.shape_cast %194 : vector<1x25xf32> to vector<1x1x25xf32>
      tpu.vector_store %arg9[%195, %c0_115, %c225], %198 {strides = array<i32>} : memref<2x1x400xf32, #tpu.memory_space<vmem>>, vector<1x1x25xf32>,
      %199 = vector.extract_strided_slice %148 {offsets = [10, 0], sizes = [1, 25], strides = [1, 1]} : vector<16x25xf32> to vector<1x25xf32>
      %200 = arith.index_cast %2 : i32 to index
      %c0_116 = arith.constant 0 : index
      %c250 = arith.constant 250 : index
      %201 = vector.load %arg9[%200, %c0_116, %c250] : memref<2x1x400xf32, #tpu.memory_space<vmem>>, vector<1x1x25xf32>
      %202 = vector.shape_cast %201 : vector<1x1x25xf32> to vector<1x25xf32>
      %203 = vector.shape_cast %199 : vector<1x25xf32> to vector<1x1x25xf32>
      tpu.vector_store %arg9[%200, %c0_116, %c250], %203 {strides = array<i32>} : memref<2x1x400xf32, #tpu.memory_space<vmem>>, vector<1x1x25xf32>,
      %204 = vector.extract_strided_slice %148 {offsets = [11, 0], sizes = [1, 25], strides = [1, 1]} : vector<16x25xf32> to vector<1x25xf32>
      %205 = arith.index_cast %2 : i32 to index
      %c0_117 = arith.constant 0 : index
      %c275 = arith.constant 275 : index
      %206 = vector.load %arg9[%205, %c0_117, %c275] : memref<2x1x400xf32, #tpu.memory_space<vmem>>, vector<1x1x25xf32>
      %207 = vector.shape_cast %206 : vector<1x1x25xf32> to vector<1x25xf32>
      %208 = vector.shape_cast %204 : vector<1x25xf32> to vector<1x1x25xf32>
      tpu.vector_store %arg9[%205, %c0_117, %c275], %208 {strides = array<i32>} : memref<2x1x400xf32, #tpu.memory_space<vmem>>, vector<1x1x25xf32>,
      %209 = vector.extract_strided_slice %148 {offsets = [12, 0], sizes = [1, 25], strides = [1, 1]} : vector<16x25xf32> to vector<1x25xf32>
      %210 = arith.index_cast %2 : i32 to index
      %c0_118 = arith.constant 0 : index
      %c300 = arith.constant 300 : index
      %211 = vector.load %arg9[%210, %c0_118, %c300] : memref<2x1x400xf32, #tpu.memory_space<vmem>>, vector<1x1x25xf32>
      %212 = vector.shape_cast %211 : vector<1x1x25xf32> to vector<1x25xf32>
      %213 = vector.shape_cast %209 : vector<1x25xf32> to vector<1x1x25xf32>
      tpu.vector_store %arg9[%210, %c0_118, %c300], %213 {strides = array<i32>} : memref<2x1x400xf32, #tpu.memory_space<vmem>>, vector<1x1x25xf32>,
      %214 = vector.extract_strided_slice %148 {offsets = [13, 0], sizes = [1, 25], strides = [1, 1]} : vector<16x25xf32> to vector<1x25xf32>
      %215 = arith.index_cast %2 : i32 to index
      %c0_119 = arith.constant 0 : index
      %c325 = arith.constant 325 : index
      %216 = vector.load %arg9[%215, %c0_119, %c325] : memref<2x1x400xf32, #tpu.memory_space<vmem>>, vector<1x1x25xf32>
      %217 = vector.shape_cast %216 : vector<1x1x25xf32> to vector<1x25xf32>
      %218 = vector.shape_cast %214 : vector<1x25xf32> to vector<1x1x25xf32>
      tpu.vector_store %arg9[%215, %c0_119, %c325], %218 {strides = array<i32>} : memref<2x1x400xf32, #tpu.memory_space<vmem>>, vector<1x1x25xf32>,
      %219 = vector.extract_strided_slice %148 {offsets = [14, 0], sizes = [1, 25], strides = [1, 1]} : vector<16x25xf32> to vector<1x25xf32>
      %220 = arith.index_cast %2 : i32 to index
      %c0_120 = arith.constant 0 : index
      %c350 = arith.constant 350 : index
      %221 = vector.load %arg9[%220, %c0_120, %c350] : memref<2x1x400xf32, #tpu.memory_space<vmem>>, vector<1x1x25xf32>
      %222 = vector.shape_cast %221 : vector<1x1x25xf32> to vector<1x25xf32>
      %223 = vector.shape_cast %219 : vector<1x25xf32> to vector<1x1x25xf32>
      tpu.vector_store %arg9[%220, %c0_120, %c350], %223 {strides = array<i32>} : memref<2x1x400xf32, #tpu.memory_space<vmem>>, vector<1x1x25xf32>,
      %224 = vector.extract_strided_slice %148 {offsets = [15, 0], sizes = [1, 25], strides = [1, 1]} : vector<16x25xf32> to vector<1x25xf32>
      %225 = arith.index_cast %2 : i32 to index
      %c0_121 = arith.constant 0 : index
      %c375 = arith.constant 375 : index
      %226 = vector.load %arg9[%225, %c0_121, %c375] : memref<2x1x400xf32, #tpu.memory_space<vmem>>, vector<1x1x25xf32>
      %227 = vector.shape_cast %226 : vector<1x1x25xf32> to vector<1x25xf32>
      %228 = vector.shape_cast %224 : vector<1x25xf32> to vector<1x1x25xf32>
      tpu.vector_store %arg9[%225, %c0_121, %c375], %228 {strides = array<i32>} : memref<2x1x400xf32, #tpu.memory_space<vmem>>, vector<1x1x25xf32>,
    }
    %c2_i32_0 = arith.constant 2 : i32
    return
  }
  func.func @transform_0(%arg0: i32) -> (i32, i32, i32) {
    %c0_i32 = arith.constant 0 : i32
    %c0_i32_0 = arith.constant 0 : i32
    %c0_i32_1 = arith.constant 0 : i32
    return %arg0, %c0_i32, %c0_i32_0 : i32, i32, i32
  }
  func.func @transform_1(%arg0: i32) -> (i32, i32) {
    %c0_i32 = arith.constant 0 : i32
    %c0_i32_0 = arith.constant 0 : i32
    %c0_i32_1 = arith.constant 0 : i32
    return %c0_i32, %c0_i32_0 : i32, i32
  }
  func.func @transform_2(%arg0: i32) -> (i32, i32) {
    %c0_i32 = arith.constant 0 : i32
    %c0_i32_0 = arith.constant 0 : i32
    %c0_i32_1 = arith.constant 0 : i32
    return %c0_i32, %c0_i32_0 : i32, i32
  }
  func.func @transform_3(%arg0: i32) -> (i32, i32) {
    %c0_i32 = arith.constant 0 : i32
    %c0_i32_0 = arith.constant 0 : i32
    %c0_i32_1 = arith.constant 0 : i32
    return %c0_i32, %c0_i32_0 : i32, i32
  }
  func.func @transform_4(%arg0: i32) -> (i32, i32) {
    %c0_i32 = arith.constant 0 : i32
    %c0_i32_0 = arith.constant 0 : i32
    %c0_i32_1 = arith.constant 0 : i32
    return %c0_i32, %c0_i32_0 : i32, i32
  }
  func.func @transform_5(%arg0: i32) -> (i32, i32) {
    %c0_i32 = arith.constant 0 : i32
    %c0_i32_0 = arith.constant 0 : i32
    %c0_i32_1 = arith.constant 0 : i32
    return %c0_i32, %c0_i32_0 : i32, i32
  }
  func.func @transform_6(%arg0: i32) -> (i32, i32) {
    %c0_i32 = arith.constant 0 : i32
    %c0_i32_0 = arith.constant 0 : i32
    %c0_i32_1 = arith.constant 0 : i32
    return %c0_i32, %c0_i32_0 : i32, i32
  }
  func.func @transform_7(%arg0: i32) -> (i32, i32) {
    %c0_i32 = arith.constant 0 : i32
    %c0_i32_0 = arith.constant 0 : i32
    %c0_i32_1 = arith.constant 0 : i32
    return %c0_i32, %c0_i32_0 : i32, i32
  }
  func.func @transform_8(%arg0: i32) -> (i32, i32, i32) {
    %c0_i32 = arith.constant 0 : i32
    %c0_i32_0 = arith.constant 0 : i32
    %c0_i32_1 = arith.constant 0 : i32
    return %arg0, %c0_i32, %c0_i32_0 : i32, i32, i32
  }
}

module attributes {stable_mosaic.version = 11 : i64} {
  func.func @_mlp_kernel(%arg0: i32, %arg1: memref<2x400xf32, #tpu.memory_space<vmem>>, %arg2: memref<400x120xbf16, #tpu.memory_space<vmem>>, %arg3: memref<1x120xf32, #tpu.memory_space<vmem>>, %arg4: memref<120x84xbf16, #tpu.memory_space<vmem>>, %arg5: memref<1x84xf32, #tpu.memory_space<vmem>>, %arg6: memref<84x10xbf16, #tpu.memory_space<vmem>>, %arg7: memref<1x10xf32, #tpu.memory_space<vmem>>, %arg8: memref<2x10xf32, #tpu.memory_space<vmem>>) attributes {dimension_semantics = [#tpu.dimension_semantics<parallel>], iteration_bounds = array<i64: 1>, scalar_prefetch = 0 : i64, scratch_operands = 0 : i64, tpu.core_type = #tpu.core_type<tc>, window_params = [{transform_indices = @transform_0, window_bounds = array<i64: 2, 400>}, {pipeline_mode = #tpu.pipeline_mode<synchronous>, transform_indices = @transform_1, window_bounds = array<i64: 400, 120>}, {pipeline_mode = #tpu.pipeline_mode<synchronous>, transform_indices = @transform_2, window_bounds = array<i64: 1, 120>}, {pipeline_mode = #tpu.pipeline_mode<synchronous>, transform_indices = @transform_3, window_bounds = array<i64: 120, 84>}, {pipeline_mode = #tpu.pipeline_mode<synchronous>, transform_indices = @transform_4, window_bounds = array<i64: 1, 84>}, {pipeline_mode = #tpu.pipeline_mode<synchronous>, transform_indices = @transform_5, window_bounds = array<i64: 84, 10>}, {pipeline_mode = #tpu.pipeline_mode<synchronous>, transform_indices = @transform_6, window_bounds = array<i64: 1, 10>}, {transform_indices = @transform_7, window_bounds = array<i64: 2, 10>}]} {
    %c0 = arith.constant 0 : index
    %c0_0 = arith.constant 0 : index
    %0 = vector.load %arg1[%c0, %c0_0] : memref<2x400xf32, #tpu.memory_space<vmem>>, vector<2x400xf32>
    %1 = arith.truncf %0 : vector<2x400xf32> to vector<2x400xbf16>
    %c0_1 = arith.constant 0 : index
    %c0_2 = arith.constant 0 : index
    %2 = vector.load %arg2[%c0_1, %c0_2] : memref<400x120xbf16, #tpu.memory_space<vmem>>, vector<400x120xbf16>
    %cst = arith.constant dense<0.000000e+00> : vector<2x120xf32>
    %3 = tpu.matmul %1, %2, %cst {dimension_numbers = #tpu.dot_dimension_numbers<[1], [0], [0], [1], [0, 0, 1, 1], [], []>} : vector<2x400xbf16>, vector<400x120xbf16>, vector<2x120xf32> -> vector<2x120xf32>
    %c0_3 = arith.constant 0 : index
    %c0_4 = arith.constant 0 : index
    %4 = vector.load %arg3[%c0_3, %c0_4] : memref<1x120xf32, #tpu.memory_space<vmem>>, vector<1x120xf32>
    %5 = vector.broadcast %4 : vector<1x120xf32> to vector<2x120xf32>
    %6 = arith.addf %3, %5 : vector<2x120xf32>
    %cst_5 = arith.constant 0.000000e+00 : f32
    %7 = vector.broadcast %cst_5 : f32 to vector<2x120xf32>
    %8 = arith.maximumf %6, %7 : vector<2x120xf32>
    %9 = arith.truncf %8 : vector<2x120xf32> to vector<2x120xbf16>
    %c0_6 = arith.constant 0 : index
    %c0_7 = arith.constant 0 : index
    %10 = vector.load %arg4[%c0_6, %c0_7] : memref<120x84xbf16, #tpu.memory_space<vmem>>, vector<120x84xbf16>
    %cst_8 = arith.constant dense<0.000000e+00> : vector<2x84xf32>
    %11 = tpu.matmul %9, %10, %cst_8 {dimension_numbers = #tpu.dot_dimension_numbers<[1], [0], [0], [1], [0, 0, 1, 1], [], []>} : vector<2x120xbf16>, vector<120x84xbf16>, vector<2x84xf32> -> vector<2x84xf32>
    %c0_9 = arith.constant 0 : index
    %c0_10 = arith.constant 0 : index
    %12 = vector.load %arg5[%c0_9, %c0_10] : memref<1x84xf32, #tpu.memory_space<vmem>>, vector<1x84xf32>
    %13 = vector.broadcast %12 : vector<1x84xf32> to vector<2x84xf32>
    %14 = arith.addf %11, %13 : vector<2x84xf32>
    %cst_11 = arith.constant 0.000000e+00 : f32
    %15 = vector.broadcast %cst_11 : f32 to vector<2x84xf32>
    %16 = arith.maximumf %14, %15 : vector<2x84xf32>
    %17 = arith.truncf %16 : vector<2x84xf32> to vector<2x84xbf16>
    %c0_12 = arith.constant 0 : index
    %c0_13 = arith.constant 0 : index
    %18 = vector.load %arg6[%c0_12, %c0_13] : memref<84x10xbf16, #tpu.memory_space<vmem>>, vector<84x10xbf16>
    %cst_14 = arith.constant dense<0.000000e+00> : vector<2x10xf32>
    %19 = tpu.matmul %17, %18, %cst_14 {dimension_numbers = #tpu.dot_dimension_numbers<[1], [0], [0], [1], [0, 0, 1, 1], [], []>} : vector<2x84xbf16>, vector<84x10xbf16>, vector<2x10xf32> -> vector<2x10xf32>
    %c0_15 = arith.constant 0 : index
    %c0_16 = arith.constant 0 : index
    %20 = vector.load %arg7[%c0_15, %c0_16] : memref<1x10xf32, #tpu.memory_space<vmem>>, vector<1x10xf32>
    %21 = vector.broadcast %20 : vector<1x10xf32> to vector<2x10xf32>
    %22 = arith.addf %19, %21 : vector<2x10xf32>
    %c0_17 = arith.constant 0 : index
    %c0_18 = arith.constant 0 : index
    %23 = vector.load %arg8[%c0_17, %c0_18] : memref<2x10xf32, #tpu.memory_space<vmem>>, vector<2x10xf32>
    tpu.vector_store %arg8[%c0_17, %c0_18], %22 {strides = array<i32>} : memref<2x10xf32, #tpu.memory_space<vmem>>, vector<2x10xf32>,
    return
  }
  func.func @transform_0(%arg0: i32) -> (i32, i32) {
    %c0_i32 = arith.constant 0 : i32
    %c0_i32_0 = arith.constant 0 : i32
    return %arg0, %c0_i32 : i32, i32
  }
  func.func @transform_1(%arg0: i32) -> (i32, i32) {
    %c0_i32 = arith.constant 0 : i32
    %c0_i32_0 = arith.constant 0 : i32
    %c0_i32_1 = arith.constant 0 : i32
    return %c0_i32, %c0_i32_0 : i32, i32
  }
  func.func @transform_2(%arg0: i32) -> (i32, i32) {
    %c0_i32 = arith.constant 0 : i32
    %c0_i32_0 = arith.constant 0 : i32
    %c0_i32_1 = arith.constant 0 : i32
    return %c0_i32, %c0_i32_0 : i32, i32
  }
  func.func @transform_3(%arg0: i32) -> (i32, i32) {
    %c0_i32 = arith.constant 0 : i32
    %c0_i32_0 = arith.constant 0 : i32
    %c0_i32_1 = arith.constant 0 : i32
    return %c0_i32, %c0_i32_0 : i32, i32
  }
  func.func @transform_4(%arg0: i32) -> (i32, i32) {
    %c0_i32 = arith.constant 0 : i32
    %c0_i32_0 = arith.constant 0 : i32
    %c0_i32_1 = arith.constant 0 : i32
    return %c0_i32, %c0_i32_0 : i32, i32
  }
  func.func @transform_5(%arg0: i32) -> (i32, i32) {
    %c0_i32 = arith.constant 0 : i32
    %c0_i32_0 = arith.constant 0 : i32
    %c0_i32_1 = arith.constant 0 : i32
    return %c0_i32, %c0_i32_0 : i32, i32
  }
  func.func @transform_6(%arg0: i32) -> (i32, i32) {
    %c0_i32 = arith.constant 0 : i32
    %c0_i32_0 = arith.constant 0 : i32
    %c0_i32_1 = arith.constant 0 : i32
    return %c0_i32, %c0_i32_0 : i32, i32
  }
  func.func @transform_7(%arg0: i32) -> (i32, i32) {
    %c0_i32 = arith.constant 0 : i32
    %c0_i32_0 = arith.constant 0 : i32
    return %arg0, %c0_i32 : i32, i32
  }
}

</mosaic_0001>

<llo_original>
// kernel: net_forward.3
$region0: #{net_forward.3}
  #allocation0 [shape = 'u32[]', space=smem, size = 0x4, offset = 0x4, fixed_abs, tag = 'smem constant byte address 0x4 - core index']
  #allocation1 [shape = 'u32[144,128]{1,0:T(1,128)}', space=vmem, size = 0x12000, scoped, tag = 'internal scratch']
  %s0 = inlined_call_operand.vmem [shape: f32[2,400], index: 0, kind: input, shape index: {}]
  %s1 = inlined_call_operand.vmem [shape: bf16[400,120], index: 1, kind: input, shape index: {}]
  %s2 = inlined_call_operand.vmem [shape: f32[1,120], index: 2, kind: input, shape index: {}]
  %s3 = inlined_call_operand.vmem [shape: bf16[120,84], index: 3, kind: input, shape index: {}]
  %s4 = inlined_call_operand.vmem [shape: f32[1,84], index: 4, kind: input, shape index: {}]
  %s5 = inlined_call_operand.vmem [shape: bf16[84,10], index: 5, kind: input, shape index: {}]
  %s6 = inlined_call_operand.vmem [shape: f32[1,10], index: 6, kind: input, shape index: {}]
  %s7 = inlined_call_operand.hbm [shape: f32[2,10], index: 7, kind: output, shape index: {}]
  %s8 = sld [smem:[#allocation0]]
  $region38: #{net_forward.3} parent=0
    _
  %s10 = ssub.s32 1, %s8
  %s11 = scalar_select 0, %s10, %s8
  $region1: #{net_forward.3} parent=0
    #allocation2 [shape = 'u8[1024]{0}', space=vmem, size = 0x400, scoped, tag = 'output window, operand 0, single buffered']
    #allocation3 [shape = 's32[1]{0}', space=sflag, size = 0x4, scoped, tag = 'scoped memory for net_forward.3']
    %12 = vsyncpa [#allocation3], 0
    // Predicated region
    $region2: #{net_forward.3} parent=1 // pred_check
      _
    $region3: #{net_forward.3} parent=1 // pred_check_branch
      %14 = sbr.rel (0) target = $region5
    $region4: #{net_forward.3} parent=1 // pred_region
      _
    $region5: #{net_forward.3} parent=1 // pred_fallthru
      _
    // Predicated region
    $region6: #{net_forward.3} parent=1 // pred_check
      _
    $region7: #{net_forward.3} parent=1 // pred_check_branch
      %16 = sbr.rel (0) target = $region9
    $region8: #{net_forward.3} parent=1 // pred_region
      _
    $region9: #{net_forward.3} parent=1 // pred_fallthru
      _
    // Predicated region
    $region10: #{net_forward.3} parent=1 // pred_check
      _
    $region11: #{net_forward.3} parent=1 // pred_check_branch
      %18 = sbr.rel (0) target = $region13
    $region12: #{net_forward.3} parent=1 // pred_region
      _
    $region13: #{net_forward.3} parent=1 // pred_fallthru
      _
    // Predicated region
    $region14: #{net_forward.3} parent=1 // pred_check
      _
    $region15: #{net_forward.3} parent=1 // pred_check_branch
      %20 = sbr.rel (0) target = $region17
    $region16: #{net_forward.3} parent=1 // pred_region
      _
    $region17: #{net_forward.3} parent=1 // pred_fallthru
      _
    // Predicated region
    $region18: #{net_forward.3} parent=1 // pred_check
      _
    $region19: #{net_forward.3} parent=1 // pred_check_branch
      %22 = sbr.rel (0) target = $region21
    $region20: #{net_forward.3} parent=1 // pred_region
      _
    $region21: #{net_forward.3} parent=1 // pred_fallthru
      _
    // Predicated region
    $region22: #{net_forward.3} parent=1 // pred_check
      _
    $region23: #{net_forward.3} parent=1 // pred_check_branch
      %24 = sbr.rel (0) target = $region25
    $region24: #{net_forward.3} parent=1 // pred_region
      _
    $region25: #{net_forward.3} parent=1 // pred_fallthru
      _
    // Predicated region
    $region26: #{net_forward.3} parent=1 // pred_check
      _
    $region27: #{net_forward.3} parent=1 // pred_check_branch
      %26 = sbr.rel (0) target = $region29
    $region28: #{net_forward.3} parent=1 // pred_region
      _
    $region29: #{net_forward.3} parent=1 // pred_fallthru
      _
    %v28 = vld [vmem:[%s0] sm:$0xff]
    %v30 = vcombine.high %v28, %v28
    %v32 = vunpack.c.l.s4 1983009808
    %v33 = vunpack.c.0.s8 %v32
    %v34 = vlaneseq
    %v35 = vshrl.u32 %v34, 7
    %v36 = vsub.s32 %v33, %v35
    %v37 = vrot.slane %v28, %v36
    %v39 = vunpack.c.l.s4 1983009808
    %v40 = vunpack.c.0.s8 %v39
    %v41 = vlaneseq
    %v42 = vshrl.u32 %v41, 7
    %v43 = vsub.s32 %v40, %v42
    %v44 = vrot.slane %v30, %v43
    %v45 = vcombine.high %v37, %v37
    %v46 = vcombine.high %v44, %v44
    %v51 = vpack.c.bf16 %v37, %v37
    %v52 = vpack.c.bf16 %v45, %v45
    %v53 = vpack.c.bf16 %v44, %v44
    %v54 = vpack.c.bf16 %v46, %v46
    %v55 = vld [vmem:[%s1] sm:$0xf]
    %v56 = vld [vmem:[%s1 + $0x4] sm:$0xf]
    %v57 = vld [vmem:[%s1 + $0x8] sm:$0xf]
    %v58 = vld [vmem:[%s1 + $0xc] sm:$0xf]
    %v59 = vld [vmem:[%s1 + $0x10] sm:$0xf]
    %v60 = vld [vmem:[%s1 + $0x14] sm:$0xf]
    %v61 = vld [vmem:[%s1 + $0x18] sm:$0xf]
    %v62 = vld [vmem:[%s1 + $0x1c] sm:$0xf]
    %v63 = vld [vmem:[%s1 + $0x20] sm:$0xf]
    %v64 = vld [vmem:[%s1 + $0x24] sm:$0xf]
    %v65 = vld [vmem:[%s1 + $0x28] sm:$0xf]
    %v66 = vld [vmem:[%s1 + $0x2c] sm:$0xf]
    %v67 = vld [vmem:[%s1 + $0x30] sm:$0xf]
    %v68 = vld [vmem:[%s1 + $0x34] sm:$0xf]
    %v69 = vld [vmem:[%s1 + $0x38] sm:$0xf]
    %v70 = vld [vmem:[%s1 + $0x3c] sm:$0xf]
    %v71 = vld [vmem:[%s1 + $0x40] sm:$0xf]
    %v72 = vld [vmem:[%s1 + $0x44] sm:$0xf]
    %v73 = vld [vmem:[%s1 + $0x48] sm:$0xf]
    %v74 = vld [vmem:[%s1 + $0x4c] sm:$0xf]
    %v75 = vld [vmem:[%s1 + $0x50] sm:$0xf]
    %v76 = vld [vmem:[%s1 + $0x54] sm:$0xf]
    %v77 = vld [vmem:[%s1 + $0x58] sm:$0xf]
    %v78 = vld [vmem:[%s1 + $0x5c] sm:$0xf]
    %v79 = vld [vmem:[%s1 + $0x60] sm:$0xf]
    %v80 = vld [vmem:[%s1 + $0x64] sm:$0xf]
    %v81 = vld [vmem:[%s1 + $0x68] sm:$0xf]
    %v82 = vld [vmem:[%s1 + $0x6c] sm:$0xf]
    %v83 = vld [vmem:[%s1 + $0x70] sm:$0xf]
    %v84 = vld [vmem:[%s1 + $0x74] sm:$0xf]
    %v85 = vld [vmem:[%s1 + $0x78] sm:$0xf]
    %v86 = vld [vmem:[%s1 + $0x7c] sm:$0xf]
    %v87 = vld [vmem:[%s1 + $0x80] sm:$0xf]
    %v88 = vld [vmem:[%s1 + $0x84] sm:$0xf]
    %v89 = vld [vmem:[%s1 + $0x88] sm:$0xf]
    %v90 = vld [vmem:[%s1 + $0x8c] sm:$0xf]
    %v91 = vld [vmem:[%s1 + $0x90] sm:$0xf]
    %v92 = vld [vmem:[%s1 + $0x94] sm:$0xf]
    %v93 = vld [vmem:[%s1 + $0x98] sm:$0xf]
    %v94 = vld [vmem:[%s1 + $0x9c] sm:$0xf]
    %v95 = vld [vmem:[%s1 + $0xa0] sm:$0xf]
    %v96 = vld [vmem:[%s1 + $0xa4] sm:$0xf]
    %v97 = vld [vmem:[%s1 + $0xa8] sm:$0xf]
    %v98 = vld [vmem:[%s1 + $0xac] sm:$0xf]
    %v99 = vld [vmem:[%s1 + $0xb0] sm:$0xf]
    %v100 = vld [vmem:[%s1 + $0xb4] sm:$0xf]
    %v101 = vld [vmem:[%s1 + $0xb8] sm:$0xf]
    %v102 = vld [vmem:[%s1 + $0xbc] sm:$0xf]
    %v103 = vld [vmem:[%s1 + $0xc0] sm:$0xf]
    %v104 = vld [vmem:[%s1 + $0xc4] sm:$0xf]
    %v105 = vld [vmem:[%s2] sm:$0x1]
    %v107 = vlaneseq
    %v108 = vshrl.u32 %v107, 7
    %v109 = vsub.s32 0, %v108
    %v110 = vrot.slane %v105, %v109
    %v162 = vunpack.c.l.b16 %v55
    %v163 = vunpack.c.l.b16 %v56
    %v164 = vunpack.c.l.b16 %v57
    %v165 = vunpack.c.l.b16 %v58
    %v166 = vunpack.c.l.b16 %v59
    %v167 = vunpack.c.l.b16 %v60
    %v168 = vunpack.c.l.b16 %v61
    %v169 = vunpack.c.l.b16 %v62
    %v170 = vunpack.c.l.b16 %v63
    %v171 = vunpack.c.l.b16 %v64
    %v172 = vunpack.c.l.b16 %v65
    %v173 = vunpack.c.l.b16 %v66
    %v174 = vunpack.c.l.b16 %v67
    %v175 = vunpack.c.l.b16 %v68
    %v176 = vunpack.c.l.b16 %v69
    %v177 = vunpack.c.l.b16 %v70
    %v178 = vunpack.c.l.b16 %v71
    %v179 = vunpack.c.l.b16 %v72
    %v180 = vunpack.c.l.b16 %v73
    %v181 = vunpack.c.l.b16 %v74
    %v182 = vunpack.c.l.b16 %v75
    %v183 = vunpack.c.l.b16 %v76
    %v184 = vunpack.c.l.b16 %v77
    %v185 = vunpack.c.l.b16 %v78
    %v186 = vunpack.c.l.b16 %v79
    %v187 = vunpack.c.l.b16 %v80
    %v188 = vunpack.c.l.b16 %v81
    %v189 = vunpack.c.l.b16 %v82
    %v190 = vunpack.c.l.b16 %v83
    %v191 = vunpack.c.l.b16 %v84
    %v192 = vunpack.c.l.b16 %v85
    %v193 = vunpack.c.l.b16 %v86
    %v194 = vunpack.c.l.b16 %v87
    %v195 = vunpack.c.l.b16 %v88
    %v196 = vunpack.c.l.b16 %v89
    %v197 = vunpack.c.l.b16 %v90
    %v198 = vunpack.c.l.b16 %v91
    %v199 = vunpack.c.l.b16 %v92
    %v200 = vunpack.c.l.b16 %v93
    %v201 = vunpack.c.l.b16 %v94
    %v202 = vunpack.c.l.b16 %v95
    %v203 = vunpack.c.l.b16 %v96
    %v204 = vunpack.c.l.b16 %v97
    %v205 = vunpack.c.l.b16 %v98
    %v206 = vunpack.c.l.b16 %v99
    %v207 = vunpack.c.l.b16 %v100
    %v208 = vunpack.c.l.b16 %v101
    %v209 = vunpack.c.l.b16 %v102
    %v210 = vunpack.c.l.b16 %v103
    %v211 = vunpack.c.l.b16 %v104
    %v212 = vpack.c.b16 %v163, %v162
    %v213 = vpack.c.b16 %v165, %v164
    %v214 = vpack.c.b16 %v167, %v166
    %v215 = vpack.c.b16 %v169, %v168
    %v216 = vpack.c.b16 %v171, %v170
    %v217 = vpack.c.b16 %v173, %v172
    %v218 = vpack.c.b16 %v175, %v174
    %v219 = vpack.c.b16 %v177, %v176
    %v220 = vpack.c.b16 %v179, %v178
    %v221 = vpack.c.b16 %v181, %v180
    %v222 = vpack.c.b16 %v183, %v182
    %v223 = vpack.c.b16 %v185, %v184
    %v224 = vpack.c.b16 %v187, %v186
    %v225 = vpack.c.b16 %v189, %v188
    %v226 = vpack.c.b16 %v191, %v190
    %v227 = vpack.c.b16 %v193, %v192
    %v228 = vpack.c.b16 %v195, %v194
    %v229 = vpack.c.b16 %v197, %v196
    %v230 = vpack.c.b16 %v199, %v198
    %v231 = vpack.c.b16 %v201, %v200
    %v232 = vpack.c.b16 %v203, %v202
    %v233 = vpack.c.b16 %v205, %v204
    %v234 = vpack.c.b16 %v207, %v206
    %v235 = vpack.c.b16 %v209, %v208
    %v236 = vpack.c.b16 %v211, %v210
    %vm262 = vcmask 130048
    %v264 = vsel %vm262, %v54, 0
    %266 = vmatprep.subr.bf16.mxu0 0
    %267 = vmatpush1.bf16.msra.mxu0 %v212
    %268 = vmatprep.subr.bf16.mxu0 0
    %269 = vmatpush1.bf16.msra.mxu0 %v213
    %270 = vmatprep.subr.bf16.mxu0 0
    %271 = vmatpush1.bf16.msra.mxu0 %v214
    %272 = vmatprep.subr.bf16.mxu0 0
    %273 = vmatpush1.bf16.msra.mxu0 %v215
    %274 = vmatprep.subr.bf16.mxu0 0
    %275 = vmatpush1.bf16.msra.mxu0 %v216
    %276 = vmatprep.subr.bf16.mxu0 0
    %277 = vmatpush1.bf16.msra.mxu0 %v217
    %278 = vmatprep.subr.bf16.mxu0 0
    %279 = vmatpush1.bf16.msra.mxu0 %v218
    %280 = vmatprep.subr.bf16.mxu0 0
    %281 = vmatpush1.bf16.msra.mxu0 %v219
    %282 = vmatprep.subr.bf16.mxu0 0
    %283 = vmatpush1.bf16.msra.mxu0 %v220
    %284 = vmatprep.subr.bf16.mxu0 0
    %285 = vmatpush1.bf16.msra.mxu0 %v221
    %286 = vmatprep.subr.bf16.mxu0 0
    %287 = vmatpush1.bf16.msra.mxu0 %v222
    %288 = vmatprep.subr.bf16.mxu0 0
    %289 = vmatpush1.bf16.msra.mxu0 %v223
    %290 = vmatprep.subr.bf16.mxu0 0
    %291 = vmatpush1.bf16.msra.mxu0 %v224
    %292 = vmatprep.subr.bf16.mxu0 0
    %293 = vmatpush1.bf16.msra.mxu0 %v225
    %294 = vmatprep.subr.bf16.mxu0 0
    %295 = vmatpush1.bf16.msra.mxu0 %v226
    %296 = vmatprep.subr.bf16.mxu0 0
    %297 = vmatpush1.bf16.msra.mxu0 %v227
    %298 = vmatprep.mubr.bf16.mxu0 %v52
    %299 = vmatmul.mubr.bf16.gmra.mrb[0].mxu0 %v51
    %v300 = vpop.f32.mrb[0].mxu0
    %v301 = vadd.f32 %v110, %v300
    %v302 = vpop.f32.mrb[0].mxu0
    %v303 = vpop.f32.mrb[0].mxu0
    %v304 = vpop.f32.mrb[0].mxu0
    %305 = vdwg.mxu0
    %306 = vmatprep.subr.bf16.mxu0 0
    %307 = vmatpush1.bf16.msra.mxu0 %v228
    %308 = vmatprep.subr.bf16.mxu0 0
    %309 = vmatpush1.bf16.msra.mxu0 %v229
    %310 = vmatprep.subr.bf16.mxu0 0
    %311 = vmatpush1.bf16.msra.mxu0 %v230
    %312 = vmatprep.subr.bf16.mxu0 0
    %313 = vmatpush1.bf16.msra.mxu0 %v231
    %314 = vmatprep.subr.bf16.mxu0 0
    %315 = vmatpush1.bf16.msra.mxu0 %v232
    %316 = vmatprep.subr.bf16.mxu0 0
    %317 = vmatpush1.bf16.msra.mxu0 %v233
    %318 = vmatprep.subr.bf16.mxu0 0
    %319 = vmatpush1.bf16.msra.mxu0 %v234
    %320 = vmatprep.subr.bf16.mxu0 0
    %321 = vmatpush1.bf16.msra.mxu0 %v235
    %322 = vmatprep.subr.bf16.mxu0 0
    %323 = vmatpush1.bf16.msra.mxu0 %v236
    %324 = vmatprep.subr.bf16.mxu0 0
    %325 = vmatpush1.bf16.msra.mxu0 0
    %326 = vmatprep.subr.bf16.mxu0 0
    %327 = vmatpush1.bf16.msra.mxu0 0
    %328 = vmatprep.subr.bf16.mxu0 0
    %329 = vmatpush1.bf16.msra.mxu0 0
    %330 = vmatprep.subr.bf16.mxu0 0
    %331 = vmatpush1.bf16.msra.mxu0 0
    %332 = vmatprep.subr.bf16.mxu0 0
    %333 = vmatpush1.bf16.msra.mxu0 0
    %334 = vmatprep.subr.bf16.mxu0 0
    %335 = vmatpush1.bf16.msra.mxu0 0
    %336 = vmatprep.subr.bf16.mxu0 0
    %337 = vmatpush1.bf16.msra.mxu0 0
    %338 = vmatprep.mubr.bf16.mxu0 %v264
    %339 = vmatmul.mubr.bf16.gmra.mrb[0].mxu0 %v53
    %v340 = vpop.f32.mrb[0].mxu0
    %v341 = vadd.f32 %v301, %v340
    %v342 = vpop.f32.mrb[0].mxu0
    %v343 = vpop.f32.mrb[0].mxu0
    %v344 = vpop.f32.mrb[0].mxu0
    %345 = vdwg.mxu0
    %v346 = vmax.f32 %v341, 0.0
    %v347 = vpack.c.bf16 %v346, %v346
    %v348 = vld [vmem:[%s3] sm:$0xf]
    %v349 = vld [vmem:[%s3 + $0x4] sm:$0xf]
    %v350 = vld [vmem:[%s3 + $0x8] sm:$0xf]
    %v351 = vld [vmem:[%s3 + $0xc] sm:$0xf]
    %v352 = vld [vmem:[%s3 + $0x10] sm:$0xf]
    %v353 = vld [vmem:[%s3 + $0x14] sm:$0xf]
    %v354 = vld [vmem:[%s3 + $0x18] sm:$0xf]
    %v355 = vld [vmem:[%s3 + $0x1c] sm:$0xf]
    %v356 = vld [vmem:[%s3 + $0x20] sm:$0xf]
    %v357 = vld [vmem:[%s3 + $0x24] sm:$0xf]
    %v358 = vld [vmem:[%s3 + $0x28] sm:$0xf]
    %v359 = vld [vmem:[%s3 + $0x2c] sm:$0xf]
    %v360 = vld [vmem:[%s3 + $0x30] sm:$0xf]
    %v361 = vld [vmem:[%s3 + $0x34] sm:$0xf]
    %v362 = vld [vmem:[%s3 + $0x38] sm:$0xf]
    %v363 = vld [vmem:[%s4] sm:$0x1]
    %v365 = vlaneseq
    %v366 = vshrl.u32 %v365, 7
    %v367 = vsub.s32 0, %v366
    %v368 = vrot.slane %v363, %v367
    %v385 = vunpack.c.l.b16 %v348
    %v386 = vunpack.c.l.b16 %v349
    %v387 = vunpack.c.l.b16 %v350
    %v388 = vunpack.c.l.b16 %v351
    %v389 = vunpack.c.l.b16 %v352
    %v390 = vunpack.c.l.b16 %v353
    %v391 = vunpack.c.l.b16 %v354
    %v392 = vunpack.c.l.b16 %v355
    %v393 = vunpack.c.l.b16 %v356
    %v394 = vunpack.c.l.b16 %v357
    %v395 = vunpack.c.l.b16 %v358
    %v396 = vunpack.c.l.b16 %v359
    %v397 = vunpack.c.l.b16 %v360
    %v398 = vunpack.c.l.b16 %v361
    %v399 = vunpack.c.l.b16 %v362
    %v400 = vpack.c.b16 %v386, %v385
    %v401 = vpack.c.b16 %v388, %v387
    %v402 = vpack.c.b16 %v390, %v389
    %v403 = vpack.c.b16 %v392, %v391
    %v404 = vpack.c.b16 %v394, %v393
    %v405 = vpack.c.b16 %v396, %v395
    %v406 = vpack.c.b16 %v398, %v397
    %v407 = vpack.c.b16 %v399, %v399
    %vm415 = vcmask 982016
    %v417 = vsel %vm415, %v347, 0
    %vm419 = vcmask 1043456
    %v421 = vsel %vm419, %v407, 0
    %423 = vmatprep.subr.bf16.mxu0 0
    %424 = vmatpush1.bf16.msra.mxu0 %v400
    %425 = vmatprep.subr.bf16.mxu0 0
    %426 = vmatpush1.bf16.msra.mxu0 %v401
    %427 = vmatprep.subr.bf16.mxu0 0
    %428 = vmatpush1.bf16.msra.mxu0 %v402
    %429 = vmatprep.subr.bf16.mxu0 0
    %430 = vmatpush1.bf16.msra.mxu0 %v403
    %431 = vmatprep.subr.bf16.mxu0 0
    %432 = vmatpush1.bf16.msra.mxu0 %v404
    %433 = vmatprep.subr.bf16.mxu0 0
    %434 = vmatpush1.bf16.msra.mxu0 %v405
    %435 = vmatprep.subr.bf16.mxu0 0
    %436 = vmatpush1.bf16.msra.mxu0 %v406
    %437 = vmatprep.subr.bf16.mxu0 0
    %438 = vmatpush1.bf16.msra.mxu0 %v421
    %439 = vmatprep.subr.bf16.mxu0 0
    %440 = vmatpush1.bf16.msra.mxu0 0
    %441 = vmatprep.subr.bf16.mxu0 0
    %442 = vmatpush1.bf16.msra.mxu0 0
    %443 = vmatprep.subr.bf16.mxu0 0
    %444 = vmatpush1.bf16.msra.mxu0 0
    %445 = vmatprep.subr.bf16.mxu0 0
    %446 = vmatpush1.bf16.msra.mxu0 0
    %447 = vmatprep.subr.bf16.mxu0 0
    %448 = vmatpush1.bf16.msra.mxu0 0
    %449 = vmatprep.subr.bf16.mxu0 0
    %450 = vmatpush1.bf16.msra.mxu0 0
    %451 = vmatprep.subr.bf16.mxu0 0
    %452 = vmatpush1.bf16.msra.mxu0 0
    %453 = vmatprep.subr.bf16.mxu0 0
    %454 = vmatpush1.bf16.msra.mxu0 0
    %455 = vmatprep.mubr.bf16.mxu0 0
    %456 = vmatmul.mubr.bf16.gmra.mrb[0].mxu0 %v417
    %v457 = vpop.f32.mrb[0].mxu0
    %v458 = vadd.f32 %v368, %v457
    %v459 = vpop.f32.mrb[0].mxu0
    %v460 = vpop.f32.mrb[0].mxu0
    %v461 = vpop.f32.mrb[0].mxu0
    %462 = vdwg.mxu0
    %v463 = vmax.f32 %v458, 0.0
    %v464 = vpack.c.bf16 %v463, %v463
    %v465 = vld [vmem:[%s5] sm:$0xf]
    %v466 = vld [vmem:[%s5 + $0x4] sm:$0xf]
    %v467 = vld [vmem:[%s5 + $0x8] sm:$0xf]
    %v468 = vld [vmem:[%s5 + $0xc] sm:$0xf]
    %v469 = vld [vmem:[%s5 + $0x10] sm:$0xf]
    %v470 = vld [vmem:[%s5 + $0x14] sm:$0xf]
    %v471 = vld [vmem:[%s5 + $0x18] sm:$0xf]
    %v472 = vld [vmem:[%s5 + $0x1c] sm:$0xf]
    %v473 = vld [vmem:[%s5 + $0x20] sm:$0xf]
    %v474 = vld [vmem:[%s5 + $0x24] sm:$0xf]
    %v475 = vld [vmem:[%s5 + $0x28] sm:$0x3]
    %v476 = vld [vmem:[%s6] sm:$0x1]
    %v478 = vlaneseq
    %v479 = vshrl.u32 %v478, 7
    %v480 = vsub.s32 0, %v479
    %v481 = vrot.slane %v476, %v480
    %v494 = vunpack.c.l.b16 %v465
    %v495 = vunpack.c.l.b16 %v466
    %v496 = vunpack.c.l.b16 %v467
    %v497 = vunpack.c.l.b16 %v468
    %v498 = vunpack.c.l.b16 %v469
    %v499 = vunpack.c.l.b16 %v470
    %v500 = vunpack.c.l.b16 %v471
    %v501 = vunpack.c.l.b16 %v472
    %v502 = vunpack.c.l.b16 %v473
    %v503 = vunpack.c.l.b16 %v474
    %v504 = vunpack.c.l.b16 %v475
    %v505 = vpack.c.b16 %v495, %v494
    %v506 = vpack.c.b16 %v497, %v496
    %v507 = vpack.c.b16 %v499, %v498
    %v508 = vpack.c.b16 %v501, %v500
    %v509 = vpack.c.b16 %v503, %v502
    %v510 = vpack.c.b16 %v504, %v504
    %vm516 = vcmask 687104
    %v518 = vsel %vm516, %v464, 0
    %vm520 = vcmask 1041408
    %v522 = vsel %vm520, %v510, 0
    %524 = vmatprep.subr.bf16.mxu0 0
    %525 = vmatpush1.bf16.msra.mxu0 %v505
    %526 = vmatprep.subr.bf16.mxu0 0
    %527 = vmatpush1.bf16.msra.mxu0 %v506
    %528 = vmatprep.subr.bf16.mxu0 0
    %529 = vmatpush1.bf16.msra.mxu0 %v507
    %530 = vmatprep.subr.bf16.mxu0 0
    %531 = vmatpush1.bf16.msra.mxu0 %v508
    %532 = vmatprep.subr.bf16.mxu0 0
    %533 = vmatpush1.bf16.msra.mxu0 %v509
    %534 = vmatprep.subr.bf16.mxu0 0
    %535 = vmatpush1.bf16.msra.mxu0 %v522
    %536 = vmatprep.subr.bf16.mxu0 0
    %537 = vmatpush1.bf16.msra.mxu0 0
    %538 = vmatprep.subr.bf16.mxu0 0
    %539 = vmatpush1.bf16.msra.mxu0 0
    %540 = vmatprep.subr.bf16.mxu0 0
    %541 = vmatpush1.bf16.msra.mxu0 0
    %542 = vmatprep.subr.bf16.mxu0 0
    %543 = vmatpush1.bf16.msra.mxu0 0
    %544 = vmatprep.subr.bf16.mxu0 0
    %545 = vmatpush1.bf16.msra.mxu0 0
    %546 = vmatprep.subr.bf16.mxu0 0
    %547 = vmatpush1.bf16.msra.mxu0 0
    %548 = vmatprep.subr.bf16.mxu0 0
    %549 = vmatpush1.bf16.msra.mxu0 0
    %550 = vmatprep.subr.bf16.mxu0 0
    %551 = vmatpush1.bf16.msra.mxu0 0
    %552 = vmatprep.subr.bf16.mxu0 0
    %553 = vmatpush1.bf16.msra.mxu0 0
    %554 = vmatprep.subr.bf16.mxu0 0
    %555 = vmatpush1.bf16.msra.mxu0 0
    %556 = vmatprep.mubr.bf16.mxu0 0
    %557 = vmatmul.mubr.bf16.gmra.mrb[0].mxu0 %v518
    %v558 = vpop.f32.mrb[0].mxu0
    %v559 = vadd.f32 %v481, %v558
    %v560 = vpop.f32.mrb[0].mxu0
    %v561 = vpop.f32.mrb[0].mxu0
    %v562 = vpop.f32.mrb[0].mxu0
    %563 = vdwg.mxu0
    %vm564 = vcmask 74752
    %565 = vst.msk [vmem:[#allocation2] sm:$0x3] %vm564, %v559
    // Predicated region
    $region30: #{net_forward.3} parent=1 // pred_check
      _
    $region31: #{net_forward.3} parent=1 // pred_check_branch
      %567 = sbr.rel (0) target = $region33
    $region32: #{net_forward.3} parent=1 // pred_region
      %s569 = ssub.s32 32, 32
      %570 = vsyncadd [#allocation3], %s569
      %s572 = sshll.u32 [#allocation2], 4
      %s573 = int_to_ptr.vmem [resolvable:$true] %s572
      %575 = dma.vmem_to_hbm [thread:$0]  %s573, 32, %s7, [#allocation3]
    $region33: #{net_forward.3} parent=1 // pred_fallthru
      _
    // Predicated region
    $region34: #{net_forward.3} parent=1 // pred_check
      _
    $region35: #{net_forward.3} parent=1 // pred_check_branch
      %577 = sbr.rel (0) target = $region37
    $region36: #{net_forward.3} parent=1 // pred_region
      %578 = dma.done [#allocation3], 32
    $region37: #{net_forward.3} parent=1 // pred_fallthru
      _
    %579 = vsyncpa [#allocation3], 1

// kernel: net_forward.2
$region0: #{net_forward.2}
  #allocation0 [shape = 'u32[]', space=smem, size = 0x4, offset = 0x4, fixed_abs, tag = 'smem constant byte address 0x4 - core index']
  #allocation1 [shape = 'u32[144,128]{1,0:T(1,128)}', space=vmem, size = 0x12000, scoped, tag = 'internal scratch']
  #allocation2 [shape = 'bf16[400,896]{1,0:T(16,128)(2,1)}', space=vmem, size = 0xaf000, scoped, tag = 'scratch operand']
  #allocation3 [shape = 'bf16[400,140]{1,0:T(16,128)(2,1)}', space=vmem, size = 0x32000, scoped, tag = 'scratch operand']
  %s0 = inlined_call_operand.vmem [shape: f32[2,3,1024], index: 0, kind: input, shape index: {}]
  %s1 = inlined_call_operand.vmem [shape: bf16[16,3], index: 1, kind: input, shape index: {}]
  %s2 = inlined_call_operand.vmem [shape: bf16[16,400], index: 2, kind: input, shape index: {}]
  %s3 = inlined_call_operand.vmem [shape: f32[16,1], index: 3, kind: input, shape index: {}]
  %s4 = inlined_call_operand.hbm [shape: bf16[863,256], index: 4, kind: input, shape index: {}]
  %s5 = inlined_call_operand.vmem [shape: bf16[16,400], index: 5, kind: input, shape index: {}]
  %s6 = inlined_call_operand.vmem [shape: f32[16,1], index: 6, kind: input, shape index: {}]
  %s7 = inlined_call_operand.vmem [shape: bf16[125,25], index: 7, kind: input, shape index: {}]
  %s8 = inlined_call_operand.vmem [shape: f32[2,1,400], index: 8, kind: output, shape index: {}]
  %s9 = sld [smem:[#allocation0]]
  $region53: #{net_forward.2} parent=0
    _
  %s11 = ssub.s32 1, %s9
  %s12 = scalar_select 0, %s11, %s9
  $region1: #{net_forward.2} parent=0
    #allocation4 [shape = 'u8[442368]{0}', space=vmem, size = 0x6c000, scoped, tag = 'input window, operand 4, single buffered']
    #allocation5 [shape = 's32[1]{0}', space=sflag, size = 0x4, scoped, tag = 'scoped memory for net_forward.2']
    %13 = vsyncpa [#allocation5], 0
    // Predicated region
    $region2: #{net_forward.2} parent=1 // pred_check
      _
    $region3: #{net_forward.2} parent=1 // pred_check_branch
      %15 = sbr.rel (0) target = $region5
    $region4: #{net_forward.2} parent=1 // pred_region
      _
    $region5: #{net_forward.2} parent=1 // pred_fallthru
      _
    // Predicated region
    $region6: #{net_forward.2} parent=1 // pred_check
      _
    $region7: #{net_forward.2} parent=1 // pred_check_branch
      %17 = sbr.rel (0) target = $region9
    $region8: #{net_forward.2} parent=1 // pred_region
      _
    $region9: #{net_forward.2} parent=1 // pred_fallthru
      _
    // Predicated region
    $region10: #{net_forward.2} parent=1 // pred_check
      _
    $region11: #{net_forward.2} parent=1 // pred_check_branch
      %19 = sbr.rel (0) target = $region13
    $region12: #{net_forward.2} parent=1 // pred_region
      _
    $region13: #{net_forward.2} parent=1 // pred_fallthru
      _
    // Predicated region
    $region14: #{net_forward.2} parent=1 // pred_check
      _
    $region15: #{net_forward.2} parent=1 // pred_check_branch
      %21 = sbr.rel (0) target = $region17
    $region16: #{net_forward.2} parent=1 // pred_region
      _
    $region17: #{net_forward.2} parent=1 // pred_fallthru
      _
    // Predicated region
    $region18: #{net_forward.2} parent=1 // pred_check
      _
    $region19: #{net_forward.2} parent=1 // pred_check_branch
      %23 = sbr.rel (0) target = $region21
    $region20: #{net_forward.2} parent=1 // pred_region
      %s25 = ssub.s32 13824, 13824
      %26 = vsyncadd [#allocation5], %s25
      %s27 = sshll.u32 [#allocation4], 4
      %s28 = int_to_ptr.vmem [resolvable:$true] %s27
      %33 = dma.hbm_to_vmem [thread:$0]  %s4, 13824, %s28, [#allocation5], 128, 128, 8
    $region21: #{net_forward.2} parent=1 // pred_fallthru
      _
    // Predicated region
    $region22: #{net_forward.2} parent=1 // pred_check
      _
    $region23: #{net_forward.2} parent=1 // pred_check_branch
      %35 = sbr.rel (0) target = $region25
    $region24: #{net_forward.2} parent=1 // pred_region
      _
    $region25: #{net_forward.2} parent=1 // pred_fallthru
      _
    // Predicated region
    $region26: #{net_forward.2} parent=1 // pred_check
      _
    $region27: #{net_forward.2} parent=1 // pred_check_branch
      %37 = sbr.rel (0) target = $region29
    $region28: #{net_forward.2} parent=1 // pred_region
      _
    $region29: #{net_forward.2} parent=1 // pred_fallthru
      _
    // Predicated region
    $region30: #{net_forward.2} parent=1 // pred_check
      _
    $region31: #{net_forward.2} parent=1 // pred_check_branch
      %39 = sbr.rel (0) target = $region33
    $region32: #{net_forward.2} parent=1 // pred_region
      _
    $region33: #{net_forward.2} parent=1 // pred_fallthru
      _
    // Predicated region
    $region34: #{net_forward.2} parent=1 // pred_check
      _
    $region35: #{net_forward.2} parent=1 // pred_check_branch
      %41 = sbr.rel (0) target = $region37
    $region36: #{net_forward.2} parent=1 // pred_region
      %42 = dma.done [#allocation5], 13824
    $region37: #{net_forward.2} parent=1 // pred_fallthru
      _
    loop: start=0, step=1, limit=2
    $region38: #{net_forward.2} parent=1 // loop_pre_header
      _
    $region39: #{net_forward.2} parent=1 // loop_header
      %s45 = sphi 0, %s49
      %p46 = scmp.ge.s32.totalorder %s45, 2
    $region40: #{net_forward.2} parent=1 // loop_header_branch
      %48 = sbr.rel (%p46) target = $region44
    $region41: #{net_forward.2} parent=1 // loop_body
      %s50 = smul.u32 %s45, 8
      %s51 = smul.addr %s50, 4
      %s52 = scalar_lea.vmem %s0, %s51
      %v53 = vld [vmem:[%s52] sm:$0x77]
      %v54 = vld [vmem:[%s52 + $0x8] sm:$0x77]
      %v55 = vld [vmem:[%s52 + $0x10] sm:$0x77]
      %v56 = vld [vmem:[%s52 + $0x18] sm:$0x77]
      %v61 = vcombine.high %v53, %v53
      %v62 = vcombine.high %v54, %v54
      %v63 = vcombine.high %v55, %v55
      %v64 = vcombine.high %v56, %v56
      %v69 = vpack.c.bf16 %v53, %v53
      %v70 = vpack.c.bf16 %v61, %v61
      %v71 = vpack.c.bf16 %v54, %v54
      %v72 = vpack.c.bf16 %v62, %v62
      %v73 = vpack.c.bf16 %v55, %v55
      %v74 = vpack.c.bf16 %v63, %v63
      %v75 = vpack.c.bf16 %v56, %v56
      %v76 = vpack.c.bf16 %v64, %v64
      %v77 = vld [vmem:[%s1] sm:$0xf]
      %v78 = vld [vmem:[%s1 + $0x4] sm:$0xf]
      %v81 = vunpack.c.l.b16 %v77
      %v82 = vunpack.c.l.b16 %v78
      %v83 = vpack.c.b16 %v82, %v81
      %vm84 = vcmask 23552
      %v86 = vsel %vm84, %v83, 0
      %vm88 = vcmask 1040384
      %vm89 = vcmask 1041408
      %v90 = vsel %vm88, 4294967295, 65535
      %v91 = vsel %vm89, %v90, 0
      %v93 = vand.u32 %v69, %v91
      %v96 = vand.u32 %v70, %v91
      %v99 = vand.u32 %v71, %v91
      %v102 = vand.u32 %v72, %v91
      %v105 = vand.u32 %v73, %v91
      %v108 = vand.u32 %v74, %v91
      %v111 = vand.u32 %v75, %v91
      %v114 = vand.u32 %v76, %v91
      %116 = vmatprep.subr.bf16.mxu0 %v96
      %117 = vmatpush1.bf16.msra.mxu0 %v93
      %118 = vmatprep.subr.bf16.mxu0 0
      %119 = vmatpush1.bf16.msra.mxu0 0
      %120 = vmatprep.subr.bf16.mxu0 0
      %121 = vmatpush1.bf16.msra.mxu0 0
      %122 = vmatprep.subr.bf16.mxu0 0
      %123 = vmatpush1.bf16.msra.mxu0 0
      %124 = vmatprep.subr.bf16.mxu0 0
      %125 = vmatpush1.bf16.msra.mxu0 0
      %126 = vmatprep.subr.bf16.mxu0 0
      %127 = vmatpush1.bf16.msra.mxu0 0
      %128 = vmatprep.subr.bf16.mxu0 0
      %129 = vmatpush1.bf16.msra.mxu0 0
      %130 = vmatprep.subr.bf16.mxu0 0
      %131 = vmatpush1.bf16.msra.mxu0 0
      %132 = vmatprep.subr.bf16.mxu0 0
      %133 = vmatpush1.bf16.msra.mxu0 0
      %134 = vmatprep.subr.bf16.mxu0 0
      %135 = vmatpush1.bf16.msra.mxu0 0
      %136 = vmatprep.subr.bf16.mxu0 0
      %137 = vmatpush1.bf16.msra.mxu0 0
      %138 = vmatprep.subr.bf16.mxu0 0
      %139 = vmatpush1.bf16.msra.mxu0 0
      %140 = vmatprep.subr.bf16.mxu0 0
      %141 = vmatpush1.bf16.msra.mxu0 0
      %142 = vmatprep.subr.bf16.mxu0 0
      %143 = vmatpush1.bf16.msra.mxu0 0
      %144 = vmatprep.subr.bf16.mxu0 0
      %145 = vmatpush1.bf16.msra.mxu0 0
      %146 = vmatprep.subr.bf16.mxu0 0
      %147 = vmatpush1.bf16.msra.mxu0 0
      %148 = vmatprep.mubr.bf16.mxu0 0
      %149 = vmatmul.mubr.bf16.gmra.mrb[0].mxu0 %v86
      %v150 = vpop.f32.mrb[0].mxu0
      %v151 = vadd.f32 0.0, %v150
      %v152 = vpop.f32.mrb[0].mxu0
      %v153 = vadd.f32 0.0, %v152
      %v154 = vpop.f32.mrb[0].mxu0
      %v155 = vadd.f32 0.0, %v154
      %v156 = vpop.f32.mrb[0].mxu0
      %v157 = vadd.f32 0.0, %v156
      %158 = vdwg.mxu0
      %159 = vmatprep.subr.bf16.mxu0 %v102
      %160 = vmatpush1.bf16.msra.mxu0 %v99
      %161 = vmatprep.subr.bf16.mxu0 0
      %162 = vmatpush1.bf16.msra.mxu0 0
      %163 = vmatprep.subr.bf16.mxu0 0
      %164 = vmatpush1.bf16.msra.mxu0 0
      %165 = vmatprep.subr.bf16.mxu0 0
      %166 = vmatpush1.bf16.msra.mxu0 0
      %167 = vmatprep.subr.bf16.mxu0 0
      %168 = vmatpush1.bf16.msra.mxu0 0
      %169 = vmatprep.subr.bf16.mxu0 0
      %170 = vmatpush1.bf16.msra.mxu0 0
      %171 = vmatprep.subr.bf16.mxu0 0
      %172 = vmatpush1.bf16.msra.mxu0 0
      %173 = vmatprep.subr.bf16.mxu0 0
      %174 = vmatpush1.bf16.msra.mxu0 0
      %175 = vmatprep.subr.bf16.mxu0 0
      %176 = vmatpush1.bf16.msra.mxu0 0
      %177 = vmatprep.subr.bf16.mxu0 0
      %178 = vmatpush1.bf16.msra.mxu0 0
      %179 = vmatprep.subr.bf16.mxu0 0
      %180 = vmatpush1.bf16.msra.mxu0 0
      %181 = vmatprep.subr.bf16.mxu0 0
      %182 = vmatpush1.bf16.msra.mxu0 0
      %183 = vmatprep.subr.bf16.mxu0 0
      %184 = vmatpush1.bf16.msra.mxu0 0
      %185 = vmatprep.subr.bf16.mxu0 0
      %186 = vmatpush1.bf16.msra.mxu0 0
      %187 = vmatprep.subr.bf16.mxu0 0
      %188 = vmatpush1.bf16.msra.mxu0 0
      %189 = vmatprep.subr.bf16.mxu0 0
      %190 = vmatpush1.bf16.msra.mxu0 0
      %191 = vmatprep.mubr.bf16.mxu0 0
      %192 = vmatmul.mubr.bf16.gmra.mrb[0].mxu0 %v86
      %v193 = vpop.f32.mrb[0].mxu0
      %v194 = vadd.f32 0.0, %v193
      %v195 = vpop.f32.mrb[0].mxu0
      %v196 = vadd.f32 0.0, %v195
      %v197 = vpop.f32.mrb[0].mxu0
      %v198 = vadd.f32 0.0, %v197
      %v199 = vpop.f32.mrb[0].mxu0
      %v200 = vadd.f32 0.0, %v199
      %201 = vdwg.mxu0
      %202 = vmatprep.subr.bf16.mxu0 %v108
      %203 = vmatpush1.bf16.msra.mxu0 %v105
      %204 = vmatprep.subr.bf16.mxu0 0
      %205 = vmatpush1.bf16.msra.mxu0 0
      %206 = vmatprep.subr.bf16.mxu0 0
      %207 = vmatpush1.bf16.msra.mxu0 0
      %208 = vmatprep.subr.bf16.mxu0 0
      %209 = vmatpush1.bf16.msra.mxu0 0
      %210 = vmatprep.subr.bf16.mxu0 0
      %211 = vmatpush1.bf16.msra.mxu0 0
      %212 = vmatprep.subr.bf16.mxu0 0
      %213 = vmatpush1.bf16.msra.mxu0 0
      %214 = vmatprep.subr.bf16.mxu0 0
      %215 = vmatpush1.bf16.msra.mxu0 0
      %216 = vmatprep.subr.bf16.mxu0 0
      %217 = vmatpush1.bf16.msra.mxu0 0
      %218 = vmatprep.subr.bf16.mxu0 0
      %219 = vmatpush1.bf16.msra.mxu0 0
      %220 = vmatprep.subr.bf16.mxu0 0
      %221 = vmatpush1.bf16.msra.mxu0 0
      %222 = vmatprep.subr.bf16.mxu0 0
      %223 = vmatpush1.bf16.msra.mxu0 0
      %224 = vmatprep.subr.bf16.mxu0 0
      %225 = vmatpush1.bf16.msra.mxu0 0
      %226 = vmatprep.subr.bf16.mxu0 0
      %227 = vmatpush1.bf16.msra.mxu0 0
      %228 = vmatprep.subr.bf16.mxu0 0
      %229 = vmatpush1.bf16.msra.mxu0 0
      %230 = vmatprep.subr.bf16.mxu0 0
      %231 = vmatpush1.bf16.msra.mxu0 0
      %232 = vmatprep.subr.bf16.mxu0 0
      %233 = vmatpush1.bf16.msra.mxu0 0
      %234 = vmatprep.mubr.bf16.mxu0 0
      %235 = vmatmul.mubr.bf16.gmra.mrb[0].mxu0 %v86
      %v236 = vpop.f32.mrb[0].mxu0
      %v237 = vadd.f32 0.0, %v236
      %v238 = vpop.f32.mrb[0].mxu0
      %v239 = vadd.f32 0.0, %v238
      %v240 = vpop.f32.mrb[0].mxu0
      %v241 = vadd.f32 0.0, %v240
      %v242 = vpop.f32.mrb[0].mxu0
      %v243 = vadd.f32 0.0, %v242
      %244 = vdwg.mxu0
      %245 = vmatprep.subr.bf16.mxu0 %v114
      %246 = vmatpush1.bf16.msra.mxu0 %v111
      %247 = vmatprep.subr.bf16.mxu0 0
      %248 = vmatpush1.bf16.msra.mxu0 0
      %249 = vmatprep.subr.bf16.mxu0 0
      %250 = vmatpush1.bf16.msra.mxu0 0
      %251 = vmatprep.subr.bf16.mxu0 0
      %252 = vmatpush1.bf16.msra.mxu0 0
      %253 = vmatprep.subr.bf16.mxu0 0
      %254 = vmatpush1.bf16.msra.mxu0 0
      %255 = vmatprep.subr.bf16.mxu0 0
      %256 = vmatpush1.bf16.msra.mxu0 0
      %257 = vmatprep.subr.bf16.mxu0 0
      %258 = vmatpush1.bf16.msra.mxu0 0
      %259 = vmatprep.subr.bf16.mxu0 0
      %260 = vmatpush1.bf16.msra.mxu0 0
      %261 = vmatprep.subr.bf16.mxu0 0
      %262 = vmatpush1.bf16.msra.mxu0 0
      %263 = vmatprep.subr.bf16.mxu0 0
      %264 = vmatpush1.bf16.msra.mxu0 0
      %265 = vmatprep.subr.bf16.mxu0 0
      %266 = vmatpush1.bf16.msra.mxu0 0
      %267 = vmatprep.subr.bf16.mxu0 0
      %268 = vmatpush1.bf16.msra.mxu0 0
      %269 = vmatprep.subr.bf16.mxu0 0
      %270 = vmatpush1.bf16.msra.mxu0 0
      %271 = vmatprep.subr.bf16.mxu0 0
      %272 = vmatpush1.bf16.msra.mxu0 0
      %273 = vmatprep.subr.bf16.mxu0 0
      %274 = vmatpush1.bf16.msra.mxu0 0
      %275 = vmatprep.subr.bf16.mxu0 0
      %276 = vmatpush1.bf16.msra.mxu0 0
      %277 = vmatprep.mubr.bf16.mxu0 0
      %278 = vmatmul.mubr.bf16.gmra.mrb[0].mxu0 %v86
      %v279 = vpop.f32.mrb[0].mxu0
      %v280 = vadd.f32 0.0, %v279
      %v281 = vpop.f32.mrb[0].mxu0
      %v282 = vadd.f32 0.0, %v281
      %v283 = vpop.f32.mrb[0].mxu0
      %v284 = vadd.f32 0.0, %v283
      %v285 = vpop.f32.mrb[0].mxu0
      %v286 = vadd.f32 0.0, %v285
      %287 = vdwg.mxu0
      %v288 = vpack.c.bf16 %v155, %v151
      %v289 = vpack.c.bf16 %v157, %v153
      %v290 = vpack.c.bf16 %v198, %v194
      %v291 = vpack.c.bf16 %v200, %v196
      %v292 = vpack.c.bf16 %v241, %v237
      %v293 = vpack.c.bf16 %v243, %v239
      %v294 = vpack.c.bf16 %v284, %v280
      %v295 = vpack.c.bf16 %v286, %v282
      %v296 = vpack.c.bf16 0.0, 0.0
      %297 = vst [vmem:[#allocation2] sm:$0xff] %v288
      %298 = vst [vmem:[#allocation2 + $0x8] sm:$0xff] %v289
      %299 = vst [vmem:[#allocation2 + $0x10] sm:$0xff] %v290
      %300 = vst [vmem:[#allocation2 + $0x18] sm:$0xff] %v291
      %301 = vst [vmem:[#allocation2 + $0x20] sm:$0xff] %v292
      %302 = vst [vmem:[#allocation2 + $0x28] sm:$0xff] %v293
      %303 = vst [vmem:[#allocation2 + $0x30] sm:$0xff] %v294
      %312 = vrot.lane.b32.xlu0 %v288, 127
      %v313 = vpop.permute.xlu0 %312
      %314 = vrot.lane.b32.xlu0 %v289, 127
      %v315 = vpop.permute.xlu0 %314
      %316 = vrot.lane.b32.xlu0 %v290, 127
      %v317 = vpop.permute.xlu0 %316
      %318 = vrot.lane.b32.xlu0 %v291, 127
      %v319 = vpop.permute.xlu0 %318
      %320 = vrot.lane.b32.xlu0 %v292, 127
      %v321 = vpop.permute.xlu0 %320
      %322 = vrot.lane.b32.xlu0 %v293, 127
      %v323 = vpop.permute.xlu0 %322
      %324 = vrot.lane.b32.xlu0 %v294, 127
      %v325 = vpop.permute.xlu0 %324
      %326 = vrot.lane.b32.xlu0 %v295, 127
      %v327 = vpop.permute.xlu0 %326
      %vm328 = vcmask 1039360
      %v329 = vsel %vm328, %v313, %v315
      %v330 = vsel %vm328, %v315, %v317
      %v331 = vsel %vm328, %v317, %v319
      %v332 = vsel %vm328, %v319, %v321
      %v333 = vsel %vm328, %v321, %v323
      %v334 = vsel %vm328, %v323, %v325
      %v335 = vsel %vm328, %v325, %v327
      %343 = vst [vmem:[#allocation2 + $0x38] sm:$0xff] %v329
      %344 = vst [vmem:[#allocation2 + $0x40] sm:$0xff] %v330
      %345 = vst [vmem:[#allocation2 + $0x48] sm:$0xff] %v331
      %346 = vst [vmem:[#allocation2 + $0x50] sm:$0xff] %v332
      %347 = vst [vmem:[#allocation2 + $0x58] sm:$0xff] %v333
      %348 = vst [vmem:[#allocation2 + $0x60] sm:$0xff] %v334
      %349 = vst [vmem:[#allocation2 + $0x68] sm:$0xff] %v335
      %350 = vrot.lane.b32.xlu0 %v288, 126
      %v351 = vpop.permute.xlu0 %350
      %352 = vrot.lane.b32.xlu0 %v289, 126
      %v353 = vpop.permute.xlu0 %352
      %354 = vrot.lane.b32.xlu0 %v290, 126
      %v355 = vpop.permute.xlu0 %354
      %356 = vrot.lane.b32.xlu0 %v291, 126
      %v357 = vpop.permute.xlu0 %356
      %358 = vrot.lane.b32.xlu0 %v292, 126
      %v359 = vpop.permute.xlu0 %358
      %360 = vrot.lane.b32.xlu0 %v293, 126
      %v361 = vpop.permute.xlu0 %360
      %362 = vrot.lane.b32.xlu0 %v294, 126
      %v363 = vpop.permute.xlu0 %362
      %364 = vrot.lane.b32.xlu0 %v295, 126
      %v365 = vpop.permute.xlu0 %364
      %vm366 = vcmask 1031168
      %v367 = vsel %vm366, %v351, %v353
      %v368 = vsel %vm366, %v353, %v355
      %v369 = vsel %vm366, %v355, %v357
      %v370 = vsel %vm366, %v357, %v359
      %v371 = vsel %vm366, %v359, %v361
      %v372 = vsel %vm366, %v361, %v363
      %v373 = vsel %vm366, %v363, %v365
      %381 = vst [vmem:[#allocation2 + $0x70] sm:$0xff] %v367
      %382 = vst [vmem:[#allocation2 + $0x78] sm:$0xff] %v368
      %383 = vst [vmem:[#allocation2 + $0x80] sm:$0xff] %v369
      %384 = vst [vmem:[#allocation2 + $0x88] sm:$0xff] %v370
      %385 = vst [vmem:[#allocation2 + $0x90] sm:$0xff] %v371
      %386 = vst [vmem:[#allocation2 + $0x98] sm:$0xff] %v372
      %387 = vst [vmem:[#allocation2 + $0xa0] sm:$0xff] %v373
      %388 = vrot.lane.b32.xlu0 %v288, 125
      %v389 = vpop.permute.xlu0 %388
      %390 = vrot.lane.b32.xlu0 %v289, 125
      %v391 = vpop.permute.xlu0 %390
      %392 = vrot.lane.b32.xlu0 %v290, 125
      %v393 = vpop.permute.xlu0 %392
      %394 = vrot.lane.b32.xlu0 %v291, 125
      %v395 = vpop.permute.xlu0 %394
      %396 = vrot.lane.b32.xlu0 %v292, 125
      %v397 = vpop.permute.xlu0 %396
      %398 = vrot.lane.b32.xlu0 %v293, 125
      %v399 = vpop.permute.xlu0 %398
      %400 = vrot.lane.b32.xlu0 %v294, 125
      %v401 = vpop.permute.xlu0 %400
      %402 = vrot.lane.b32.xlu0 %v295, 125
      %v403 = vpop.permute.xlu0 %402
      %vm404 = vcmask 1022976
      %v405 = vsel %vm404, %v389, %v391
      %v406 = vsel %vm404, %v391, %v393
      %v407 = vsel %vm404, %v393, %v395
      %v408 = vsel %vm404, %v395, %v397
      %v409 = vsel %vm404, %v397, %v399
      %v410 = vsel %vm404, %v399, %v401
      %v411 = vsel %vm404, %v401, %v403
      %419 = vst [vmem:[#allocation2 + $0xa8] sm:$0xff] %v405
      %420 = vst [vmem:[#allocation2 + $0xb0] sm:$0xff] %v406
      %421 = vst [vmem:[#allocation2 + $0xb8] sm:$0xff] %v407
      %422 = vst [vmem:[#allocation2 + $0xc0] sm:$0xff] %v408
      %423 = vst [vmem:[#allocation2 + $0xc8] sm:$0xff] %v409
      %424 = vst [vmem:[#allocation2 + $0xd0] sm:$0xff] %v410
      %425 = vst [vmem:[#allocation2 + $0xd8] sm:$0xff] %v411
      %426 = vrot.lane.b32.xlu0 %v288, 124
      %v427 = vpop.permute.xlu0 %426
      %428 = vrot.lane.b32.xlu0 %v289, 124
      %v429 = vpop.permute.xlu0 %428
      %430 = vrot.lane.b32.xlu0 %v290, 124
      %v431 = vpop.permute.xlu0 %430
      %432 = vrot.lane.b32.xlu0 %v291, 124
      %v433 = vpop.permute.xlu0 %432
      %434 = vrot.lane.b32.xlu0 %v292, 124
      %v435 = vpop.permute.xlu0 %434
      %436 = vrot.lane.b32.xlu0 %v293, 124
      %v437 = vpop.permute.xlu0 %436
      %438 = vrot.lane.b32.xlu0 %v294, 124
      %v439 = vpop.permute.xlu0 %438
      %440 = vrot.lane.b32.xlu0 %v295, 124
      %v441 = vpop.permute.xlu0 %440
      %vm442 = vcmask 1014784
      %v443 = vsel %vm442, %v427, %v429
      %v444 = vsel %vm442, %v429, %v431
      %v445 = vsel %vm442, %v431, %v433
      %v446 = vsel %vm442, %v433, %v435
      %v447 = vsel %vm442, %v435, %v437
      %v448 = vsel %vm442, %v437, %v439
      %v449 = vsel %vm442, %v439, %v441
      %457 = vst [vmem:[#allocation2 + $0xe0] sm:$0xff] %v443
      %458 = vst [vmem:[#allocation2 + $0xe8] sm:$0xff] %v444
      %459 = vst [vmem:[#allocation2 + $0xf0] sm:$0xff] %v445
      %460 = vst [vmem:[#allocation2 + $0xf8] sm:$0xff] %v446
      %461 = vst [vmem:[#allocation2 + $0x100] sm:$0xff] %v447
      %462 = vst [vmem:[#allocation2 + $0x108] sm:$0xff] %v448
      %463 = vst [vmem:[#allocation2 + $0x110] sm:$0xff] %v449
      %464 = vrot.lane.b32.xlu0 %v288, 96
      %v465 = vpop.permute.xlu0 %464
      %466 = vrot.lane.b32.xlu0 %v289, 96
      %v467 = vpop.permute.xlu0 %466
      %468 = vrot.lane.b32.xlu0 %v290, 96
      %v469 = vpop.permute.xlu0 %468
      %470 = vrot.lane.b32.xlu0 %v291, 96
      %v471 = vpop.permute.xlu0 %470
      %472 = vrot.lane.b32.xlu0 %v292, 96
      %v473 = vpop.permute.xlu0 %472
      %474 = vrot.lane.b32.xlu0 %v293, 96
      %v475 = vpop.permute.xlu0 %474
      %476 = vrot.lane.b32.xlu0 %v294, 96
      %v477 = vpop.permute.xlu0 %476
      %478 = vrot.lane.b32.xlu0 %v295, 96
      %v479 = vpop.permute.xlu0 %478
      %vm480 = vcmask 785408
      %v481 = vsel %vm480, %v465, %v467
      %v482 = vsel %vm480, %v467, %v469
      %v483 = vsel %vm480, %v469, %v471
      %v484 = vsel %vm480, %v471, %v473
      %v485 = vsel %vm480, %v473, %v475
      %v486 = vsel %vm480, %v475, %v477
      %v487 = vsel %vm480, %v477, %v479
      %495 = vst [vmem:[#allocation2 + $0x118] sm:$0xff] %v481
      %496 = vst [vmem:[#allocation2 + $0x120] sm:$0xff] %v482
      %497 = vst [vmem:[#allocation2 + $0x128] sm:$0xff] %v483
      %498 = vst [vmem:[#allocation2 + $0x130] sm:$0xff] %v484
      %499 = vst [vmem:[#allocation2 + $0x138] sm:$0xff] %v485
      %500 = vst [vmem:[#allocation2 + $0x140] sm:$0xff] %v486
      %501 = vst [vmem:[#allocation2 + $0x148] sm:$0xff] %v487
      %502 = vrot.lane.b32.xlu0 %v288, 95
      %v503 = vpop.permute.xlu0 %502
      %504 = vrot.lane.b32.xlu0 %v289, 95
      %v505 = vpop.permute.xlu0 %504
      %506 = vrot.lane.b32.xlu0 %v290, 95
      %v507 = vpop.permute.xlu0 %506
      %508 = vrot.lane.b32.xlu0 %v291, 95
      %v509 = vpop.permute.xlu0 %508
      %510 = vrot.lane.b32.xlu0 %v292, 95
      %v511 = vpop.permute.xlu0 %510
      %512 = vrot.lane.b32.xlu0 %v293, 95
      %v513 = vpop.permute.xlu0 %512
      %514 = vrot.lane.b32.xlu0 %v294, 95
      %v515 = vpop.permute.xlu0 %514
      %516 = vrot.lane.b32.xlu0 %v295, 95
      %v517 = vpop.permute.xlu0 %516
      %vm518 = vcmask 777216
      %v519 = vsel %vm518, %v503, %v505
      %v520 = vsel %vm518, %v505, %v507
      %v521 = vsel %vm518, %v507, %v509
      %v522 = vsel %vm518, %v509, %v511
      %v523 = vsel %vm518, %v511, %v513
      %v524 = vsel %vm518, %v513, %v515
      %v525 = vsel %vm518, %v515, %v517
      %533 = vst [vmem:[#allocation2 + $0x150] sm:$0xff] %v519
      %534 = vst [vmem:[#allocation2 + $0x158] sm:$0xff] %v520
      %535 = vst [vmem:[#allocation2 + $0x160] sm:$0xff] %v521
      %536 = vst [vmem:[#allocation2 + $0x168] sm:$0xff] %v522
      %537 = vst [vmem:[#allocation2 + $0x170] sm:$0xff] %v523
      %538 = vst [vmem:[#allocation2 + $0x178] sm:$0xff] %v524
      %539 = vst [vmem:[#allocation2 + $0x180] sm:$0xff] %v525
      %540 = vrot.lane.b32.xlu0 %v288, 94
      %v541 = vpop.permute.xlu0 %540
      %542 = vrot.lane.b32.xlu0 %v289, 94
      %v543 = vpop.permute.xlu0 %542
      %544 = vrot.lane.b32.xlu0 %v290, 94
      %v545 = vpop.permute.xlu0 %544
      %546 = vrot.lane.b32.xlu0 %v291, 94
      %v547 = vpop.permute.xlu0 %546
      %548 = vrot.lane.b32.xlu0 %v292, 94
      %v549 = vpop.permute.xlu0 %548
      %550 = vrot.lane.b32.xlu0 %v293, 94
      %v551 = vpop.permute.xlu0 %550
      %552 = vrot.lane.b32.xlu0 %v294, 94
      %v553 = vpop.permute.xlu0 %552
      %554 = vrot.lane.b32.xlu0 %v295, 94
      %v555 = vpop.permute.xlu0 %554
      %vm556 = vcmask 769024
      %v557 = vsel %vm556, %v541, %v543
      %v558 = vsel %vm556, %v543, %v545
      %v559 = vsel %vm556, %v545, %v547
      %v560 = vsel %vm556, %v547, %v549
      %v561 = vsel %vm556, %v549, %v551
      %v562 = vsel %vm556, %v551, %v553
      %v563 = vsel %vm556, %v553, %v555
      %571 = vst [vmem:[#allocation2 + $0x188] sm:$0xff] %v557
      %572 = vst [vmem:[#allocation2 + $0x190] sm:$0xff] %v558
      %573 = vst [vmem:[#allocation2 + $0x198] sm:$0xff] %v559
      %574 = vst [vmem:[#allocation2 + $0x1a0] sm:$0xff] %v560
      %575 = vst [vmem:[#allocation2 + $0x1a8] sm:$0xff] %v561
      %576 = vst [vmem:[#allocation2 + $0x1b0] sm:$0xff] %v562
      %577 = vst [vmem:[#allocation2 + $0x1b8] sm:$0xff] %v563
      %578 = vrot.lane.b32.xlu0 %v288, 93
      %v579 = vpop.permute.xlu0 %578
      %580 = vrot.lane.b32.xlu0 %v289, 93
      %v581 = vpop.permute.xlu0 %580
      %582 = vrot.lane.b32.xlu0 %v290, 93
      %v583 = vpop.permute.xlu0 %582
      %584 = vrot.lane.b32.xlu0 %v291, 93
      %v585 = vpop.permute.xlu0 %584
      %586 = vrot.lane.b32.xlu0 %v292, 93
      %v587 = vpop.permute.xlu0 %586
      %588 = vrot.lane.b32.xlu0 %v293, 93
      %v589 = vpop.permute.xlu0 %588
      %590 = vrot.lane.b32.xlu0 %v294, 93
      %v591 = vpop.permute.xlu0 %590
      %592 = vrot.lane.b32.xlu0 %v295, 93
      %v593 = vpop.permute.xlu0 %592
      %vm594 = vcmask 760832
      %v595 = vsel %vm594, %v579, %v581
      %v596 = vsel %vm594, %v581, %v583
      %v597 = vsel %vm594, %v583, %v585
      %v598 = vsel %vm594, %v585, %v587
      %v599 = vsel %vm594, %v587, %v589
      %v600 = vsel %vm594, %v589, %v591
      %v601 = vsel %vm594, %v591, %v593
      %609 = vst [vmem:[#allocation2 + $0x1c0] sm:$0xff] %v595
      %610 = vst [vmem:[#allocation2 + $0x1c8] sm:$0xff] %v596
      %611 = vst [vmem:[#allocation2 + $0x1d0] sm:$0xff] %v597
      %612 = vst [vmem:[#allocation2 + $0x1d8] sm:$0xff] %v598
      %613 = vst [vmem:[#allocation2 + $0x1e0] sm:$0xff] %v599
      %614 = vst [vmem:[#allocation2 + $0x1e8] sm:$0xff] %v600
      %615 = vst [vmem:[#allocation2 + $0x1f0] sm:$0xff] %v601
      %616 = vrot.lane.b32.xlu0 %v288, 92
      %v617 = vpop.permute.xlu0 %616
      %618 = vrot.lane.b32.xlu0 %v289, 92
      %v619 = vpop.permute.xlu0 %618
      %620 = vrot.lane.b32.xlu0 %v290, 92
      %v621 = vpop.permute.xlu0 %620
      %622 = vrot.lane.b32.xlu0 %v291, 92
      %v623 = vpop.permute.xlu0 %622
      %624 = vrot.lane.b32.xlu0 %v292, 92
      %v625 = vpop.permute.xlu0 %624
      %626 = vrot.lane.b32.xlu0 %v293, 92
      %v627 = vpop.permute.xlu0 %626
      %628 = vrot.lane.b32.xlu0 %v294, 92
      %v629 = vpop.permute.xlu0 %628
      %630 = vrot.lane.b32.xlu0 %v295, 92
      %v631 = vpop.permute.xlu0 %630
      %vm632 = vcmask 752640
      %v633 = vsel %vm632, %v617, %v619
      %v634 = vsel %vm632, %v619, %v621
      %v635 = vsel %vm632, %v621, %v623
      %v636 = vsel %vm632, %v623, %v625
      %v637 = vsel %vm632, %v625, %v627
      %v638 = vsel %vm632, %v627, %v629
      %v639 = vsel %vm632, %v629, %v631
      %647 = vst [vmem:[#allocation2 + $0x1f8] sm:$0xff] %v633
      %648 = vst [vmem:[#allocation2 + $0x200] sm:$0xff] %v634
      %649 = vst [vmem:[#allocation2 + $0x208] sm:$0xff] %v635
      %650 = vst [vmem:[#allocation2 + $0x210] sm:$0xff] %v636
      %651 = vst [vmem:[#allocation2 + $0x218] sm:$0xff] %v637
      %652 = vst [vmem:[#allocation2 + $0x220] sm:$0xff] %v638
      %653 = vst [vmem:[#allocation2 + $0x228] sm:$0xff] %v639
      %654 = vrot.lane.b32.xlu0 %v288, 64
      %v655 = vpop.permute.xlu0 %654
      %656 = vrot.lane.b32.xlu0 %v289, 64
      %v657 = vpop.permute.xlu0 %656
      %658 = vrot.lane.b32.xlu0 %v290, 64
      %v659 = vpop.permute.xlu0 %658
      %660 = vrot.lane.b32.xlu0 %v291, 64
      %v661 = vpop.permute.xlu0 %660
      %662 = vrot.lane.b32.xlu0 %v292, 64
      %v663 = vpop.permute.xlu0 %662
      %664 = vrot.lane.b32.xlu0 %v293, 64
      %v665 = vpop.permute.xlu0 %664
      %666 = vrot.lane.b32.xlu0 %v294, 64
      %v667 = vpop.permute.xlu0 %666
      %668 = vrot.lane.b32.xlu0 %v295, 64
      %v669 = vpop.permute.xlu0 %668
      %vm670 = vcmask 523264
      %v671 = vsel %vm670, %v655, %v657
      %v672 = vsel %vm670, %v657, %v659
      %v673 = vsel %vm670, %v659, %v661
      %v674 = vsel %vm670, %v661, %v663
      %v675 = vsel %vm670, %v663, %v665
      %v676 = vsel %vm670, %v665, %v667
      %v677 = vsel %vm670, %v667, %v669
      %685 = vst [vmem:[#allocation2 + $0x230] sm:$0xff] %v671
      %686 = vst [vmem:[#allocation2 + $0x238] sm:$0xff] %v672
      %687 = vst [vmem:[#allocation2 + $0x240] sm:$0xff] %v673
      %688 = vst [vmem:[#allocation2 + $0x248] sm:$0xff] %v674
      %689 = vst [vmem:[#allocation2 + $0x250] sm:$0xff] %v675
      %690 = vst [vmem:[#allocation2 + $0x258] sm:$0xff] %v676
      %691 = vst [vmem:[#allocation2 + $0x260] sm:$0xff] %v677
      %692 = vrot.lane.b32.xlu0 %v288, 63
      %v693 = vpop.permute.xlu0 %692
      %694 = vrot.lane.b32.xlu0 %v289, 63
      %v695 = vpop.permute.xlu0 %694
      %696 = vrot.lane.b32.xlu0 %v290, 63
      %v697 = vpop.permute.xlu0 %696
      %698 = vrot.lane.b32.xlu0 %v291, 63
      %v699 = vpop.permute.xlu0 %698
      %700 = vrot.lane.b32.xlu0 %v292, 63
      %v701 = vpop.permute.xlu0 %700
      %702 = vrot.lane.b32.xlu0 %v293, 63
      %v703 = vpop.permute.xlu0 %702
      %704 = vrot.lane.b32.xlu0 %v294, 63
      %v705 = vpop.permute.xlu0 %704
      %706 = vrot.lane.b32.xlu0 %v295, 63
      %v707 = vpop.permute.xlu0 %706
      %vm708 = vcmask 515072
      %v709 = vsel %vm708, %v693, %v695
      %v710 = vsel %vm708, %v695, %v697
      %v711 = vsel %vm708, %v697, %v699
      %v712 = vsel %vm708, %v699, %v701
      %v713 = vsel %vm708, %v701, %v703
      %v714 = vsel %vm708, %v703, %v705
      %v715 = vsel %vm708, %v705, %v707
      %723 = vst [vmem:[#allocation2 + $0x268] sm:$0xff] %v709
      %724 = vst [vmem:[#allocation2 + $0x270] sm:$0xff] %v710
      %725 = vst [vmem:[#allocation2 + $0x278] sm:$0xff] %v711
      %726 = vst [vmem:[#allocation2 + $0x280] sm:$0xff] %v712
      %727 = vst [vmem:[#allocation2 + $0x288] sm:$0xff] %v713
      %728 = vst [vmem:[#allocation2 + $0x290] sm:$0xff] %v714
      %729 = vst [vmem:[#allocation2 + $0x298] sm:$0xff] %v715
      %730 = vrot.lane.b32.xlu0 %v288, 62
      %v731 = vpop.permute.xlu0 %730
      %732 = vrot.lane.b32.xlu0 %v289, 62
      %v733 = vpop.permute.xlu0 %732
      %734 = vrot.lane.b32.xlu0 %v290, 62
      %v735 = vpop.permute.xlu0 %734
      %736 = vrot.lane.b32.xlu0 %v291, 62
      %v737 = vpop.permute.xlu0 %736
      %738 = vrot.lane.b32.xlu0 %v292, 62
      %v739 = vpop.permute.xlu0 %738
      %740 = vrot.lane.b32.xlu0 %v293, 62
      %v741 = vpop.permute.xlu0 %740
      %742 = vrot.lane.b32.xlu0 %v294, 62
      %v743 = vpop.permute.xlu0 %742
      %744 = vrot.lane.b32.xlu0 %v295, 62
      %v745 = vpop.permute.xlu0 %744
      %vm746 = vcmask 506880
      %v747 = vsel %vm746, %v731, %v733
      %v748 = vsel %vm746, %v733, %v735
      %v749 = vsel %vm746, %v735, %v737
      %v750 = vsel %vm746, %v737, %v739
      %v751 = vsel %vm746, %v739, %v741
      %v752 = vsel %vm746, %v741, %v743
      %v753 = vsel %vm746, %v743, %v745
      %761 = vst [vmem:[#allocation2 + $0x2a0] sm:$0xff] %v747
      %762 = vst [vmem:[#allocation2 + $0x2a8] sm:$0xff] %v748
      %763 = vst [vmem:[#allocation2 + $0x2b0] sm:$0xff] %v749
      %764 = vst [vmem:[#allocation2 + $0x2b8] sm:$0xff] %v750
      %765 = vst [vmem:[#allocation2 + $0x2c0] sm:$0xff] %v751
      %766 = vst [vmem:[#allocation2 + $0x2c8] sm:$0xff] %v752
      %767 = vst [vmem:[#allocation2 + $0x2d0] sm:$0xff] %v753
      %768 = vrot.lane.b32.xlu0 %v288, 61
      %v769 = vpop.permute.xlu0 %768
      %770 = vrot.lane.b32.xlu0 %v289, 61
      %v771 = vpop.permute.xlu0 %770
      %772 = vrot.lane.b32.xlu0 %v290, 61
      %v773 = vpop.permute.xlu0 %772
      %774 = vrot.lane.b32.xlu0 %v291, 61
      %v775 = vpop.permute.xlu0 %774
      %776 = vrot.lane.b32.xlu0 %v292, 61
      %v777 = vpop.permute.xlu0 %776
      %778 = vrot.lane.b32.xlu0 %v293, 61
      %v779 = vpop.permute.xlu0 %778
      %780 = vrot.lane.b32.xlu0 %v294, 61
      %v781 = vpop.permute.xlu0 %780
      %782 = vrot.lane.b32.xlu0 %v295, 61
      %v783 = vpop.permute.xlu0 %782
      %vm784 = vcmask 498688
      %v785 = vsel %vm784, %v769, %v771
      %v786 = vsel %vm784, %v771, %v773
      %v787 = vsel %vm784, %v773, %v775
      %v788 = vsel %vm784, %v775, %v777
      %v789 = vsel %vm784, %v777, %v779
      %v790 = vsel %vm784, %v779, %v781
      %v791 = vsel %vm784, %v781, %v783
      %799 = vst [vmem:[#allocation2 + $0x2d8] sm:$0xff] %v785
      %800 = vst [vmem:[#allocation2 + $0x2e0] sm:$0xff] %v786
      %801 = vst [vmem:[#allocation2 + $0x2e8] sm:$0xff] %v787
      %802 = vst [vmem:[#allocation2 + $0x2f0] sm:$0xff] %v788
      %803 = vst [vmem:[#allocation2 + $0x2f8] sm:$0xff] %v789
      %804 = vst [vmem:[#allocation2 + $0x300] sm:$0xff] %v790
      %805 = vst [vmem:[#allocation2 + $0x308] sm:$0xff] %v791
      %806 = vrot.lane.b32.xlu0 %v288, 60
      %v807 = vpop.permute.xlu0 %806
      %808 = vrot.lane.b32.xlu0 %v289, 60
      %v809 = vpop.permute.xlu0 %808
      %810 = vrot.lane.b32.xlu0 %v290, 60
      %v811 = vpop.permute.xlu0 %810
      %812 = vrot.lane.b32.xlu0 %v291, 60
      %v813 = vpop.permute.xlu0 %812
      %814 = vrot.lane.b32.xlu0 %v292, 60
      %v815 = vpop.permute.xlu0 %814
      %816 = vrot.lane.b32.xlu0 %v293, 60
      %v817 = vpop.permute.xlu0 %816
      %818 = vrot.lane.b32.xlu0 %v294, 60
      %v819 = vpop.permute.xlu0 %818
      %820 = vrot.lane.b32.xlu0 %v295, 60
      %v821 = vpop.permute.xlu0 %820
      %vm822 = vcmask 490496
      %v823 = vsel %vm822, %v807, %v809
      %v824 = vsel %vm822, %v809, %v811
      %v825 = vsel %vm822, %v811, %v813
      %v826 = vsel %vm822, %v813, %v815
      %v827 = vsel %vm822, %v815, %v817
      %v828 = vsel %vm822, %v817, %v819
      %v829 = vsel %vm822, %v819, %v821
      %837 = vst [vmem:[#allocation2 + $0x310] sm:$0xff] %v823
      %838 = vst [vmem:[#allocation2 + $0x318] sm:$0xff] %v824
      %839 = vst [vmem:[#allocation2 + $0x320] sm:$0xff] %v825
      %840 = vst [vmem:[#allocation2 + $0x328] sm:$0xff] %v826
      %841 = vst [vmem:[#allocation2 + $0x330] sm:$0xff] %v827
      %842 = vst [vmem:[#allocation2 + $0x338] sm:$0xff] %v828
      %843 = vst [vmem:[#allocation2 + $0x340] sm:$0xff] %v829
      %844 = vrot.lane.b32.xlu0 %v288, 32
      %v845 = vpop.permute.xlu0 %844
      %846 = vrot.lane.b32.xlu0 %v289, 32
      %v847 = vpop.permute.xlu0 %846
      %848 = vrot.lane.b32.xlu0 %v290, 32
      %v849 = vpop.permute.xlu0 %848
      %850 = vrot.lane.b32.xlu0 %v291, 32
      %v851 = vpop.permute.xlu0 %850
      %852 = vrot.lane.b32.xlu0 %v292, 32
      %v853 = vpop.permute.xlu0 %852
      %854 = vrot.lane.b32.xlu0 %v293, 32
      %v855 = vpop.permute.xlu0 %854
      %856 = vrot.lane.b32.xlu0 %v294, 32
      %v857 = vpop.permute.xlu0 %856
      %858 = vrot.lane.b32.xlu0 %v295, 32
      %v859 = vpop.permute.xlu0 %858
      %vm860 = vcmask 261120
      %v861 = vsel %vm860, %v845, %v847
      %v862 = vsel %vm860, %v847, %v849
      %v863 = vsel %vm860, %v849, %v851
      %v864 = vsel %vm860, %v851, %v853
      %v865 = vsel %vm860, %v853, %v855
      %v866 = vsel %vm860, %v855, %v857
      %v867 = vsel %vm860, %v857, %v859
      %875 = vst [vmem:[#allocation2 + $0x348] sm:$0xff] %v861
      %876 = vst [vmem:[#allocation2 + $0x350] sm:$0xff] %v862
      %877 = vst [vmem:[#allocation2 + $0x358] sm:$0xff] %v863
      %878 = vst [vmem:[#allocation2 + $0x360] sm:$0xff] %v864
      %879 = vst [vmem:[#allocation2 + $0x368] sm:$0xff] %v865
      %880 = vst [vmem:[#allocation2 + $0x370] sm:$0xff] %v866
      %881 = vst [vmem:[#allocation2 + $0x378] sm:$0xff] %v867
      %882 = vrot.lane.b32.xlu0 %v288, 31
      %v883 = vpop.permute.xlu0 %882
      %884 = vrot.lane.b32.xlu0 %v289, 31
      %v885 = vpop.permute.xlu0 %884
      %886 = vrot.lane.b32.xlu0 %v290, 31
      %v887 = vpop.permute.xlu0 %886
      %888 = vrot.lane.b32.xlu0 %v291, 31
      %v889 = vpop.permute.xlu0 %888
      %890 = vrot.lane.b32.xlu0 %v292, 31
      %v891 = vpop.permute.xlu0 %890
      %892 = vrot.lane.b32.xlu0 %v293, 31
      %v893 = vpop.permute.xlu0 %892
      %894 = vrot.lane.b32.xlu0 %v294, 31
      %v895 = vpop.permute.xlu0 %894
      %896 = vrot.lane.b32.xlu0 %v295, 31
      %v897 = vpop.permute.xlu0 %896
      %vm898 = vcmask 252928
      %v899 = vsel %vm898, %v883, %v885
      %v900 = vsel %vm898, %v885, %v887
      %v901 = vsel %vm898, %v887, %v889
      %v902 = vsel %vm898, %v889, %v891
      %v903 = vsel %vm898, %v891, %v893
      %v904 = vsel %vm898, %v893, %v895
      %v905 = vsel %vm898, %v895, %v897
      %913 = vst [vmem:[#allocation2 + $0x380] sm:$0xff] %v899
      %914 = vst [vmem:[#allocation2 + $0x388] sm:$0xff] %v900
      %915 = vst [vmem:[#allocation2 + $0x390] sm:$0xff] %v901
      %916 = vst [vmem:[#allocation2 + $0x398] sm:$0xff] %v902
      %917 = vst [vmem:[#allocation2 + $0x3a0] sm:$0xff] %v903
      %918 = vst [vmem:[#allocation2 + $0x3a8] sm:$0xff] %v904
      %919 = vst [vmem:[#allocation2 + $0x3b0] sm:$0xff] %v905
      %920 = vrot.lane.b32.xlu0 %v288, 30
      %v921 = vpop.permute.xlu0 %920
      %922 = vrot.lane.b32.xlu0 %v289, 30
      %v923 = vpop.permute.xlu0 %922
      %924 = vrot.lane.b32.xlu0 %v290, 30
      %v925 = vpop.permute.xlu0 %924
      %926 = vrot.lane.b32.xlu0 %v291, 30
      %v927 = vpop.permute.xlu0 %926
      %928 = vrot.lane.b32.xlu0 %v292, 30
      %v929 = vpop.permute.xlu0 %928
      %930 = vrot.lane.b32.xlu0 %v293, 30
      %v931 = vpop.permute.xlu0 %930
      %932 = vrot.lane.b32.xlu0 %v294, 30
      %v933 = vpop.permute.xlu0 %932
      %934 = vrot.lane.b32.xlu0 %v295, 30
      %v935 = vpop.permute.xlu0 %934
      %vm936 = vcmask 244736
      %v937 = vsel %vm936, %v921, %v923
      %v938 = vsel %vm936, %v923, %v925
      %v939 = vsel %vm936, %v925, %v927
      %v940 = vsel %vm936, %v927, %v929
      %v941 = vsel %vm936, %v929, %v931
      %v942 = vsel %vm936, %v931, %v933
      %v943 = vsel %vm936, %v933, %v935
      %951 = vst [vmem:[#allocation2 + $0x3b8] sm:$0xff] %v937
      %952 = vst [vmem:[#allocation2 + $0x3c0] sm:$0xff] %v938
      %953 = vst [vmem:[#allocation2 + $0x3c8] sm:$0xff] %v939
      %954 = vst [vmem:[#allocation2 + $0x3d0] sm:$0xff] %v940
      %955 = vst [vmem:[#allocation2 + $0x3d8] sm:$0xff] %v941
      %956 = vst [vmem:[#allocation2 + $0x3e0] sm:$0xff] %v942
      %957 = vst [vmem:[#allocation2 + $0x3e8] sm:$0xff] %v943
      %958 = vrot.lane.b32.xlu0 %v288, 29
      %v959 = vpop.permute.xlu0 %958
      %960 = vrot.lane.b32.xlu0 %v289, 29
      %v961 = vpop.permute.xlu0 %960
      %962 = vrot.lane.b32.xlu0 %v290, 29
      %v963 = vpop.permute.xlu0 %962
      %964 = vrot.lane.b32.xlu0 %v291, 29
      %v965 = vpop.permute.xlu0 %964
      %966 = vrot.lane.b32.xlu0 %v292, 29
      %v967 = vpop.permute.xlu0 %966
      %968 = vrot.lane.b32.xlu0 %v293, 29
      %v969 = vpop.permute.xlu0 %968
      %970 = vrot.lane.b32.xlu0 %v294, 29
      %v971 = vpop.permute.xlu0 %970
      %972 = vrot.lane.b32.xlu0 %v295, 29
      %v973 = vpop.permute.xlu0 %972
      %vm974 = vcmask 236544
      %v975 = vsel %vm974, %v959, %v961
      %v976 = vsel %vm974, %v961, %v963
      %v977 = vsel %vm974, %v963, %v965
      %v978 = vsel %vm974, %v965, %v967
      %v979 = vsel %vm974, %v967, %v969
      %v980 = vsel %vm974, %v969, %v971
      %v981 = vsel %vm974, %v971, %v973
      %989 = vst [vmem:[#allocation2 + $0x3f0] sm:$0xff] %v975
      %990 = vst [vmem:[#allocation2 + $0x3f8] sm:$0xff] %v976
      %991 = vst [vmem:[#allocation2 + $0x400] sm:$0xff] %v977
      %992 = vst [vmem:[#allocation2 + $0x408] sm:$0xff] %v978
      %993 = vst [vmem:[#allocation2 + $0x410] sm:$0xff] %v979
      %994 = vst [vmem:[#allocation2 + $0x418] sm:$0xff] %v980
      %995 = vst [vmem:[#allocation2 + $0x420] sm:$0xff] %v981
      %996 = vrot.lane.b32.xlu0 %v288, 28
      %v997 = vpop.permute.xlu0 %996
      %998 = vrot.lane.b32.xlu0 %v289, 28
      %v999 = vpop.permute.xlu0 %998
      %1000 = vrot.lane.b32.xlu0 %v290, 28
      %v1001 = vpop.permute.xlu0 %1000
      %1002 = vrot.lane.b32.xlu0 %v291, 28
      %v1003 = vpop.permute.xlu0 %1002
      %1004 = vrot.lane.b32.xlu0 %v292, 28
      %v1005 = vpop.permute.xlu0 %1004
      %1006 = vrot.lane.b32.xlu0 %v293, 28
      %v1007 = vpop.permute.xlu0 %1006
      %1008 = vrot.lane.b32.xlu0 %v294, 28
      %v1009 = vpop.permute.xlu0 %1008
      %1010 = vrot.lane.b32.xlu0 %v295, 28
      %v1011 = vpop.permute.xlu0 %1010
      %vm1012 = vcmask 228352
      %v1013 = vsel %vm1012, %v997, %v999
      %v1014 = vsel %vm1012, %v999, %v1001
      %v1015 = vsel %vm1012, %v1001, %v1003
      %v1016 = vsel %vm1012, %v1003, %v1005
      %v1017 = vsel %vm1012, %v1005, %v1007
      %v1018 = vsel %vm1012, %v1007, %v1009
      %v1019 = vsel %vm1012, %v1009, %v1011
      %1027 = vst [vmem:[#allocation2 + $0x428] sm:$0xff] %v1013
      %1028 = vst [vmem:[#allocation2 + $0x430] sm:$0xff] %v1014
      %1029 = vst [vmem:[#allocation2 + $0x438] sm:$0xff] %v1015
      %1030 = vst [vmem:[#allocation2 + $0x440] sm:$0xff] %v1016
      %1031 = vst [vmem:[#allocation2 + $0x448] sm:$0xff] %v1017
      %1032 = vst [vmem:[#allocation2 + $0x450] sm:$0xff] %v1018
      %1033 = vst [vmem:[#allocation2 + $0x458] sm:$0xff] %v1019
      %1034 = vst [vmem:[#allocation2 + $0x460] sm:$0xff] %v289
      %1035 = vst [vmem:[#allocation2 + $0x468] sm:$0xff] %v290
      %1036 = vst [vmem:[#allocation2 + $0x470] sm:$0xff] %v291
      %1037 = vst [vmem:[#allocation2 + $0x478] sm:$0xff] %v292
      %1038 = vst [vmem:[#allocation2 + $0x480] sm:$0xff] %v293
      %1039 = vst [vmem:[#allocation2 + $0x488] sm:$0xff] %v294
      %1040 = vst [vmem:[#allocation2 + $0x490] sm:$0xff] %v295
      %1042 = vrot.lane.b32.xlu0 %v296, 127
      %v1043 = vpop.permute.xlu0 %1042
      %v1044 = vsel %vm328, %v327, %v1043
      %1046 = vst [vmem:[#allocation2 + $0x498] sm:$0xff] %v330
      %1047 = vst [vmem:[#allocation2 + $0x4a0] sm:$0xff] %v331
      %1048 = vst [vmem:[#allocation2 + $0x4a8] sm:$0xff] %v332
      %1049 = vst [vmem:[#allocation2 + $0x4b0] sm:$0xff] %v333
      %1050 = vst [vmem:[#allocation2 + $0x4b8] sm:$0xff] %v334
      %1051 = vst [vmem:[#allocation2 + $0x4c0] sm:$0xff] %v335
      %1052 = vst [vmem:[#allocation2 + $0x4c8] sm:$0xff] %v1044
      %1053 = vrot.lane.b32.xlu0 %v296, 126
      %v1054 = vpop.permute.xlu0 %1053
      %v1055 = vsel %vm366, %v365, %v1054
      %1057 = vst [vmem:[#allocation2 + $0x4d0] sm:$0xff] %v368
      %1058 = vst [vmem:[#allocation2 + $0x4d8] sm:$0xff] %v369
      %1059 = vst [vmem:[#allocation2 + $0x4e0] sm:$0xff] %v370
      %1060 = vst [vmem:[#allocation2 + $0x4e8] sm:$0xff] %v371
      %1061 = vst [vmem:[#allocation2 + $0x4f0] sm:$0xff] %v372
      %1062 = vst [vmem:[#allocation2 + $0x4f8] sm:$0xff] %v373
      %1063 = vst [vmem:[#allocation2 + $0x500] sm:$0xff] %v1055
      %1064 = vrot.lane.b32.xlu0 %v296, 125
      %v1065 = vpop.permute.xlu0 %1064
      %v1066 = vsel %vm404, %v403, %v1065
      %1068 = vst [vmem:[#allocation2 + $0x508] sm:$0xff] %v406
      %1069 = vst [vmem:[#allocation2 + $0x510] sm:$0xff] %v407
      %1070 = vst [vmem:[#allocation2 + $0x518] sm:$0xff] %v408
      %1071 = vst [vmem:[#allocation2 + $0x520] sm:$0xff] %v409
      %1072 = vst [vmem:[#allocation2 + $0x528] sm:$0xff] %v410
      %1073 = vst [vmem:[#allocation2 + $0x530] sm:$0xff] %v411
      %1074 = vst [vmem:[#allocation2 + $0x538] sm:$0xff] %v1066
      %1075 = vrot.lane.b32.xlu0 %v296, 124
      %v1076 = vpop.permute.xlu0 %1075
      %v1077 = vsel %vm442, %v441, %v1076
      %1079 = vst [vmem:[#allocation2 + $0x540] sm:$0xff] %v444
      %1080 = vst [vmem:[#allocation2 + $0x548] sm:$0xff] %v445
      %1081 = vst [vmem:[#allocation2 + $0x550] sm:$0xff] %v446
      %1082 = vst [vmem:[#allocation2 + $0x558] sm:$0xff] %v447
      %1083 = vst [vmem:[#allocation2 + $0x560] sm:$0xff] %v448
      %1084 = vst [vmem:[#allocation2 + $0x568] sm:$0xff] %v449
      %1085 = vst [vmem:[#allocation2 + $0x570] sm:$0xff] %v1077
      %v1086 = vld [vmem:[%s2] sm:$0xff]
      %v1087 = vld [vmem:[%s2 + $0x8] sm:$0xff]
      %v1088 = vld [vmem:[%s2 + $0x10] sm:$0xff]
      %v1089 = vld [vmem:[%s2 + $0x18] sm:$0xff]
      %v1090 = vld [vmem:[#allocation2] sm:$0xff]
      %v1091 = vld [vmem:[#allocation2 + $0x8] sm:$0xff]
      %v1092 = vld [vmem:[#allocation2 + $0x10] sm:$0xff]
      %v1093 = vld [vmem:[#allocation2 + $0x18] sm:$0xff]
      %v1094 = vld [vmem:[#allocation2 + $0x20] sm:$0xff]
      %v1095 = vld [vmem:[#allocation2 + $0x28] sm:$0xff]
      %v1096 = vld [vmem:[#allocation2 + $0x30] sm:$0xff]
      %v1097 = vld [vmem:[#allocation2 + $0x38] sm:$0xff]
      %v1098 = vld [vmem:[#allocation2 + $0x40] sm:$0xff]
      %v1099 = vld [vmem:[#allocation2 + $0x48] sm:$0xff]
      %v1100 = vld [vmem:[#allocation2 + $0x50] sm:$0xff]
      %v1101 = vld [vmem:[#allocation2 + $0x58] sm:$0xff]
      %v1102 = vld [vmem:[#allocation2 + $0x60] sm:$0xff]
      %v1103 = vld [vmem:[#allocation2 + $0x68] sm:$0xff]
      %v1104 = vld [vmem:[#allocation2 + $0x70] sm:$0xff]
      %v1105 = vld [vmem:[#allocation2 + $0x78] sm:$0xff]
      %v1106 = vld [vmem:[#allocation2 + $0x80] sm:$0xff]
      %v1107 = vld [vmem:[#allocation2 + $0x88] sm:$0xff]
      %v1108 = vld [vmem:[#allocation2 + $0x90] sm:$0xff]
      %v1109 = vld [vmem:[#allocation2 + $0x98] sm:$0xff]
      %v1110 = vld [vmem:[#allocation2 + $0xa0] sm:$0xff]
      %v1111 = vld [vmem:[#allocation2 + $0xa8] sm:$0xff]
      %v1112 = vld [vmem:[#allocation2 + $0xb0] sm:$0xff]
      %v1113 = vld [vmem:[#allocation2 + $0xb8] sm:$0xff]
      %v1114 = vld [vmem:[#allocation2 + $0xc0] sm:$0xff]
      %v1115 = vld [vmem:[#allocation2 + $0xc8] sm:$0xff]
      %v1116 = vld [vmem:[#allocation2 + $0xd0] sm:$0xff]
      %v1117 = vld [vmem:[#allocation2 + $0xd8] sm:$0xff]
      %v1118 = vld [vmem:[#allocation2 + $0xe0] sm:$0xff]
      %v1119 = vld [vmem:[#allocation2 + $0xe8] sm:$0xff]
      %v1120 = vld [vmem:[#allocation2 + $0xf0] sm:$0xff]
      %v1121 = vld [vmem:[#allocation2 + $0xf8] sm:$0xff]
      %v1122 = vld [vmem:[#allocation2 + $0x100] sm:$0xff]
      %v1123 = vld [vmem:[#allocation2 + $0x108] sm:$0xff]
      %v1124 = vld [vmem:[#allocation2 + $0x110] sm:$0xff]
      %v1125 = vld [vmem:[#allocation2 + $0x118] sm:$0xff]
      %v1126 = vld [vmem:[#allocation2 + $0x120] sm:$0xff]
      %v1127 = vld [vmem:[#allocation2 + $0x128] sm:$0xff]
      %v1128 = vld [vmem:[#allocation2 + $0x130] sm:$0xff]
      %v1129 = vld [vmem:[#allocation2 + $0x138] sm:$0xff]
      %v1130 = vld [vmem:[#allocation2 + $0x140] sm:$0xff]
      %v1131 = vld [vmem:[#allocation2 + $0x148] sm:$0xff]
      %v1132 = vld [vmem:[#allocation2 + $0x150] sm:$0xff]
      %v1133 = vld [vmem:[#allocation2 + $0x158] sm:$0xff]
      %v1134 = vld [vmem:[#allocation2 + $0x160] sm:$0xff]
      %v1135 = vld [vmem:[#allocation2 + $0x168] sm:$0xff]
      %v1136 = vld [vmem:[#allocation2 + $0x170] sm:$0xff]
      %v1137 = vld [vmem:[#allocation2 + $0x178] sm:$0xff]
      %v1138 = vld [vmem:[#allocation2 + $0x180] sm:$0xff]
      %v1139 = vld [vmem:[#allocation2 + $0x188] sm:$0xff]
      %v1140 = vld [vmem:[#allocation2 + $0x190] sm:$0xff]
      %v1141 = vld [vmem:[#allocation2 + $0x198] sm:$0xff]
      %v1142 = vld [vmem:[#allocation2 + $0x1a0] sm:$0xff]
      %v1143 = vld [vmem:[#allocation2 + $0x1a8] sm:$0xff]
      %v1144 = vld [vmem:[#allocation2 + $0x1b0] sm:$0xff]
      %v1145 = vld [vmem:[#allocation2 + $0x1b8] sm:$0xff]
      %v1146 = vld [vmem:[#allocation2 + $0x1c0] sm:$0xff]
      %v1147 = vld [vmem:[#allocation2 + $0x1c8] sm:$0xff]
      %v1148 = vld [vmem:[#allocation2 + $0x1d0] sm:$0xff]
      %v1149 = vld [vmem:[#allocation2 + $0x1d8] sm:$0xff]
      %v1150 = vld [vmem:[#allocation2 + $0x1e0] sm:$0xff]
      %v1151 = vld [vmem:[#allocation2 + $0x1e8] sm:$0xff]
      %v1152 = vld [vmem:[#allocation2 + $0x1f0] sm:$0xff]
      %v1153 = vld [vmem:[#allocation2 + $0x1f8] sm:$0xff]
      %v1154 = vld [vmem:[#allocation2 + $0x200] sm:$0xff]
      %v1155 = vld [vmem:[#allocation2 + $0x208] sm:$0xff]
      %v1156 = vld [vmem:[#allocation2 + $0x210] sm:$0xff]
      %v1157 = vld [vmem:[#allocation2 + $0x218] sm:$0xff]
      %v1158 = vld [vmem:[#allocation2 + $0x220] sm:$0xff]
      %v1159 = vld [vmem:[#allocation2 + $0x228] sm:$0xff]
      %v1160 = vld [vmem:[#allocation2 + $0x230] sm:$0xff]
      %v1161 = vld [vmem:[#allocation2 + $0x238] sm:$0xff]
      %v1162 = vld [vmem:[#allocation2 + $0x240] sm:$0xff]
      %v1163 = vld [vmem:[#allocation2 + $0x248] sm:$0xff]
      %v1164 = vld [vmem:[#allocation2 + $0x250] sm:$0xff]
      %v1165 = vld [vmem:[#allocation2 + $0x258] sm:$0xff]
      %v1166 = vld [vmem:[#allocation2 + $0x260] sm:$0xff]
      %v1167 = vld [vmem:[#allocation2 + $0x268] sm:$0xff]
      %v1168 = vld [vmem:[#allocation2 + $0x270] sm:$0xff]
      %v1169 = vld [vmem:[#allocation2 + $0x278] sm:$0xff]
      %v1170 = vld [vmem:[#allocation2 + $0x280] sm:$0xff]
      %v1171 = vld [vmem:[#allocation2 + $0x288] sm:$0xff]
      %v1172 = vld [vmem:[#allocation2 + $0x290] sm:$0xff]
      %v1173 = vld [vmem:[#allocation2 + $0x298] sm:$0xff]
      %v1174 = vld [vmem:[#allocation2 + $0x2a0] sm:$0xff]
      %v1175 = vld [vmem:[#allocation2 + $0x2a8] sm:$0xff]
      %v1176 = vld [vmem:[#allocation2 + $0x2b0] sm:$0xff]
      %v1177 = vld [vmem:[#allocation2 + $0x2b8] sm:$0xff]
      %v1178 = vld [vmem:[#allocation2 + $0x2c0] sm:$0xff]
      %v1179 = vld [vmem:[#allocation2 + $0x2c8] sm:$0xff]
      %v1180 = vld [vmem:[#allocation2 + $0x2d0] sm:$0xff]
      %v1181 = vld [vmem:[#allocation2 + $0x2d8] sm:$0xff]
      %v1182 = vld [vmem:[#allocation2 + $0x2e0] sm:$0xff]
      %v1183 = vld [vmem:[#allocation2 + $0x2e8] sm:$0xff]
      %v1184 = vld [vmem:[#allocation2 + $0x2f0] sm:$0xff]
      %v1185 = vld [vmem:[#allocation2 + $0x2f8] sm:$0xff]
      %v1186 = vld [vmem:[#allocation2 + $0x300] sm:$0xff]
      %v1187 = vld [vmem:[#allocation2 + $0x308] sm:$0xff]
      %v1188 = vld [vmem:[#allocation2 + $0x310] sm:$0xff]
      %v1189 = vld [vmem:[#allocation2 + $0x318] sm:$0xff]
      %v1190 = vld [vmem:[#allocation2 + $0x320] sm:$0xff]
      %v1191 = vld [vmem:[#allocation2 + $0x328] sm:$0xff]
      %v1192 = vld [vmem:[#allocation2 + $0x330] sm:$0xff]
      %v1193 = vld [vmem:[#allocation2 + $0x338] sm:$0xff]
      %v1194 = vld [vmem:[#allocation2 + $0x340] sm:$0xff]
      %v1195 = vld [vmem:[#allocation2 + $0x348] sm:$0xff]
      %v1196 = vld [vmem:[#allocation2 + $0x350] sm:$0xff]
      %v1197 = vld [vmem:[#allocation2 + $0x358] sm:$0xff]
      %v1198 = vld [vmem:[#allocation2 + $0x360] sm:$0xff]
      %v1199 = vld [vmem:[#allocation2 + $0x368] sm:$0xff]
      %v1200 = vld [vmem:[#allocation2 + $0x370] sm:$0xff]
      %v1201 = vld [vmem:[#allocation2 + $0x378] sm:$0xff]
      %v1202 = vld [vmem:[#allocation2 + $0x380] sm:$0xff]
      %v1203 = vld [vmem:[#allocation2 + $0x388] sm:$0xff]
      %v1204 = vld [vmem:[#allocation2 + $0x390] sm:$0xff]
      %v1205 = vld [vmem:[#allocation2 + $0x398] sm:$0xff]
      %v1206 = vld [vmem:[#allocation2 + $0x3a0] sm:$0xff]
      %v1207 = vld [vmem:[#allocation2 + $0x3a8] sm:$0xff]
      %v1208 = vld [vmem:[#allocation2 + $0x3b0] sm:$0xff]
      %v1209 = vld [vmem:[#allocation2 + $0x3b8] sm:$0xff]
      %v1210 = vld [vmem:[#allocation2 + $0x3c0] sm:$0xff]
      %v1211 = vld [vmem:[#allocation2 + $0x3c8] sm:$0xff]
      %v1212 = vld [vmem:[#allocation2 + $0x3d0] sm:$0xff]
      %v1213 = vld [vmem:[#allocation2 + $0x3d8] sm:$0xff]
      %v1214 = vld [vmem:[#allocation2 + $0x3e0] sm:$0xff]
      %v1215 = vld [vmem:[#allocation2 + $0x3e8] sm:$0xff]
      %v1216 = vld [vmem:[#allocation2 + $0x3f0] sm:$0xff]
      %v1217 = vld [vmem:[#allocation2 + $0x3f8] sm:$0xff]
      %v1218 = vld [vmem:[#allocation2 + $0x400] sm:$0xff]
      %v1219 = vld [vmem:[#allocation2 + $0x408] sm:$0xff]
      %v1220 = vld [vmem:[#allocation2 + $0x410] sm:$0xff]
      %v1221 = vld [vmem:[#allocation2 + $0x418] sm:$0xff]
      %v1222 = vld [vmem:[#allocation2 + $0x420] sm:$0xff]
      %v1223 = vld [vmem:[#allocation2 + $0x428] sm:$0xff]
      %v1224 = vld [vmem:[#allocation2 + $0x430] sm:$0xff]
      %v1225 = vld [vmem:[#allocation2 + $0x438] sm:$0xff]
      %v1226 = vld [vmem:[#allocation2 + $0x440] sm:$0xff]
      %v1227 = vld [vmem:[#allocation2 + $0x448] sm:$0xff]
      %v1228 = vld [vmem:[#allocation2 + $0x450] sm:$0xff]
      %v1229 = vld [vmem:[#allocation2 + $0x458] sm:$0xff]
      %v1230 = vld [vmem:[#allocation2 + $0x460] sm:$0xff]
      %v1231 = vld [vmem:[#allocation2 + $0x468] sm:$0xff]
      %v1232 = vld [vmem:[#allocation2 + $0x470] sm:$0xff]
      %v1233 = vld [vmem:[#allocation2 + $0x478] sm:$0xff]
      %v1234 = vld [vmem:[#allocation2 + $0x480] sm:$0xff]
      %v1235 = vld [vmem:[#allocation2 + $0x488] sm:$0xff]
      %v1236 = vld [vmem:[#allocation2 + $0x490] sm:$0xff]
      %v1237 = vld [vmem:[#allocation2 + $0x498] sm:$0xff]
      %v1238 = vld [vmem:[#allocation2 + $0x4a0] sm:$0xff]
      %v1239 = vld [vmem:[#allocation2 + $0x4a8] sm:$0xff]
      %v1240 = vld [vmem:[#allocation2 + $0x4b0] sm:$0xff]
      %v1241 = vld [vmem:[#allocation2 + $0x4b8] sm:$0xff]
      %v1242 = vld [vmem:[#allocation2 + $0x4c0] sm:$0xff]
      %v1243 = vld [vmem:[#allocation2 + $0x4c8] sm:$0xff]
      %v1244 = vld [vmem:[#allocation2 + $0x4d0] sm:$0xff]
      %v1245 = vld [vmem:[#allocation2 + $0x4d8] sm:$0xff]
      %v1246 = vld [vmem:[#allocation2 + $0x4e0] sm:$0xff]
      %v1247 = vld [vmem:[#allocation2 + $0x4e8] sm:$0xff]
      %v1248 = vld [vmem:[#allocation2 + $0x4f0] sm:$0xff]
      %v1249 = vld [vmem:[#allocation2 + $0x4f8] sm:$0xff]
      %v1250 = vld [vmem:[#allocation2 + $0x500] sm:$0xff]
      %v1251 = vld [vmem:[#allocation2 + $0x508] sm:$0xff]
      %v1252 = vld [vmem:[#allocation2 + $0x510] sm:$0xff]
      %v1253 = vld [vmem:[#allocation2 + $0x518] sm:$0xff]
      %v1254 = vld [vmem:[#allocation2 + $0x520] sm:$0xff]
      %v1255 = vld [vmem:[#allocation2 + $0x528] sm:$0xff]
      %v1256 = vld [vmem:[#allocation2 + $0x530] sm:$0xff]
      %v1257 = vld [vmem:[#allocation2 + $0x538] sm:$0xff]
      %v1258 = vld [vmem:[#allocation2 + $0x540] sm:$0xff]
      %v1259 = vld [vmem:[#allocation2 + $0x548] sm:$0xff]
      %v1260 = vld [vmem:[#allocation2 + $0x550] sm:$0xff]
      %v1261 = vld [vmem:[#allocation2 + $0x558] sm:$0xff]
      %v1262 = vld [vmem:[#allocation2 + $0x560] sm:$0xff]
      %v1263 = vld [vmem:[#allocation2 + $0x568] sm:$0xff]
      %v1264 = vld [vmem:[#allocation2 + $0x570] sm:$0xff]
      %v1265 = vld [vmem:[%s3] sm:$0xff]
      %v1266 = vld [vmem:[%s3 + $0x8] sm:$0xff]
      %1268 = vset.pattern.permute.xlu0 0
      %1269 = vperm.xlu0 %1268, %v1265
      %v1270 = vpop.permute.xlu0 %1269
      %1273 = vset.pattern.permute.xlu0 0
      %1274 = vperm.xlu0 %1273, %v1266
      %v1275 = vpop.permute.xlu0 %1274
      %v1281 = vunpack.c.l.b16 %v1086
      %v1282 = vunpack.c.h.b16 %v1086
      %v1283 = vunpack.c.l.b16 %v1087
      %v1284 = vunpack.c.h.b16 %v1087
      %v1285 = vunpack.c.l.b16 %v1088
      %v1286 = vunpack.c.h.b16 %v1088
      %v1287 = vunpack.c.l.b16 %v1089
      %v1288 = vunpack.c.h.b16 %v1089
      %v1289 = vpack.c.b16 %v1285, %v1281
      %v1290 = vpack.c.b16 %v1286, %v1282
      %v1291 = vpack.c.b16 %v1287, %v1283
      %v1292 = vpack.c.b16 %v1288, %v1284
      %vm1296 = vcmask 130048
      %v1298 = vsel %vm1296, %v1292, 0
      %1300 = vmatprep.subr.bf16.mxu0 %v1091
      %1301 = vmatpush1.bf16.msra.mxu0 %v1090
      %1302 = vmatprep.subr.bf16.mxu0 %v1098
      %1303 = vmatpush1.bf16.msra.mxu0 %v1097
      %1304 = vmatprep.subr.bf16.mxu0 %v1105
      %1305 = vmatpush1.bf16.msra.mxu0 %v1104
      %1306 = vmatprep.subr.bf16.mxu0 %v1112
      %1307 = vmatpush1.bf16.msra.mxu0 %v1111
      %1308 = vmatprep.subr.bf16.mxu0 %v1119
      %1309 = vmatpush1.bf16.msra.mxu0 %v1118
      %1310 = vmatprep.subr.bf16.mxu0 %v1126
      %1311 = vmatpush1.bf16.msra.mxu0 %v1125
      %1312 = vmatprep.subr.bf16.mxu0 %v1133
      %1313 = vmatpush1.bf16.msra.mxu0 %v1132
      %1314 = vmatprep.subr.bf16.mxu0 %v1140
      %1315 = vmatpush1.bf16.msra.mxu0 %v1139
      %1316 = vmatprep.subr.bf16.mxu0 %v1147
      %1317 = vmatpush1.bf16.msra.mxu0 %v1146
      %1318 = vmatprep.subr.bf16.mxu0 %v1154
      %1319 = vmatpush1.bf16.msra.mxu0 %v1153
      %1320 = vmatprep.subr.bf16.mxu0 %v1161
      %1321 = vmatpush1.bf16.msra.mxu0 %v1160
      %1322 = vmatprep.subr.bf16.mxu0 %v1168
      %1323 = vmatpush1.bf16.msra.mxu0 %v1167
      %1324 = vmatprep.subr.bf16.mxu0 %v1175
      %1325 = vmatpush1.bf16.msra.mxu0 %v1174
      %1326 = vmatprep.subr.bf16.mxu0 %v1182
      %1327 = vmatpush1.bf16.msra.mxu0 %v1181
      %1328 = vmatprep.subr.bf16.mxu0 %v1189
      %1329 = vmatpush1.bf16.msra.mxu0 %v1188
      %1330 = vmatprep.subr.bf16.mxu0 %v1196
      %1331 = vmatpush1.bf16.msra.mxu0 %v1195
      %1332 = vmatprep.mubr.bf16.mxu0 %v1290
      %1333 = vmatmul.mubr.bf16.gmra.mrb[0].mxu0 %v1289
      %v1334 = vpop.f32.mrb[0].mxu0
      %v1335 = vadd.f32 %v1270, %v1334
      %v1336 = vpop.f32.mrb[0].mxu0
      %v1337 = vadd.f32 %v1270, %v1336
      %v1338 = vpop.f32.mrb[0].mxu0
      %v1339 = vadd.f32 %v1275, %v1338
      %v1340 = vpop.f32.mrb[0].mxu0
      %v1341 = vadd.f32 %v1275, %v1340
      %1342 = vdwg.mxu0
      %1343 = vmatprep.subr.bf16.mxu0 %v1203
      %1344 = vmatpush1.bf16.msra.mxu0 %v1202
      %1345 = vmatprep.subr.bf16.mxu0 %v1210
      %1346 = vmatpush1.bf16.msra.mxu0 %v1209
      %1347 = vmatprep.subr.bf16.mxu0 %v1217
      %1348 = vmatpush1.bf16.msra.mxu0 %v1216
      %1349 = vmatprep.subr.bf16.mxu0 %v1224
      %1350 = vmatpush1.bf16.msra.mxu0 %v1223
      %1351 = vmatprep.subr.bf16.mxu0 %v1231
      %1352 = vmatpush1.bf16.msra.mxu0 %v1230
      %1353 = vmatprep.subr.bf16.mxu0 %v1238
      %1354 = vmatpush1.bf16.msra.mxu0 %v1237
      %1355 = vmatprep.subr.bf16.mxu0 %v1245
      %1356 = vmatpush1.bf16.msra.mxu0 %v1244
      %1357 = vmatprep.subr.bf16.mxu0 %v1252
      %1358 = vmatpush1.bf16.msra.mxu0 %v1251
      %1359 = vmatprep.subr.bf16.mxu0 %v1259
      %1360 = vmatpush1.bf16.msra.mxu0 %v1258
      %1361 = vmatprep.subr.bf16.mxu0 0
      %1362 = vmatpush1.bf16.msra.mxu0 0
      %1363 = vmatprep.subr.bf16.mxu0 0
      %1364 = vmatpush1.bf16.msra.mxu0 0
      %1365 = vmatprep.subr.bf16.mxu0 0
      %1366 = vmatpush1.bf16.msra.mxu0 0
      %1367 = vmatprep.subr.bf16.mxu0 0
      %1368 = vmatpush1.bf16.msra.mxu0 0
      %1369 = vmatprep.subr.bf16.mxu0 0
      %1370 = vmatpush1.bf16.msra.mxu0 0
      %1371 = vmatprep.subr.bf16.mxu0 0
      %1372 = vmatpush1.bf16.msra.mxu0 0
      %1373 = vmatprep.subr.bf16.mxu0 0
      %1374 = vmatpush1.bf16.msra.mxu0 0
      %1375 = vmatprep.mubr.bf16.mxu0 %v1298
      %1376 = vmatmul.mubr.bf16.gmra.mrb[0].mxu0 %v1291
      %v1377 = vpop.f32.mrb[0].mxu0
      %v1378 = vadd.f32 %v1335, %v1377
      %v1379 = vpop.f32.mrb[0].mxu0
      %v1380 = vadd.f32 %v1337, %v1379
      %v1381 = vpop.f32.mrb[0].mxu0
      %v1382 = vadd.f32 %v1339, %v1381
      %v1383 = vpop.f32.mrb[0].mxu0
      %v1384 = vadd.f32 %v1341, %v1383
      %1385 = vdwg.mxu0
      %1386 = vmatprep.subr.bf16.mxu0 %v1093
      %1387 = vmatpush1.bf16.msra.mxu0 %v1092
      %1388 = vmatprep.subr.bf16.mxu0 %v1100
      %1389 = vmatpush1.bf16.msra.mxu0 %v1099
      %1390 = vmatprep.subr.bf16.mxu0 %v1107
      %1391 = vmatpush1.bf16.msra.mxu0 %v1106
      %1392 = vmatprep.subr.bf16.mxu0 %v1114
      %1393 = vmatpush1.bf16.msra.mxu0 %v1113
      %1394 = vmatprep.subr.bf16.mxu0 %v1121
      %1395 = vmatpush1.bf16.msra.mxu0 %v1120
      %1396 = vmatprep.subr.bf16.mxu0 %v1128
      %1397 = vmatpush1.bf16.msra.mxu0 %v1127
      %1398 = vmatprep.subr.bf16.mxu0 %v1135
      %1399 = vmatpush1.bf16.msra.mxu0 %v1134
      %1400 = vmatprep.subr.bf16.mxu0 %v1142
      %1401 = vmatpush1.bf16.msra.mxu0 %v1141
      %1402 = vmatprep.subr.bf16.mxu0 %v1149
      %1403 = vmatpush1.bf16.msra.mxu0 %v1148
      %1404 = vmatprep.subr.bf16.mxu0 %v1156
      %1405 = vmatpush1.bf16.msra.mxu0 %v1155
      %1406 = vmatprep.subr.bf16.mxu0 %v1163
      %1407 = vmatpush1.bf16.msra.mxu0 %v1162
      %1408 = vmatprep.subr.bf16.mxu0 %v1170
      %1409 = vmatpush1.bf16.msra.mxu0 %v1169
      %1410 = vmatprep.subr.bf16.mxu0 %v1177
      %1411 = vmatpush1.bf16.msra.mxu0 %v1176
      %1412 = vmatprep.subr.bf16.mxu0 %v1184
      %1413 = vmatpush1.bf16.msra.mxu0 %v1183
      %1414 = vmatprep.subr.bf16.mxu0 %v1191
      %1415 = vmatpush1.bf16.msra.mxu0 %v1190
      %1416 = vmatprep.subr.bf16.mxu0 %v1198
      %1417 = vmatpush1.bf16.msra.mxu0 %v1197
      %1418 = vmatprep.mubr.bf16.mxu0 %v1290
      %1419 = vmatmul.mubr.bf16.gmra.mrb[0].mxu0 %v1289
      %v1420 = vpop.f32.mrb[0].mxu0
      %v1421 = vadd.f32 %v1270, %v1420
      %v1422 = vpop.f32.mrb[0].mxu0
      %v1423 = vadd.f32 %v1270, %v1422
      %v1424 = vpop.f32.mrb[0].mxu0
      %v1425 = vadd.f32 %v1275, %v1424
      %v1426 = vpop.f32.mrb[0].mxu0
      %v1427 = vadd.f32 %v1275, %v1426
      %1428 = vdwg.mxu0
      %1429 = vmatprep.subr.bf16.mxu0 %v1205
      %1430 = vmatpush1.bf16.msra.mxu0 %v1204
      %1431 = vmatprep.subr.bf16.mxu0 %v1212
      %1432 = vmatpush1.bf16.msra.mxu0 %v1211
      %1433 = vmatprep.subr.bf16.mxu0 %v1219
      %1434 = vmatpush1.bf16.msra.mxu0 %v1218
      %1435 = vmatprep.subr.bf16.mxu0 %v1226
      %1436 = vmatpush1.bf16.msra.mxu0 %v1225
      %1437 = vmatprep.subr.bf16.mxu0 %v1233
      %1438 = vmatpush1.bf16.msra.mxu0 %v1232
      %1439 = vmatprep.subr.bf16.mxu0 %v1240
      %1440 = vmatpush1.bf16.msra.mxu0 %v1239
      %1441 = vmatprep.subr.bf16.mxu0 %v1247
      %1442 = vmatpush1.bf16.msra.mxu0 %v1246
      %1443 = vmatprep.subr.bf16.mxu0 %v1254
      %1444 = vmatpush1.bf16.msra.mxu0 %v1253
      %1445 = vmatprep.subr.bf16.mxu0 %v1261
      %1446 = vmatpush1.bf16.msra.mxu0 %v1260
      %1447 = vmatprep.subr.bf16.mxu0 0
      %1448 = vmatpush1.bf16.msra.mxu0 0
      %1449 = vmatprep.subr.bf16.mxu0 0
      %1450 = vmatpush1.bf16.msra.mxu0 0
      %1451 = vmatprep.subr.bf16.mxu0 0
      %1452 = vmatpush1.bf16.msra.mxu0 0
      %1453 = vmatprep.subr.bf16.mxu0 0
      %1454 = vmatpush1.bf16.msra.mxu0 0
      %1455 = vmatprep.subr.bf16.mxu0 0
      %1456 = vmatpush1.bf16.msra.mxu0 0
      %1457 = vmatprep.subr.bf16.mxu0 0
      %1458 = vmatpush1.bf16.msra.mxu0 0
      %1459 = vmatprep.subr.bf16.mxu0 0
      %1460 = vmatpush1.bf16.msra.mxu0 0
      %1461 = vmatprep.mubr.bf16.mxu0 %v1298
      %1462 = vmatmul.mubr.bf16.gmra.mrb[0].mxu0 %v1291
      %v1463 = vpop.f32.mrb[0].mxu0
      %v1464 = vadd.f32 %v1421, %v1463
      %v1465 = vpop.f32.mrb[0].mxu0
      %v1466 = vadd.f32 %v1423, %v1465
      %v1467 = vpop.f32.mrb[0].mxu0
      %v1468 = vadd.f32 %v1425, %v1467
      %v1469 = vpop.f32.mrb[0].mxu0
      %v1470 = vadd.f32 %v1427, %v1469
      %1471 = vdwg.mxu0
      %1472 = vmatprep.subr.bf16.mxu0 %v1095
      %1473 = vmatpush1.bf16.msra.mxu0 %v1094
      %1474 = vmatprep.subr.bf16.mxu0 %v1102
      %1475 = vmatpush1.bf16.msra.mxu0 %v1101
      %1476 = vmatprep.subr.bf16.mxu0 %v1109
      %1477 = vmatpush1.bf16.msra.mxu0 %v1108
      %1478 = vmatprep.subr.bf16.mxu0 %v1116
      %1479 = vmatpush1.bf16.msra.mxu0 %v1115
      %1480 = vmatprep.subr.bf16.mxu0 %v1123
      %1481 = vmatpush1.bf16.msra.mxu0 %v1122
      %1482 = vmatprep.subr.bf16.mxu0 %v1130
      %1483 = vmatpush1.bf16.msra.mxu0 %v1129
      %1484 = vmatprep.subr.bf16.mxu0 %v1137
      %1485 = vmatpush1.bf16.msra.mxu0 %v1136
      %1486 = vmatprep.subr.bf16.mxu0 %v1144
      %1487 = vmatpush1.bf16.msra.mxu0 %v1143
      %1488 = vmatprep.subr.bf16.mxu0 %v1151
      %1489 = vmatpush1.bf16.msra.mxu0 %v1150
      %1490 = vmatprep.subr.bf16.mxu0 %v1158
      %1491 = vmatpush1.bf16.msra.mxu0 %v1157
      %1492 = vmatprep.subr.bf16.mxu0 %v1165
      %1493 = vmatpush1.bf16.msra.mxu0 %v1164
      %1494 = vmatprep.subr.bf16.mxu0 %v1172
      %1495 = vmatpush1.bf16.msra.mxu0 %v1171
      %1496 = vmatprep.subr.bf16.mxu0 %v1179
      %1497 = vmatpush1.bf16.msra.mxu0 %v1178
      %1498 = vmatprep.subr.bf16.mxu0 %v1186
      %1499 = vmatpush1.bf16.msra.mxu0 %v1185
      %1500 = vmatprep.subr.bf16.mxu0 %v1193
      %1501 = vmatpush1.bf16.msra.mxu0 %v1192
      %1502 = vmatprep.subr.bf16.mxu0 %v1200
      %1503 = vmatpush1.bf16.msra.mxu0 %v1199
      %1504 = vmatprep.mubr.bf16.mxu0 %v1290
      %1505 = vmatmul.mubr.bf16.gmra.mrb[0].mxu0 %v1289
      %v1506 = vpop.f32.mrb[0].mxu0
      %v1507 = vadd.f32 %v1270, %v1506
      %v1508 = vpop.f32.mrb[0].mxu0
      %v1509 = vadd.f32 %v1270, %v1508
      %v1510 = vpop.f32.mrb[0].mxu0
      %v1511 = vadd.f32 %v1275, %v1510
      %v1512 = vpop.f32.mrb[0].mxu0
      %v1513 = vadd.f32 %v1275, %v1512
      %1514 = vdwg.mxu0
      %1515 = vmatprep.subr.bf16.mxu0 %v1207
      %1516 = vmatpush1.bf16.msra.mxu0 %v1206
      %1517 = vmatprep.subr.bf16.mxu0 %v1214
      %1518 = vmatpush1.bf16.msra.mxu0 %v1213
      %1519 = vmatprep.subr.bf16.mxu0 %v1221
      %1520 = vmatpush1.bf16.msra.mxu0 %v1220
      %1521 = vmatprep.subr.bf16.mxu0 %v1228
      %1522 = vmatpush1.bf16.msra.mxu0 %v1227
      %1523 = vmatprep.subr.bf16.mxu0 %v1235
      %1524 = vmatpush1.bf16.msra.mxu0 %v1234
      %1525 = vmatprep.subr.bf16.mxu0 %v1242
      %1526 = vmatpush1.bf16.msra.mxu0 %v1241
      %1527 = vmatprep.subr.bf16.mxu0 %v1249
      %1528 = vmatpush1.bf16.msra.mxu0 %v1248
      %1529 = vmatprep.subr.bf16.mxu0 %v1256
      %1530 = vmatpush1.bf16.msra.mxu0 %v1255
      %1531 = vmatprep.subr.bf16.mxu0 %v1263
      %1532 = vmatpush1.bf16.msra.mxu0 %v1262
      %1533 = vmatprep.subr.bf16.mxu0 0
      %1534 = vmatpush1.bf16.msra.mxu0 0
      %1535 = vmatprep.subr.bf16.mxu0 0
      %1536 = vmatpush1.bf16.msra.mxu0 0
      %1537 = vmatprep.subr.bf16.mxu0 0
      %1538 = vmatpush1.bf16.msra.mxu0 0
      %1539 = vmatprep.subr.bf16.mxu0 0
      %1540 = vmatpush1.bf16.msra.mxu0 0
      %1541 = vmatprep.subr.bf16.mxu0 0
      %1542 = vmatpush1.bf16.msra.mxu0 0
      %1543 = vmatprep.subr.bf16.mxu0 0
      %1544 = vmatpush1.bf16.msra.mxu0 0
      %1545 = vmatprep.subr.bf16.mxu0 0
      %1546 = vmatpush1.bf16.msra.mxu0 0
      %1547 = vmatprep.mubr.bf16.mxu0 %v1298
      %1548 = vmatmul.mubr.bf16.gmra.mrb[0].mxu0 %v1291
      %v1549 = vpop.f32.mrb[0].mxu0
      %v1550 = vadd.f32 %v1507, %v1549
      %v1551 = vpop.f32.mrb[0].mxu0
      %v1552 = vadd.f32 %v1509, %v1551
      %v1553 = vpop.f32.mrb[0].mxu0
      %v1554 = vadd.f32 %v1511, %v1553
      %v1555 = vpop.f32.mrb[0].mxu0
      %v1556 = vadd.f32 %v1513, %v1555
      %1557 = vdwg.mxu0
      %1558 = vmatprep.subr.bf16.mxu0 0
      %1559 = vmatpush1.bf16.msra.mxu0 %v1096
      %1560 = vmatprep.subr.bf16.mxu0 0
      %1561 = vmatpush1.bf16.msra.mxu0 %v1103
      %1562 = vmatprep.subr.bf16.mxu0 0
      %1563 = vmatpush1.bf16.msra.mxu0 %v1110
      %1564 = vmatprep.subr.bf16.mxu0 0
      %1565 = vmatpush1.bf16.msra.mxu0 %v1117
      %1566 = vmatprep.subr.bf16.mxu0 0
      %1567 = vmatpush1.bf16.msra.mxu0 %v1124
      %1568 = vmatprep.subr.bf16.mxu0 0
      %1569 = vmatpush1.bf16.msra.mxu0 %v1131
      %1570 = vmatprep.subr.bf16.mxu0 0
      %1571 = vmatpush1.bf16.msra.mxu0 %v1138
      %1572 = vmatprep.subr.bf16.mxu0 0
      %1573 = vmatpush1.bf16.msra.mxu0 %v1145
      %1574 = vmatprep.subr.bf16.mxu0 0
      %1575 = vmatpush1.bf16.msra.mxu0 %v1152
      %1576 = vmatprep.subr.bf16.mxu0 0
      %1577 = vmatpush1.bf16.msra.mxu0 %v1159
      %1578 = vmatprep.subr.bf16.mxu0 0
      %1579 = vmatpush1.bf16.msra.mxu0 %v1166
      %1580 = vmatprep.subr.bf16.mxu0 0
      %1581 = vmatpush1.bf16.msra.mxu0 %v1173
      %1582 = vmatprep.subr.bf16.mxu0 0
      %1583 = vmatpush1.bf16.msra.mxu0 %v1180
      %1584 = vmatprep.subr.bf16.mxu0 0
      %1585 = vmatpush1.bf16.msra.mxu0 %v1187
      %1586 = vmatprep.subr.bf16.mxu0 0
      %1587 = vmatpush1.bf16.msra.mxu0 %v1194
      %1588 = vmatprep.subr.bf16.mxu0 0
      %1589 = vmatpush1.bf16.msra.mxu0 %v1201
      %1590 = vmatprep.mubr.bf16.mxu0 %v1290
      %1591 = vmatmul.mubr.bf16.gmra.mrb[0].mxu0 %v1289
      %v1592 = vpop.f32.mrb[0].mxu0
      %v1593 = vadd.f32 %v1270, %v1592
      %v1594 = vpop.f32.mrb[0].mxu0
      %v1595 = vpop.f32.mrb[0].mxu0
      %v1596 = vadd.f32 %v1275, %v1595
      %v1597 = vpop.f32.mrb[0].mxu0
      %1598 = vdwg.mxu0
      %1599 = vmatprep.subr.bf16.mxu0 0
      %1600 = vmatpush1.bf16.msra.mxu0 %v1208
      %1601 = vmatprep.subr.bf16.mxu0 0
      %1602 = vmatpush1.bf16.msra.mxu0 %v1215
      %1603 = vmatprep.subr.bf16.mxu0 0
      %1604 = vmatpush1.bf16.msra.mxu0 %v1222
      %1605 = vmatprep.subr.bf16.mxu0 0
      %1606 = vmatpush1.bf16.msra.mxu0 %v1229
      %1607 = vmatprep.subr.bf16.mxu0 0
      %1608 = vmatpush1.bf16.msra.mxu0 %v1236
      %1609 = vmatprep.subr.bf16.mxu0 0
      %1610 = vmatpush1.bf16.msra.mxu0 %v1243
      %1611 = vmatprep.subr.bf16.mxu0 0
      %1612 = vmatpush1.bf16.msra.mxu0 %v1250
      %1613 = vmatprep.subr.bf16.mxu0 0
      %1614 = vmatpush1.bf16.msra.mxu0 %v1257
      %1615 = vmatprep.subr.bf16.mxu0 0
      %1616 = vmatpush1.bf16.msra.mxu0 %v1264
      %1617 = vmatprep.subr.bf16.mxu0 0
      %1618 = vmatpush1.bf16.msra.mxu0 0
      %1619 = vmatprep.subr.bf16.mxu0 0
      %1620 = vmatpush1.bf16.msra.mxu0 0
      %1621 = vmatprep.subr.bf16.mxu0 0
      %1622 = vmatpush1.bf16.msra.mxu0 0
      %1623 = vmatprep.subr.bf16.mxu0 0
      %1624 = vmatpush1.bf16.msra.mxu0 0
      %1625 = vmatprep.subr.bf16.mxu0 0
      %1626 = vmatpush1.bf16.msra.mxu0 0
      %1627 = vmatprep.subr.bf16.mxu0 0
      %1628 = vmatpush1.bf16.msra.mxu0 0
      %1629 = vmatprep.subr.bf16.mxu0 0
      %1630 = vmatpush1.bf16.msra.mxu0 0
      %1631 = vmatprep.mubr.bf16.mxu0 %v1298
      %1632 = vmatmul.mubr.bf16.gmra.mrb[0].mxu0 %v1291
      %v1633 = vpop.f32.mrb[0].mxu0
      %v1634 = vadd.f32 %v1593, %v1633
      %v1635 = vpop.f32.mrb[0].mxu0
      %v1636 = vpop.f32.mrb[0].mxu0
      %v1637 = vadd.f32 %v1596, %v1636
      %v1638 = vpop.f32.mrb[0].mxu0
      %1639 = vdwg.mxu0
      %v1640 = vmax.f32 %v1378, 0.0
      %v1641 = vmax.f32 %v1380, 0.0
      %v1642 = vmax.f32 %v1464, 0.0
      %v1643 = vmax.f32 %v1466, 0.0
      %v1644 = vmax.f32 %v1550, 0.0
      %v1645 = vmax.f32 %v1552, 0.0
      %v1646 = vmax.f32 %v1634, 0.0
      %v1647 = vmax.f32 %v1382, 0.0
      %v1648 = vmax.f32 %v1384, 0.0
      %v1649 = vmax.f32 %v1468, 0.0
      %v1650 = vmax.f32 %v1470, 0.0
      %v1651 = vmax.f32 %v1554, 0.0
      %v1652 = vmax.f32 %v1556, 0.0
      %v1653 = vmax.f32 %v1637, 0.0
      %1668 = vrot.lane.b32.xlu0 %v1640, 127
      %v1669 = vpop.permute.xlu0 %1668
      %1670 = vrot.lane.b32.xlu0 %v1641, 127
      %v1671 = vpop.permute.xlu0 %1670
      %1672 = vrot.lane.b32.xlu0 %v1642, 127
      %v1673 = vpop.permute.xlu0 %1672
      %1674 = vrot.lane.b32.xlu0 %v1643, 127
      %v1675 = vpop.permute.xlu0 %1674
      %1676 = vrot.lane.b32.xlu0 %v1644, 127
      %v1677 = vpop.permute.xlu0 %1676
      %1678 = vrot.lane.b32.xlu0 %v1645, 127
      %v1679 = vpop.permute.xlu0 %1678
      %1680 = vrot.lane.b32.xlu0 %v1646, 127
      %v1681 = vpop.permute.xlu0 %1680
      %1682 = vrot.lane.b32.xlu0 %v1647, 127
      %v1683 = vpop.permute.xlu0 %1682
      %1684 = vrot.lane.b32.xlu0 %v1648, 127
      %v1685 = vpop.permute.xlu0 %1684
      %1686 = vrot.lane.b32.xlu0 %v1649, 127
      %v1687 = vpop.permute.xlu0 %1686
      %1688 = vrot.lane.b32.xlu0 %v1650, 127
      %v1689 = vpop.permute.xlu0 %1688
      %1690 = vrot.lane.b32.xlu0 %v1651, 127
      %v1691 = vpop.permute.xlu0 %1690
      %1692 = vrot.lane.b32.xlu0 %v1652, 127
      %v1693 = vpop.permute.xlu0 %1692
      %1694 = vrot.lane.b32.xlu0 %v1653, 127
      %v1695 = vpop.permute.xlu0 %1694
      %vm1696 = vcmask 1039360
      %v1697 = vsel %vm1696, %v1669, %v1671
      %v1698 = vsel %vm1696, %v1671, %v1673
      %v1699 = vsel %vm1696, %v1673, %v1675
      %v1700 = vsel %vm1696, %v1675, %v1677
      %v1701 = vsel %vm1696, %v1677, %v1679
      %v1702 = vsel %vm1696, %v1679, %v1681
      %v1703 = vsel %vm1696, %v1683, %v1685
      %v1704 = vsel %vm1696, %v1685, %v1687
      %v1705 = vsel %vm1696, %v1687, %v1689
      %v1706 = vsel %vm1696, %v1689, %v1691
      %v1707 = vsel %vm1696, %v1691, %v1693
      %v1708 = vsel %vm1696, %v1693, %v1695
      %v1723 = vmax.f32 %v1640, %v1697
      %v1724 = vmax.f32 %v1641, %v1698
      %v1725 = vmax.f32 %v1642, %v1699
      %v1726 = vmax.f32 %v1643, %v1700
      %v1727 = vmax.f32 %v1644, %v1701
      %v1728 = vmax.f32 %v1645, %v1702
      %v1729 = vmax.f32 %v1646, %v1681
      %v1730 = vmax.f32 %v1647, %v1703
      %v1731 = vmax.f32 %v1648, %v1704
      %v1732 = vmax.f32 %v1649, %v1705
      %v1733 = vmax.f32 %v1650, %v1706
      %v1734 = vmax.f32 %v1651, %v1707
      %v1735 = vmax.f32 %v1652, %v1708
      %v1736 = vmax.f32 %v1653, %v1695
      %1751 = vrot.lane.b32.xlu0 %v1723, 96
      %v1752 = vpop.permute.xlu0 %1751
      %1753 = vrot.lane.b32.xlu0 %v1724, 96
      %v1754 = vpop.permute.xlu0 %1753
      %1755 = vrot.lane.b32.xlu0 %v1725, 96
      %v1756 = vpop.permute.xlu0 %1755
      %1757 = vrot.lane.b32.xlu0 %v1726, 96
      %v1758 = vpop.permute.xlu0 %1757
      %1759 = vrot.lane.b32.xlu0 %v1727, 96
      %v1760 = vpop.permute.xlu0 %1759
      %1761 = vrot.lane.b32.xlu0 %v1728, 96
      %v1762 = vpop.permute.xlu0 %1761
      %1763 = vrot.lane.b32.xlu0 %v1729, 96
      %v1764 = vpop.permute.xlu0 %1763
      %1765 = vrot.lane.b32.xlu0 %v1730, 96
      %v1766 = vpop.permute.xlu0 %1765
      %1767 = vrot.lane.b32.xlu0 %v1731, 96
      %v1768 = vpop.permute.xlu0 %1767
      %1769 = vrot.lane.b32.xlu0 %v1732, 96
      %v1770 = vpop.permute.xlu0 %1769
      %1771 = vrot.lane.b32.xlu0 %v1733, 96
      %v1772 = vpop.permute.xlu0 %1771
      %1773 = vrot.lane.b32.xlu0 %v1734, 96
      %v1774 = vpop.permute.xlu0 %1773
      %1775 = vrot.lane.b32.xlu0 %v1735, 96
      %v1776 = vpop.permute.xlu0 %1775
      %1777 = vrot.lane.b32.xlu0 %v1736, 96
      %v1778 = vpop.permute.xlu0 %1777
      %vm1779 = vcmask 785408
      %v1780 = vsel %vm1779, %v1752, %v1754
      %v1781 = vsel %vm1779, %v1754, %v1756
      %v1782 = vsel %vm1779, %v1756, %v1758
      %v1783 = vsel %vm1779, %v1758, %v1760
      %v1784 = vsel %vm1779, %v1760, %v1762
      %v1785 = vsel %vm1779, %v1762, %v1764
      %v1786 = vsel %vm1779, %v1766, %v1768
      %v1787 = vsel %vm1779, %v1768, %v1770
      %v1788 = vsel %vm1779, %v1770, %v1772
      %v1789 = vsel %vm1779, %v1772, %v1774
      %v1790 = vsel %vm1779, %v1774, %v1776
      %v1791 = vsel %vm1779, %v1776, %v1778
      %v1806 = vmax.f32 %v1723, %v1780
      %v1807 = vmax.f32 %v1724, %v1781
      %v1808 = vmax.f32 %v1725, %v1782
      %v1809 = vmax.f32 %v1726, %v1783
      %v1810 = vmax.f32 %v1727, %v1784
      %v1811 = vmax.f32 %v1728, %v1785
      %v1812 = vmax.f32 %v1729, %v1764
      %v1813 = vmax.f32 %v1730, %v1786
      %v1814 = vmax.f32 %v1731, %v1787
      %v1815 = vmax.f32 %v1732, %v1788
      %v1816 = vmax.f32 %v1733, %v1789
      %v1817 = vmax.f32 %v1734, %v1790
      %v1818 = vmax.f32 %v1735, %v1791
      %v1819 = vmax.f32 %v1736, %v1778
      %v1820 = vpack.c.bf16 %v1813, %v1806
      %v1821 = vpack.c.bf16 %v1814, %v1807
      %v1822 = vpack.c.bf16 %v1815, %v1808
      %v1823 = vpack.c.bf16 %v1816, %v1809
      %v1824 = vpack.c.bf16 %v1817, %v1810
      %v1825 = vpack.c.bf16 %v1818, %v1811
      %v1826 = vpack.c.bf16 %v1819, %v1812
      %v1827 = vld [vmem:[#allocation4] sm:$0xff]
      %v1828 = vld [vmem:[#allocation4 + $0x8] sm:$0xff]
      %v1829 = vld [vmem:[#allocation4 + $0x10] sm:$0xff]
      %v1830 = vld [vmem:[#allocation4 + $0x18] sm:$0xff]
      %v1831 = vld [vmem:[#allocation4 + $0x20] sm:$0xff]
      %v1832 = vld [vmem:[#allocation4 + $0x28] sm:$0xff]
      %v1833 = vld [vmem:[#allocation4 + $0x30] sm:$0xff]
      %v1834 = vld [vmem:[#allocation4 + $0x38] sm:$0xff]
      %v1835 = vld [vmem:[#allocation4 + $0x40] sm:$0xff]
      %v1836 = vld [vmem:[#allocation4 + $0x48] sm:$0xff]
      %v1837 = vld [vmem:[#allocation4 + $0x50] sm:$0xff]
      %v1838 = vld [vmem:[#allocation4 + $0x58] sm:$0xff]
      %v1839 = vld [vmem:[#allocation4 + $0x60] sm:$0xff]
      %v1840 = vld [vmem:[#allocation4 + $0x68] sm:$0xff]
      %v1841 = vld [vmem:[#allocation4 + $0x70] sm:$0xff]
      %v1842 = vld [vmem:[#allocation4 + $0x78] sm:$0xff]
      %v1843 = vld [vmem:[#allocation4 + $0x80] sm:$0xff]
      %v1844 = vld [vmem:[#allocation4 + $0x88] sm:$0xff]
      %v1845 = vld [vmem:[#allocation4 + $0x90] sm:$0xff]
      %v1846 = vld [vmem:[#allocation4 + $0x98] sm:$0xff]
      %v1847 = vld [vmem:[#allocation4 + $0xa0] sm:$0xff]
      %v1848 = vld [vmem:[#allocation4 + $0xa8] sm:$0xff]
      %v1849 = vld [vmem:[#allocation4 + $0xb0] sm:$0xff]
      %v1850 = vld [vmem:[#allocation4 + $0xb8] sm:$0xff]
      %v1851 = vld [vmem:[#allocation4 + $0xc0] sm:$0xff]
      %v1852 = vld [vmem:[#allocation4 + $0xc8] sm:$0xff]
      %v1853 = vld [vmem:[#allocation4 + $0xd0] sm:$0xff]
      %v1854 = vld [vmem:[#allocation4 + $0xd8] sm:$0xff]
      %v1855 = vld [vmem:[#allocation4 + $0xe0] sm:$0xff]
      %v1856 = vld [vmem:[#allocation4 + $0xe8] sm:$0xff]
      %v1857 = vld [vmem:[#allocation4 + $0xf0] sm:$0xff]
      %v1858 = vld [vmem:[#allocation4 + $0xf8] sm:$0xff]
      %v1859 = vld [vmem:[#allocation4 + $0x100] sm:$0xff]
      %v1860 = vld [vmem:[#allocation4 + $0x108] sm:$0xff]
      %v1861 = vld [vmem:[#allocation4 + $0x110] sm:$0xff]
      %v1862 = vld [vmem:[#allocation4 + $0x118] sm:$0xff]
      %v1863 = vld [vmem:[#allocation4 + $0x120] sm:$0xff]
      %v1864 = vld [vmem:[#allocation4 + $0x128] sm:$0xff]
      %v1865 = vld [vmem:[#allocation4 + $0x130] sm:$0xff]
      %v1866 = vld [vmem:[#allocation4 + $0x138] sm:$0xff]
      %v1867 = vld [vmem:[#allocation4 + $0x140] sm:$0xff]
      %v1868 = vld [vmem:[#allocation4 + $0x148] sm:$0xff]
      %v1869 = vld [vmem:[#allocation4 + $0x150] sm:$0xff]
      %v1870 = vld [vmem:[#allocation4 + $0x158] sm:$0xff]
      %v1871 = vld [vmem:[#allocation4 + $0x160] sm:$0xff]
      %v1872 = vld [vmem:[#allocation4 + $0x168] sm:$0xff]
      %v1873 = vld [vmem:[#allocation4 + $0x170] sm:$0xff]
      %v1874 = vld [vmem:[#allocation4 + $0x178] sm:$0xff]
      %v1875 = vld [vmem:[#allocation4 + $0x180] sm:$0xff]
      %v1876 = vld [vmem:[#allocation4 + $0x188] sm:$0xff]
      %v1877 = vld [vmem:[#allocation4 + $0x190] sm:$0xff]
      %v1878 = vld [vmem:[#allocation4 + $0x198] sm:$0xff]
      %v1879 = vld [vmem:[#allocation4 + $0x1a0] sm:$0xff]
      %v1880 = vld [vmem:[#allocation4 + $0x1a8] sm:$0xff]
      %v1881 = vld [vmem:[#allocation4 + $0x1b0] sm:$0xff]
      %v1882 = vld [vmem:[#allocation4 + $0x1b8] sm:$0xff]
      %v1883 = vld [vmem:[#allocation4 + $0x1c0] sm:$0xff]
      %v1884 = vld [vmem:[#allocation4 + $0x1c8] sm:$0xff]
      %v1885 = vld [vmem:[#allocation4 + $0x1d0] sm:$0xff]
      %v1886 = vld [vmem:[#allocation4 + $0x1d8] sm:$0xff]
      %v1887 = vld [vmem:[#allocation4 + $0x1e0] sm:$0xff]
      %v1888 = vld [vmem:[#allocation4 + $0x1e8] sm:$0xff]
      %v1889 = vld [vmem:[#allocation4 + $0x1f0] sm:$0xff]
      %v1890 = vld [vmem:[#allocation4 + $0x1f8] sm:$0xff]
      %v1891 = vld [vmem:[#allocation4 + $0x200] sm:$0xff]
      %v1892 = vld [vmem:[#allocation4 + $0x208] sm:$0xff]
      %v1893 = vld [vmem:[#allocation4 + $0x210] sm:$0xff]
      %v1894 = vld [vmem:[#allocation4 + $0x218] sm:$0xff]
      %v1895 = vld [vmem:[#allocation4 + $0x220] sm:$0xff]
      %v1896 = vld [vmem:[#allocation4 + $0x228] sm:$0xff]
      %v1897 = vld [vmem:[#allocation4 + $0x230] sm:$0xff]
      %v1898 = vld [vmem:[#allocation4 + $0x238] sm:$0xff]
      %v1899 = vld [vmem:[#allocation4 + $0x240] sm:$0xff]
      %v1900 = vld [vmem:[#allocation4 + $0x248] sm:$0xff]
      %v1901 = vld [vmem:[#allocation4 + $0x250] sm:$0xff]
      %v1902 = vld [vmem:[#allocation4 + $0x258] sm:$0xff]
      %v1903 = vld [vmem:[#allocation4 + $0x260] sm:$0xff]
      %v1904 = vld [vmem:[#allocation4 + $0x268] sm:$0xff]
      %v1905 = vld [vmem:[#allocation4 + $0x270] sm:$0xff]
      %v1906 = vld [vmem:[#allocation4 + $0x278] sm:$0xff]
      %v1907 = vld [vmem:[#allocation4 + $0x280] sm:$0xff]
      %v1908 = vld [vmem:[#allocation4 + $0x288] sm:$0xff]
      %v1909 = vld [vmem:[#allocation4 + $0x290] sm:$0xff]
      %v1910 = vld [vmem:[#allocation4 + $0x298] sm:$0xff]
      %v1911 = vld [vmem:[#allocation4 + $0x2a0] sm:$0xff]
      %v1912 = vld [vmem:[#allocation4 + $0x2a8] sm:$0xff]
      %v1913 = vld [vmem:[#allocation4 + $0x2b0] sm:$0xff]
      %v1914 = vld [vmem:[#allocation4 + $0x2b8] sm:$0xff]
      %v1915 = vld [vmem:[#allocation4 + $0x2c0] sm:$0xff]
      %v1916 = vld [vmem:[#allocation4 + $0x2c8] sm:$0xff]
      %v1917 = vld [vmem:[#allocation4 + $0x2d0] sm:$0xff]
      %v1918 = vld [vmem:[#allocation4 + $0x2d8] sm:$0xff]
      %v1919 = vld [vmem:[#allocation4 + $0x2e0] sm:$0xff]
      %v1920 = vld [vmem:[#allocation4 + $0x2e8] sm:$0xff]
      %v1921 = vld [vmem:[#allocation4 + $0x2f0] sm:$0xff]
      %v1922 = vld [vmem:[#allocation4 + $0x2f8] sm:$0xff]
      %v1923 = vld [vmem:[#allocation4 + $0x300] sm:$0xff]
      %v1924 = vld [vmem:[#allocation4 + $0x308] sm:$0xff]
      %v1925 = vld [vmem:[#allocation4 + $0x310] sm:$0xff]
      %v1926 = vld [vmem:[#allocation4 + $0x318] sm:$0xff]
      %v1927 = vld [vmem:[#allocation4 + $0x320] sm:$0xff]
      %v1928 = vld [vmem:[#allocation4 + $0x328] sm:$0xff]
      %v1929 = vld [vmem:[#allocation4 + $0x330] sm:$0xff]
      %v1930 = vld [vmem:[#allocation4 + $0x338] sm:$0xff]
      %v1931 = vld [vmem:[#allocation4 + $0x340] sm:$0xff]
      %v1932 = vld [vmem:[#allocation4 + $0x348] sm:$0xff]
      %v1933 = vld [vmem:[#allocation4 + $0x350] sm:$0xff]
      %v1934 = vld [vmem:[#allocation4 + $0x358] sm:$0xff]
      %v2043 = vunpack.c.l.b16 %v1827
      %v2044 = vunpack.c.h.b16 %v1827
      %v2045 = vunpack.c.l.b16 %v1828
      %v2046 = vunpack.c.h.b16 %v1828
      %v2047 = vunpack.c.l.b16 %v1829
      %v2048 = vunpack.c.h.b16 %v1829
      %v2049 = vunpack.c.l.b16 %v1830
      %v2050 = vunpack.c.h.b16 %v1830
      %v2051 = vunpack.c.l.b16 %v1831
      %v2052 = vunpack.c.h.b16 %v1831
      %v2053 = vunpack.c.l.b16 %v1832
      %v2054 = vunpack.c.h.b16 %v1832
      %v2055 = vunpack.c.l.b16 %v1833
      %v2056 = vunpack.c.h.b16 %v1833
      %v2057 = vunpack.c.l.b16 %v1834
      %v2058 = vunpack.c.h.b16 %v1834
      %v2059 = vunpack.c.l.b16 %v1835
      %v2060 = vunpack.c.h.b16 %v1835
      %v2061 = vunpack.c.l.b16 %v1836
      %v2062 = vunpack.c.h.b16 %v1836
      %v2063 = vunpack.c.l.b16 %v1837
      %v2064 = vunpack.c.h.b16 %v1837
      %v2065 = vunpack.c.l.b16 %v1838
      %v2066 = vunpack.c.h.b16 %v1838
      %v2067 = vunpack.c.l.b16 %v1839
      %v2068 = vunpack.c.h.b16 %v1839
      %v2069 = vunpack.c.l.b16 %v1840
      %v2070 = vunpack.c.h.b16 %v1840
      %v2071 = vunpack.c.l.b16 %v1841
      %v2072 = vunpack.c.h.b16 %v1841
      %v2073 = vunpack.c.l.b16 %v1842
      %v2074 = vunpack.c.h.b16 %v1842
      %v2075 = vunpack.c.l.b16 %v1843
      %v2076 = vunpack.c.h.b16 %v1843
      %v2077 = vunpack.c.l.b16 %v1844
      %v2078 = vunpack.c.h.b16 %v1844
      %v2079 = vunpack.c.l.b16 %v1845
      %v2080 = vunpack.c.h.b16 %v1845
      %v2081 = vunpack.c.l.b16 %v1846
      %v2082 = vunpack.c.h.b16 %v1846
      %v2083 = vunpack.c.l.b16 %v1847
      %v2084 = vunpack.c.h.b16 %v1847
      %v2085 = vunpack.c.l.b16 %v1848
      %v2086 = vunpack.c.h.b16 %v1848
      %v2087 = vunpack.c.l.b16 %v1849
      %v2088 = vunpack.c.h.b16 %v1849
      %v2089 = vunpack.c.l.b16 %v1850
      %v2090 = vunpack.c.h.b16 %v1850
      %v2091 = vunpack.c.l.b16 %v1851
      %v2092 = vunpack.c.h.b16 %v1851
      %v2093 = vunpack.c.l.b16 %v1852
      %v2094 = vunpack.c.h.b16 %v1852
      %v2095 = vunpack.c.l.b16 %v1853
      %v2096 = vunpack.c.h.b16 %v1853
      %v2097 = vunpack.c.l.b16 %v1854
      %v2098 = vunpack.c.h.b16 %v1854
      %v2099 = vunpack.c.l.b16 %v1855
      %v2100 = vunpack.c.h.b16 %v1855
      %v2101 = vunpack.c.l.b16 %v1856
      %v2102 = vunpack.c.h.b16 %v1856
      %v2103 = vunpack.c.l.b16 %v1857
      %v2104 = vunpack.c.h.b16 %v1857
      %v2105 = vunpack.c.l.b16 %v1858
      %v2106 = vunpack.c.h.b16 %v1858
      %v2107 = vunpack.c.l.b16 %v1859
      %v2108 = vunpack.c.h.b16 %v1859
      %v2109 = vunpack.c.l.b16 %v1860
      %v2110 = vunpack.c.h.b16 %v1860
      %v2111 = vunpack.c.l.b16 %v1861
      %v2112 = vunpack.c.h.b16 %v1861
      %v2113 = vunpack.c.l.b16 %v1862
      %v2114 = vunpack.c.h.b16 %v1862
      %v2115 = vunpack.c.l.b16 %v1863
      %v2116 = vunpack.c.h.b16 %v1863
      %v2117 = vunpack.c.l.b16 %v1864
      %v2118 = vunpack.c.h.b16 %v1864
      %v2119 = vunpack.c.l.b16 %v1865
      %v2120 = vunpack.c.h.b16 %v1865
      %v2121 = vunpack.c.l.b16 %v1866
      %v2122 = vunpack.c.h.b16 %v1866
      %v2123 = vunpack.c.l.b16 %v1867
      %v2124 = vunpack.c.h.b16 %v1867
      %v2125 = vunpack.c.l.b16 %v1868
      %v2126 = vunpack.c.h.b16 %v1868
      %v2127 = vunpack.c.l.b16 %v1869
      %v2128 = vunpack.c.h.b16 %v1869
      %v2129 = vunpack.c.l.b16 %v1870
      %v2130 = vunpack.c.h.b16 %v1870
      %v2131 = vunpack.c.l.b16 %v1871
      %v2132 = vunpack.c.h.b16 %v1871
      %v2133 = vunpack.c.l.b16 %v1872
      %v2134 = vunpack.c.h.b16 %v1872
      %v2135 = vunpack.c.l.b16 %v1873
      %v2136 = vunpack.c.h.b16 %v1873
      %v2137 = vunpack.c.l.b16 %v1874
      %v2138 = vunpack.c.h.b16 %v1874
      %v2139 = vunpack.c.l.b16 %v1875
      %v2140 = vunpack.c.h.b16 %v1875
      %v2141 = vunpack.c.l.b16 %v1876
      %v2142 = vunpack.c.h.b16 %v1876
      %v2143 = vunpack.c.l.b16 %v1877
      %v2144 = vunpack.c.h.b16 %v1877
      %v2145 = vunpack.c.l.b16 %v1878
      %v2146 = vunpack.c.h.b16 %v1878
      %v2147 = vunpack.c.l.b16 %v1879
      %v2148 = vunpack.c.h.b16 %v1879
      %v2149 = vunpack.c.l.b16 %v1880
      %v2150 = vunpack.c.h.b16 %v1880
      %v2151 = vunpack.c.l.b16 %v1881
      %v2152 = vunpack.c.h.b16 %v1881
      %v2153 = vunpack.c.l.b16 %v1882
      %v2154 = vunpack.c.h.b16 %v1882
      %v2155 = vunpack.c.l.b16 %v1883
      %v2156 = vunpack.c.h.b16 %v1883
      %v2157 = vunpack.c.l.b16 %v1884
      %v2158 = vunpack.c.h.b16 %v1884
      %v2159 = vunpack.c.l.b16 %v1885
      %v2160 = vunpack.c.h.b16 %v1885
      %v2161 = vunpack.c.l.b16 %v1886
      %v2162 = vunpack.c.h.b16 %v1886
      %v2163 = vunpack.c.l.b16 %v1887
      %v2164 = vunpack.c.h.b16 %v1887
      %v2165 = vunpack.c.l.b16 %v1888
      %v2166 = vunpack.c.h.b16 %v1888
      %v2167 = vunpack.c.l.b16 %v1889
      %v2168 = vunpack.c.h.b16 %v1889
      %v2169 = vunpack.c.l.b16 %v1890
      %v2170 = vunpack.c.h.b16 %v1890
      %v2171 = vunpack.c.l.b16 %v1891
      %v2172 = vunpack.c.h.b16 %v1891
      %v2173 = vunpack.c.l.b16 %v1892
      %v2174 = vunpack.c.h.b16 %v1892
      %v2175 = vunpack.c.l.b16 %v1893
      %v2176 = vunpack.c.h.b16 %v1893
      %v2177 = vunpack.c.l.b16 %v1894
      %v2178 = vunpack.c.h.b16 %v1894
      %v2179 = vunpack.c.l.b16 %v1895
      %v2180 = vunpack.c.h.b16 %v1895
      %v2181 = vunpack.c.l.b16 %v1896
      %v2182 = vunpack.c.h.b16 %v1896
      %v2183 = vunpack.c.l.b16 %v1897
      %v2184 = vunpack.c.h.b16 %v1897
      %v2185 = vunpack.c.l.b16 %v1898
      %v2186 = vunpack.c.h.b16 %v1898
      %v2187 = vunpack.c.l.b16 %v1899
      %v2188 = vunpack.c.h.b16 %v1899
      %v2189 = vunpack.c.l.b16 %v1900
      %v2190 = vunpack.c.h.b16 %v1900
      %v2191 = vunpack.c.l.b16 %v1901
      %v2192 = vunpack.c.h.b16 %v1901
      %v2193 = vunpack.c.l.b16 %v1902
      %v2194 = vunpack.c.h.b16 %v1902
      %v2195 = vunpack.c.l.b16 %v1903
      %v2196 = vunpack.c.h.b16 %v1903
      %v2197 = vunpack.c.l.b16 %v1904
      %v2198 = vunpack.c.h.b16 %v1904
      %v2199 = vunpack.c.l.b16 %v1905
      %v2200 = vunpack.c.h.b16 %v1905
      %v2201 = vunpack.c.l.b16 %v1906
      %v2202 = vunpack.c.h.b16 %v1906
      %v2203 = vunpack.c.l.b16 %v1907
      %v2204 = vunpack.c.h.b16 %v1907
      %v2205 = vunpack.c.l.b16 %v1908
      %v2206 = vunpack.c.h.b16 %v1908
      %v2207 = vunpack.c.l.b16 %v1909
      %v2208 = vunpack.c.h.b16 %v1909
      %v2209 = vunpack.c.l.b16 %v1910
      %v2210 = vunpack.c.h.b16 %v1910
      %v2211 = vunpack.c.l.b16 %v1911
      %v2212 = vunpack.c.h.b16 %v1911
      %v2213 = vunpack.c.l.b16 %v1912
      %v2214 = vunpack.c.h.b16 %v1912
      %v2215 = vunpack.c.l.b16 %v1913
      %v2216 = vunpack.c.h.b16 %v1913
      %v2217 = vunpack.c.l.b16 %v1914
      %v2218 = vunpack.c.h.b16 %v1914
      %v2219 = vunpack.c.l.b16 %v1915
      %v2220 = vunpack.c.h.b16 %v1915
      %v2221 = vunpack.c.l.b16 %v1916
      %v2222 = vunpack.c.h.b16 %v1916
      %v2223 = vunpack.c.l.b16 %v1917
      %v2224 = vunpack.c.h.b16 %v1917
      %v2225 = vunpack.c.l.b16 %v1918
      %v2226 = vunpack.c.h.b16 %v1918
      %v2227 = vunpack.c.l.b16 %v1919
      %v2228 = vunpack.c.h.b16 %v1919
      %v2229 = vunpack.c.l.b16 %v1920
      %v2230 = vunpack.c.h.b16 %v1920
      %v2231 = vunpack.c.l.b16 %v1921
      %v2232 = vunpack.c.h.b16 %v1921
      %v2233 = vunpack.c.l.b16 %v1922
      %v2234 = vunpack.c.h.b16 %v1922
      %v2235 = vunpack.c.l.b16 %v1923
      %v2236 = vunpack.c.h.b16 %v1923
      %v2237 = vunpack.c.l.b16 %v1924
      %v2238 = vunpack.c.h.b16 %v1924
      %v2239 = vunpack.c.l.b16 %v1925
      %v2240 = vunpack.c.h.b16 %v1925
      %v2241 = vunpack.c.l.b16 %v1926
      %v2242 = vunpack.c.h.b16 %v1926
      %v2243 = vunpack.c.l.b16 %v1927
      %v2244 = vunpack.c.h.b16 %v1927
      %v2245 = vunpack.c.l.b16 %v1928
      %v2246 = vunpack.c.h.b16 %v1928
      %v2247 = vunpack.c.l.b16 %v1929
      %v2248 = vunpack.c.h.b16 %v1929
      %v2249 = vunpack.c.l.b16 %v1930
      %v2250 = vunpack.c.h.b16 %v1930
      %v2251 = vunpack.c.l.b16 %v1931
      %v2252 = vunpack.c.h.b16 %v1931
      %v2253 = vunpack.c.l.b16 %v1932
      %v2254 = vunpack.c.h.b16 %v1932
      %v2255 = vunpack.c.l.b16 %v1933
      %v2256 = vunpack.c.h.b16 %v1933
      %v2257 = vunpack.c.l.b16 %v1934
      %v2258 = vunpack.c.h.b16 %v1934
      %v2259 = vpack.c.b16 %v2045, %v2043
      %v2260 = vpack.c.b16 %v2046, %v2044
      %v2261 = vpack.c.b16 %v2049, %v2047
      %v2262 = vpack.c.b16 %v2050, %v2048
      %v2263 = vpack.c.b16 %v2053, %v2051
      %v2264 = vpack.c.b16 %v2054, %v2052
      %v2265 = vpack.c.b16 %v2057, %v2055
      %v2266 = vpack.c.b16 %v2058, %v2056
      %v2267 = vpack.c.b16 %v2061, %v2059
      %v2268 = vpack.c.b16 %v2062, %v2060
      %v2269 = vpack.c.b16 %v2065, %v2063
      %v2270 = vpack.c.b16 %v2066, %v2064
      %v2271 = vpack.c.b16 %v2069, %v2067
      %v2272 = vpack.c.b16 %v2070, %v2068
      %v2273 = vpack.c.b16 %v2073, %v2071
      %v2274 = vpack.c.b16 %v2074, %v2072
      %v2275 = vpack.c.b16 %v2077, %v2075
      %v2276 = vpack.c.b16 %v2078, %v2076
      %v2277 = vpack.c.b16 %v2081, %v2079
      %v2278 = vpack.c.b16 %v2082, %v2080
      %v2279 = vpack.c.b16 %v2085, %v2083
      %v2280 = vpack.c.b16 %v2086, %v2084
      %v2281 = vpack.c.b16 %v2089, %v2087
      %v2282 = vpack.c.b16 %v2090, %v2088
      %v2283 = vpack.c.b16 %v2093, %v2091
      %v2284 = vpack.c.b16 %v2094, %v2092
      %v2285 = vpack.c.b16 %v2097, %v2095
      %v2286 = vpack.c.b16 %v2098, %v2096
      %v2287 = vpack.c.b16 %v2101, %v2099
      %v2288 = vpack.c.b16 %v2102, %v2100
      %v2289 = vpack.c.b16 %v2105, %v2103
      %v2290 = vpack.c.b16 %v2106, %v2104
      %v2291 = vpack.c.b16 %v2109, %v2107
      %v2292 = vpack.c.b16 %v2110, %v2108
      %v2293 = vpack.c.b16 %v2113, %v2111
      %v2294 = vpack.c.b16 %v2114, %v2112
      %v2295 = vpack.c.b16 %v2117, %v2115
      %v2296 = vpack.c.b16 %v2118, %v2116
      %v2297 = vpack.c.b16 %v2121, %v2119
      %v2298 = vpack.c.b16 %v2122, %v2120
      %v2299 = vpack.c.b16 %v2125, %v2123
      %v2300 = vpack.c.b16 %v2126, %v2124
      %v2301 = vpack.c.b16 %v2129, %v2127
      %v2302 = vpack.c.b16 %v2130, %v2128
      %v2303 = vpack.c.b16 %v2133, %v2131
      %v2304 = vpack.c.b16 %v2134, %v2132
      %v2305 = vpack.c.b16 %v2137, %v2135
      %v2306 = vpack.c.b16 %v2138, %v2136
      %v2307 = vpack.c.b16 %v2141, %v2139
      %v2308 = vpack.c.b16 %v2142, %v2140
      %v2309 = vpack.c.b16 %v2145, %v2143
      %v2310 = vpack.c.b16 %v2146, %v2144
      %v2311 = vpack.c.b16 %v2149, %v2147
      %v2312 = vpack.c.b16 %v2150, %v2148
      %v2313 = vpack.c.b16 %v2153, %v2151
      %v2314 = vpack.c.b16 %v2154, %v2152
      %v2315 = vpack.c.b16 %v2157, %v2155
      %v2316 = vpack.c.b16 %v2158, %v2156
      %v2317 = vpack.c.b16 %v2161, %v2159
      %v2318 = vpack.c.b16 %v2162, %v2160
      %v2319 = vpack.c.b16 %v2165, %v2163
      %v2320 = vpack.c.b16 %v2166, %v2164
      %v2321 = vpack.c.b16 %v2169, %v2167
      %v2322 = vpack.c.b16 %v2170, %v2168
      %v2323 = vpack.c.b16 %v2173, %v2171
      %v2324 = vpack.c.b16 %v2174, %v2172
      %v2325 = vpack.c.b16 %v2177, %v2175
      %v2326 = vpack.c.b16 %v2178, %v2176
      %v2327 = vpack.c.b16 %v2181, %v2179
      %v2328 = vpack.c.b16 %v2182, %v2180
      %v2329 = vpack.c.b16 %v2185, %v2183
      %v2330 = vpack.c.b16 %v2186, %v2184
      %v2331 = vpack.c.b16 %v2189, %v2187
      %v2332 = vpack.c.b16 %v2190, %v2188
      %v2333 = vpack.c.b16 %v2193, %v2191
      %v2334 = vpack.c.b16 %v2194, %v2192
      %v2335 = vpack.c.b16 %v2197, %v2195
      %v2336 = vpack.c.b16 %v2198, %v2196
      %v2337 = vpack.c.b16 %v2201, %v2199
      %v2338 = vpack.c.b16 %v2202, %v2200
      %v2339 = vpack.c.b16 %v2205, %v2203
      %v2340 = vpack.c.b16 %v2206, %v2204
      %v2341 = vpack.c.b16 %v2209, %v2207
      %v2342 = vpack.c.b16 %v2210, %v2208
      %v2343 = vpack.c.b16 %v2213, %v2211
      %v2344 = vpack.c.b16 %v2214, %v2212
      %v2345 = vpack.c.b16 %v2217, %v2215
      %v2346 = vpack.c.b16 %v2218, %v2216
      %v2347 = vpack.c.b16 %v2221, %v2219
      %v2348 = vpack.c.b16 %v2222, %v2220
      %v2349 = vpack.c.b16 %v2225, %v2223
      %v2350 = vpack.c.b16 %v2226, %v2224
      %v2351 = vpack.c.b16 %v2229, %v2227
      %v2352 = vpack.c.b16 %v2230, %v2228
      %v2353 = vpack.c.b16 %v2233, %v2231
      %v2354 = vpack.c.b16 %v2234, %v2232
      %v2355 = vpack.c.b16 %v2237, %v2235
      %v2356 = vpack.c.b16 %v2238, %v2236
      %v2357 = vpack.c.b16 %v2241, %v2239
      %v2358 = vpack.c.b16 %v2242, %v2240
      %v2359 = vpack.c.b16 %v2245, %v2243
      %v2360 = vpack.c.b16 %v2246, %v2244
      %v2361 = vpack.c.b16 %v2249, %v2247
      %v2362 = vpack.c.b16 %v2250, %v2248
      %v2363 = vpack.c.b16 %v2253, %v2251
      %v2364 = vpack.c.b16 %v2254, %v2252
      %v2365 = vpack.c.b16 %v2257, %v2255
      %v2366 = vpack.c.b16 %v2258, %v2256
      %vm2473 = vcmask 777216
      %v2475 = vsel %vm2473, %v1826, 0
      %vm2477 = vcmask 1046528
      %vm2478 = vcmask 1047552
      %v2479 = vsel %vm2477, 4294967295, 65535
      %v2480 = vsel %vm2478, %v2479, 0
      %v2482 = vand.u32 %v2365, %v2480
      %v2485 = vand.u32 %v2366, %v2480
      %2487 = vmatprep.subr.bf16.mxu0 %v2260
      %2488 = vmatpush1.bf16.msra.mxu0 %v2259
      %2489 = vmatprep.subr.bf16.mxu0 %v2262
      %2490 = vmatpush1.bf16.msra.mxu0 %v2261
      %2491 = vmatprep.subr.bf16.mxu0 %v2264
      %2492 = vmatpush1.bf16.msra.mxu0 %v2263
      %2493 = vmatprep.subr.bf16.mxu0 %v2266
      %2494 = vmatpush1.bf16.msra.mxu0 %v2265
      %2495 = vmatprep.subr.bf16.mxu0 %v2268
      %2496 = vmatpush1.bf16.msra.mxu0 %v2267
      %2497 = vmatprep.subr.bf16.mxu0 %v2270
      %2498 = vmatpush1.bf16.msra.mxu0 %v2269
      %2499 = vmatprep.subr.bf16.mxu0 %v2272
      %2500 = vmatpush1.bf16.msra.mxu0 %v2271
      %2501 = vmatprep.subr.bf16.mxu0 %v2274
      %2502 = vmatpush1.bf16.msra.mxu0 %v2273
      %2503 = vmatprep.subr.bf16.mxu0 %v2276
      %2504 = vmatpush1.bf16.msra.mxu0 %v2275
      %2505 = vmatprep.subr.bf16.mxu0 %v2278
      %2506 = vmatpush1.bf16.msra.mxu0 %v2277
      %2507 = vmatprep.subr.bf16.mxu0 %v2280
      %2508 = vmatpush1.bf16.msra.mxu0 %v2279
      %2509 = vmatprep.subr.bf16.mxu0 %v2282
      %2510 = vmatpush1.bf16.msra.mxu0 %v2281
      %2511 = vmatprep.subr.bf16.mxu0 %v2284
      %2512 = vmatpush1.bf16.msra.mxu0 %v2283
      %2513 = vmatprep.subr.bf16.mxu0 %v2286
      %2514 = vmatpush1.bf16.msra.mxu0 %v2285
      %2515 = vmatprep.subr.bf16.mxu0 %v2288
      %2516 = vmatpush1.bf16.msra.mxu0 %v2287
      %2517 = vmatprep.subr.bf16.mxu0 %v2290
      %2518 = vmatpush1.bf16.msra.mxu0 %v2289
      %2519 = vmatprep.mubr.bf16.mxu0 %v1821
      %2520 = vmatmul.mubr.bf16.gmra.mrb[0].mxu0 %v1820
      %v2521 = vpop.f32.mrb[0].mxu0
      %v2522 = vadd.f32 0.0, %v2521
      %v2523 = vpop.f32.mrb[0].mxu0
      %v2524 = vadd.f32 0.0, %v2523
      %v2525 = vpop.f32.mrb[0].mxu0
      %v2526 = vadd.f32 0.0, %v2525
      %v2527 = vpop.f32.mrb[0].mxu0
      %v2528 = vadd.f32 0.0, %v2527
      %2529 = vdwg.mxu0
      %2530 = vmatprep.subr.bf16.mxu0 %v2292
      %2531 = vmatpush1.bf16.msra.mxu0 %v2291
      %2532 = vmatprep.subr.bf16.mxu0 %v2294
      %2533 = vmatpush1.bf16.msra.mxu0 %v2293
      %2534 = vmatprep.subr.bf16.mxu0 %v2296
      %2535 = vmatpush1.bf16.msra.mxu0 %v2295
      %2536 = vmatprep.subr.bf16.mxu0 %v2298
      %2537 = vmatpush1.bf16.msra.mxu0 %v2297
      %2538 = vmatprep.subr.bf16.mxu0 %v2300
      %2539 = vmatpush1.bf16.msra.mxu0 %v2299
      %2540 = vmatprep.subr.bf16.mxu0 %v2302
      %2541 = vmatpush1.bf16.msra.mxu0 %v2301
      %2542 = vmatprep.subr.bf16.mxu0 %v2304
      %2543 = vmatpush1.bf16.msra.mxu0 %v2303
      %2544 = vmatprep.subr.bf16.mxu0 %v2306
      %2545 = vmatpush1.bf16.msra.mxu0 %v2305
      %2546 = vmatprep.subr.bf16.mxu0 %v2308
      %2547 = vmatpush1.bf16.msra.mxu0 %v2307
      %2548 = vmatprep.subr.bf16.mxu0 %v2310
      %2549 = vmatpush1.bf16.msra.mxu0 %v2309
      %2550 = vmatprep.subr.bf16.mxu0 %v2312
      %2551 = vmatpush1.bf16.msra.mxu0 %v2311
      %2552 = vmatprep.subr.bf16.mxu0 %v2314
      %2553 = vmatpush1.bf16.msra.mxu0 %v2313
      %2554 = vmatprep.subr.bf16.mxu0 %v2316
      %2555 = vmatpush1.bf16.msra.mxu0 %v2315
      %2556 = vmatprep.subr.bf16.mxu0 %v2318
      %2557 = vmatpush1.bf16.msra.mxu0 %v2317
      %2558 = vmatprep.subr.bf16.mxu0 %v2320
      %2559 = vmatpush1.bf16.msra.mxu0 %v2319
      %2560 = vmatprep.subr.bf16.mxu0 %v2322
      %2561 = vmatpush1.bf16.msra.mxu0 %v2321
      %2562 = vmatprep.mubr.bf16.mxu0 %v1823
      %2563 = vmatmul.mubr.bf16.gmra.mrb[0].mxu0 %v1822
      %v2564 = vpop.f32.mrb[0].mxu0
      %v2565 = vadd.f32 %v2522, %v2564
      %v2566 = vpop.f32.mrb[0].mxu0
      %v2567 = vadd.f32 %v2524, %v2566
      %v2568 = vpop.f32.mrb[0].mxu0
      %v2569 = vadd.f32 %v2526, %v2568
      %v2570 = vpop.f32.mrb[0].mxu0
      %v2571 = vadd.f32 %v2528, %v2570
      %2572 = vdwg.mxu0
      %2573 = vmatprep.subr.bf16.mxu0 %v2324
      %2574 = vmatpush1.bf16.msra.mxu0 %v2323
      %2575 = vmatprep.subr.bf16.mxu0 %v2326
      %2576 = vmatpush1.bf16.msra.mxu0 %v2325
      %2577 = vmatprep.subr.bf16.mxu0 %v2328
      %2578 = vmatpush1.bf16.msra.mxu0 %v2327
      %2579 = vmatprep.subr.bf16.mxu0 %v2330
      %2580 = vmatpush1.bf16.msra.mxu0 %v2329
      %2581 = vmatprep.subr.bf16.mxu0 %v2332
      %2582 = vmatpush1.bf16.msra.mxu0 %v2331
      %2583 = vmatprep.subr.bf16.mxu0 %v2334
      %2584 = vmatpush1.bf16.msra.mxu0 %v2333
      %2585 = vmatprep.subr.bf16.mxu0 %v2336
      %2586 = vmatpush1.bf16.msra.mxu0 %v2335
      %2587 = vmatprep.subr.bf16.mxu0 %v2338
      %2588 = vmatpush1.bf16.msra.mxu0 %v2337
      %2589 = vmatprep.subr.bf16.mxu0 %v2340
      %2590 = vmatpush1.bf16.msra.mxu0 %v2339
      %2591 = vmatprep.subr.bf16.mxu0 %v2342
      %2592 = vmatpush1.bf16.msra.mxu0 %v2341
      %2593 = vmatprep.subr.bf16.mxu0 %v2344
      %2594 = vmatpush1.bf16.msra.mxu0 %v2343
      %2595 = vmatprep.subr.bf16.mxu0 %v2346
      %2596 = vmatpush1.bf16.msra.mxu0 %v2345
      %2597 = vmatprep.subr.bf16.mxu0 %v2348
      %2598 = vmatpush1.bf16.msra.mxu0 %v2347
      %2599 = vmatprep.subr.bf16.mxu0 %v2350
      %2600 = vmatpush1.bf16.msra.mxu0 %v2349
      %2601 = vmatprep.subr.bf16.mxu0 %v2352
      %2602 = vmatpush1.bf16.msra.mxu0 %v2351
      %2603 = vmatprep.subr.bf16.mxu0 %v2354
      %2604 = vmatpush1.bf16.msra.mxu0 %v2353
      %2605 = vmatprep.mubr.bf16.mxu0 %v1825
      %2606 = vmatmul.mubr.bf16.gmra.mrb[0].mxu0 %v1824
      %v2607 = vpop.f32.mrb[0].mxu0
      %v2608 = vadd.f32 %v2565, %v2607
      %v2609 = vpop.f32.mrb[0].mxu0
      %v2610 = vadd.f32 %v2567, %v2609
      %v2611 = vpop.f32.mrb[0].mxu0
      %v2612 = vadd.f32 %v2569, %v2611
      %v2613 = vpop.f32.mrb[0].mxu0
      %v2614 = vadd.f32 %v2571, %v2613
      %2615 = vdwg.mxu0
      %2616 = vmatprep.subr.bf16.mxu0 %v2356
      %2617 = vmatpush1.bf16.msra.mxu0 %v2355
      %2618 = vmatprep.subr.bf16.mxu0 %v2358
      %2619 = vmatpush1.bf16.msra.mxu0 %v2357
      %2620 = vmatprep.subr.bf16.mxu0 %v2360
      %2621 = vmatpush1.bf16.msra.mxu0 %v2359
      %2622 = vmatprep.subr.bf16.mxu0 %v2362
      %2623 = vmatpush1.bf16.msra.mxu0 %v2361
      %2624 = vmatprep.subr.bf16.mxu0 %v2364
      %2625 = vmatpush1.bf16.msra.mxu0 %v2363
      %2626 = vmatprep.subr.bf16.mxu0 %v2485
      %2627 = vmatpush1.bf16.msra.mxu0 %v2482
      %2628 = vmatprep.subr.bf16.mxu0 0
      %2629 = vmatpush1.bf16.msra.mxu0 0
      %2630 = vmatprep.subr.bf16.mxu0 0
      %2631 = vmatpush1.bf16.msra.mxu0 0
      %2632 = vmatprep.subr.bf16.mxu0 0
      %2633 = vmatpush1.bf16.msra.mxu0 0
      %2634 = vmatprep.subr.bf16.mxu0 0
      %2635 = vmatpush1.bf16.msra.mxu0 0
      %2636 = vmatprep.subr.bf16.mxu0 0
      %2637 = vmatpush1.bf16.msra.mxu0 0
      %2638 = vmatprep.subr.bf16.mxu0 0
      %2639 = vmatpush1.bf16.msra.mxu0 0
      %2640 = vmatprep.subr.bf16.mxu0 0
      %2641 = vmatpush1.bf16.msra.mxu0 0
      %2642 = vmatprep.subr.bf16.mxu0 0
      %2643 = vmatpush1.bf16.msra.mxu0 0
      %2644 = vmatprep.subr.bf16.mxu0 0
      %2645 = vmatpush1.bf16.msra.mxu0 0
      %2646 = vmatprep.subr.bf16.mxu0 0
      %2647 = vmatpush1.bf16.msra.mxu0 0
      %2648 = vmatprep.mubr.bf16.mxu0 0
      %2649 = vmatmul.mubr.bf16.gmra.mrb[0].mxu0 %v2475
      %v2650 = vpop.f32.mrb[0].mxu0
      %v2651 = vadd.f32 %v2608, %v2650
      %v2652 = vpop.f32.mrb[0].mxu0
      %v2653 = vadd.f32 %v2610, %v2652
      %v2654 = vpop.f32.mrb[0].mxu0
      %v2655 = vadd.f32 %v2612, %v2654
      %v2656 = vpop.f32.mrb[0].mxu0
      %v2657 = vadd.f32 %v2614, %v2656
      %2658 = vdwg.mxu0
      %v2659 = vpack.c.bf16 %v2655, %v2651
      %v2660 = vpack.c.bf16 %v2657, %v2653
      %2661 = vst [vmem:[#allocation3] sm:$0xff] %v2659
      %vm2662 = vcmask 97280
      %2663 = vst.msk [vmem:[#allocation3 + $0x8] sm:$0xff] %vm2662, %v2660
      %2666 = vrot.lane.b32.xlu0 %v2659, 127
      %v2667 = vpop.permute.xlu0 %2666
      %2668 = vrot.lane.b32.xlu0 %v2660, 127
      %v2669 = vpop.permute.xlu0 %2668
      %v2670 = vsel %vm328, %v2667, %v2669
      %2673 = vst [vmem:[#allocation3 + $0x10] sm:$0xff] %v2670
      %2674 = vst.msk [vmem:[#allocation3 + $0x18] sm:$0xff] %vm2662, %v2669
      %2675 = vrot.lane.b32.xlu0 %v2659, 126
      %v2676 = vpop.permute.xlu0 %2675
      %2677 = vrot.lane.b32.xlu0 %v2660, 126
      %v2678 = vpop.permute.xlu0 %2677
      %v2679 = vsel %vm366, %v2676, %v2678
      %2682 = vst [vmem:[#allocation3 + $0x20] sm:$0xff] %v2679
      %2683 = vst.msk [vmem:[#allocation3 + $0x28] sm:$0xff] %vm2662, %v2678
      %2684 = vrot.lane.b32.xlu0 %v2659, 125
      %v2685 = vpop.permute.xlu0 %2684
      %2686 = vrot.lane.b32.xlu0 %v2660, 125
      %v2687 = vpop.permute.xlu0 %2686
      %v2688 = vsel %vm404, %v2685, %v2687
      %2691 = vst [vmem:[#allocation3 + $0x30] sm:$0xff] %v2688
      %2692 = vst.msk [vmem:[#allocation3 + $0x38] sm:$0xff] %vm2662, %v2687
      %2693 = vrot.lane.b32.xlu0 %v2659, 124
      %v2694 = vpop.permute.xlu0 %2693
      %2695 = vrot.lane.b32.xlu0 %v2660, 124
      %v2696 = vpop.permute.xlu0 %2695
      %v2697 = vsel %vm442, %v2694, %v2696
      %2700 = vst [vmem:[#allocation3 + $0x40] sm:$0xff] %v2697
      %2701 = vst.msk [vmem:[#allocation3 + $0x48] sm:$0xff] %vm2662, %v2696
      %2702 = vrot.lane.b32.xlu0 %v2659, 114
      %v2703 = vpop.permute.xlu0 %2702
      %2704 = vrot.lane.b32.xlu0 %v2660, 114
      %v2705 = vpop.permute.xlu0 %2704
      %vm2706 = vcmask 932864
      %v2707 = vsel %vm2706, %v2703, %v2705
      %2710 = vst [vmem:[#allocation3 + $0x50] sm:$0xff] %v2707
      %2711 = vst.msk [vmem:[#allocation3 + $0x58] sm:$0xff] %vm2662, %v2705
      %2712 = vrot.lane.b32.xlu0 %v2659, 113
      %v2713 = vpop.permute.xlu0 %2712
      %2714 = vrot.lane.b32.xlu0 %v2660, 113
      %v2715 = vpop.permute.xlu0 %2714
      %vm2716 = vcmask 924672
      %v2717 = vsel %vm2716, %v2713, %v2715
      %2720 = vst [vmem:[#allocation3 + $0x60] sm:$0xff] %v2717
      %2721 = vst.msk [vmem:[#allocation3 + $0x68] sm:$0xff] %vm2662, %v2715
      %2722 = vrot.lane.b32.xlu0 %v2659, 112
      %v2723 = vpop.permute.xlu0 %2722
      %2724 = vrot.lane.b32.xlu0 %v2660, 112
      %v2725 = vpop.permute.xlu0 %2724
      %vm2726 = vcmask 916480
      %v2727 = vsel %vm2726, %v2723, %v2725
      %2730 = vst [vmem:[#allocation3 + $0x70] sm:$0xff] %v2727
      %2731 = vst.msk [vmem:[#allocation3 + $0x78] sm:$0xff] %vm2662, %v2725
      %2732 = vrot.lane.b32.xlu0 %v2659, 111
      %v2733 = vpop.permute.xlu0 %2732
      %2734 = vrot.lane.b32.xlu0 %v2660, 111
      %v2735 = vpop.permute.xlu0 %2734
      %vm2736 = vcmask 908288
      %v2737 = vsel %vm2736, %v2733, %v2735
      %2740 = vst [vmem:[#allocation3 + $0x80] sm:$0xff] %v2737
      %2741 = vst.msk [vmem:[#allocation3 + $0x88] sm:$0xff] %vm2662, %v2735
      %2742 = vrot.lane.b32.xlu0 %v2659, 110
      %v2743 = vpop.permute.xlu0 %2742
      %2744 = vrot.lane.b32.xlu0 %v2660, 110
      %v2745 = vpop.permute.xlu0 %2744
      %vm2746 = vcmask 900096
      %v2747 = vsel %vm2746, %v2743, %v2745
      %2750 = vst [vmem:[#allocation3 + $0x90] sm:$0xff] %v2747
      %2751 = vst.msk [vmem:[#allocation3 + $0x98] sm:$0xff] %vm2662, %v2745
      %2752 = vrot.lane.b32.xlu0 %v2659, 100
      %v2753 = vpop.permute.xlu0 %2752
      %2754 = vrot.lane.b32.xlu0 %v2660, 100
      %v2755 = vpop.permute.xlu0 %2754
      %vm2756 = vcmask 818176
      %v2757 = vsel %vm2756, %v2753, %v2755
      %2760 = vst [vmem:[#allocation3 + $0xa0] sm:$0xff] %v2757
      %2761 = vst.msk [vmem:[#allocation3 + $0xa8] sm:$0xff] %vm2662, %v2755
      %2762 = vrot.lane.b32.xlu0 %v2659, 99
      %v2763 = vpop.permute.xlu0 %2762
      %2764 = vrot.lane.b32.xlu0 %v2660, 99
      %v2765 = vpop.permute.xlu0 %2764
      %vm2766 = vcmask 809984
      %v2767 = vsel %vm2766, %v2763, %v2765
      %2770 = vst [vmem:[#allocation3 + $0xb0] sm:$0xff] %v2767
      %2771 = vst.msk [vmem:[#allocation3 + $0xb8] sm:$0xff] %vm2662, %v2765
      %2772 = vrot.lane.b32.xlu0 %v2659, 98
      %v2773 = vpop.permute.xlu0 %2772
      %2774 = vrot.lane.b32.xlu0 %v2660, 98
      %v2775 = vpop.permute.xlu0 %2774
      %vm2776 = vcmask 801792
      %v2777 = vsel %vm2776, %v2773, %v2775
      %2780 = vst [vmem:[#allocation3 + $0xc0] sm:$0xff] %v2777
      %2781 = vst.msk [vmem:[#allocation3 + $0xc8] sm:$0xff] %vm2662, %v2775
      %2782 = vrot.lane.b32.xlu0 %v2659, 97
      %v2783 = vpop.permute.xlu0 %2782
      %2784 = vrot.lane.b32.xlu0 %v2660, 97
      %v2785 = vpop.permute.xlu0 %2784
      %vm2786 = vcmask 793600
      %v2787 = vsel %vm2786, %v2783, %v2785
      %2790 = vst [vmem:[#allocation3 + $0xd0] sm:$0xff] %v2787
      %2791 = vst.msk [vmem:[#allocation3 + $0xd8] sm:$0xff] %vm2662, %v2785
      %2792 = vrot.lane.b32.xlu0 %v2659, 96
      %v2793 = vpop.permute.xlu0 %2792
      %2794 = vrot.lane.b32.xlu0 %v2660, 96
      %v2795 = vpop.permute.xlu0 %2794
      %v2796 = vsel %vm480, %v2793, %v2795
      %2799 = vst [vmem:[#allocation3 + $0xe0] sm:$0xff] %v2796
      %2800 = vst.msk [vmem:[#allocation3 + $0xe8] sm:$0xff] %vm2662, %v2795
      %2801 = vrot.lane.b32.xlu0 %v2659, 86
      %v2802 = vpop.permute.xlu0 %2801
      %2803 = vrot.lane.b32.xlu0 %v2660, 86
      %v2804 = vpop.permute.xlu0 %2803
      %vm2805 = vcmask 703488
      %v2806 = vsel %vm2805, %v2802, %v2804
      %2809 = vst [vmem:[#allocation3 + $0xf0] sm:$0xff] %v2806
      %2810 = vst.msk [vmem:[#allocation3 + $0xf8] sm:$0xff] %vm2662, %v2804
      %2811 = vrot.lane.b32.xlu0 %v2659, 85
      %v2812 = vpop.permute.xlu0 %2811
      %2813 = vrot.lane.b32.xlu0 %v2660, 85
      %v2814 = vpop.permute.xlu0 %2813
      %vm2815 = vcmask 695296
      %v2816 = vsel %vm2815, %v2812, %v2814
      %2819 = vst [vmem:[#allocation3 + $0x100] sm:$0xff] %v2816
      %2820 = vst.msk [vmem:[#allocation3 + $0x108] sm:$0xff] %vm2662, %v2814
      %2821 = vrot.lane.b32.xlu0 %v2659, 84
      %v2822 = vpop.permute.xlu0 %2821
      %2823 = vrot.lane.b32.xlu0 %v2660, 84
      %v2824 = vpop.permute.xlu0 %2823
      %vm2825 = vcmask 687104
      %v2826 = vsel %vm2825, %v2822, %v2824
      %2829 = vst [vmem:[#allocation3 + $0x110] sm:$0xff] %v2826
      %2830 = vst.msk [vmem:[#allocation3 + $0x118] sm:$0xff] %vm2662, %v2824
      %2831 = vrot.lane.b32.xlu0 %v2659, 83
      %v2832 = vpop.permute.xlu0 %2831
      %2833 = vrot.lane.b32.xlu0 %v2660, 83
      %v2834 = vpop.permute.xlu0 %2833
      %vm2835 = vcmask 678912
      %v2836 = vsel %vm2835, %v2832, %v2834
      %2839 = vst [vmem:[#allocation3 + $0x120] sm:$0xff] %v2836
      %2840 = vst.msk [vmem:[#allocation3 + $0x128] sm:$0xff] %vm2662, %v2834
      %2841 = vrot.lane.b32.xlu0 %v2659, 82
      %v2842 = vpop.permute.xlu0 %2841
      %2843 = vrot.lane.b32.xlu0 %v2660, 82
      %v2844 = vpop.permute.xlu0 %2843
      %vm2845 = vcmask 670720
      %v2846 = vsel %vm2845, %v2842, %v2844
      %2849 = vst [vmem:[#allocation3 + $0x130] sm:$0xff] %v2846
      %2850 = vst.msk [vmem:[#allocation3 + $0x138] sm:$0xff] %vm2662, %v2844
      %2851 = vrot.lane.b32.xlu0 %v2659, 72
      %v2852 = vpop.permute.xlu0 %2851
      %2853 = vrot.lane.b32.xlu0 %v2660, 72
      %v2854 = vpop.permute.xlu0 %2853
      %vm2855 = vcmask 588800
      %v2856 = vsel %vm2855, %v2852, %v2854
      %2859 = vst [vmem:[#allocation3 + $0x140] sm:$0xff] %v2856
      %2860 = vst.msk [vmem:[#allocation3 + $0x148] sm:$0xff] %vm2662, %v2854
      %2861 = vrot.lane.b32.xlu0 %v2659, 71
      %v2862 = vpop.permute.xlu0 %2861
      %2863 = vrot.lane.b32.xlu0 %v2660, 71
      %v2864 = vpop.permute.xlu0 %2863
      %vm2865 = vcmask 580608
      %v2866 = vsel %vm2865, %v2862, %v2864
      %2869 = vst [vmem:[#allocation3 + $0x150] sm:$0xff] %v2866
      %2870 = vst.msk [vmem:[#allocation3 + $0x158] sm:$0xff] %vm2662, %v2864
      %2871 = vrot.lane.b32.xlu0 %v2659, 70
      %v2872 = vpop.permute.xlu0 %2871
      %2873 = vrot.lane.b32.xlu0 %v2660, 70
      %v2874 = vpop.permute.xlu0 %2873
      %vm2875 = vcmask 572416
      %v2876 = vsel %vm2875, %v2872, %v2874
      %2879 = vst [vmem:[#allocation3 + $0x160] sm:$0xff] %v2876
      %2880 = vst.msk [vmem:[#allocation3 + $0x168] sm:$0xff] %vm2662, %v2874
      %2881 = vrot.lane.b32.xlu0 %v2659, 69
      %v2882 = vpop.permute.xlu0 %2881
      %2883 = vrot.lane.b32.xlu0 %v2660, 69
      %v2884 = vpop.permute.xlu0 %2883
      %vm2885 = vcmask 564224
      %v2886 = vsel %vm2885, %v2882, %v2884
      %2889 = vst [vmem:[#allocation3 + $0x170] sm:$0xff] %v2886
      %2890 = vst.msk [vmem:[#allocation3 + $0x178] sm:$0xff] %vm2662, %v2884
      %2891 = vrot.lane.b32.xlu0 %v2659, 68
      %v2892 = vpop.permute.xlu0 %2891
      %2893 = vrot.lane.b32.xlu0 %v2660, 68
      %v2894 = vpop.permute.xlu0 %2893
      %vm2895 = vcmask 556032
      %v2896 = vsel %vm2895, %v2892, %v2894
      %2899 = vst [vmem:[#allocation3 + $0x180] sm:$0xff] %v2896
      %2900 = vst.msk [vmem:[#allocation3 + $0x188] sm:$0xff] %vm2662, %v2894
      %v2901 = vld [vmem:[%s5] sm:$0xff]
      %v2902 = vld [vmem:[%s5 + $0x8] sm:$0xff]
      %v2903 = vld [vmem:[%s5 + $0x10] sm:$0xff]
      %v2904 = vld [vmem:[%s5 + $0x18] sm:$0xff]
      %v2905 = vld [vmem:[#allocation3] sm:$0xff]
      %v2906 = vld [vmem:[#allocation3 + $0x8] sm:$0xff]
      %v2907 = vld [vmem:[#allocation3 + $0x10] sm:$0xff]
      %v2908 = vld [vmem:[#allocation3 + $0x18] sm:$0xff]
      %v2909 = vld [vmem:[#allocation3 + $0x20] sm:$0xff]
      %v2910 = vld [vmem:[#allocation3 + $0x28] sm:$0xff]
      %v2911 = vld [vmem:[#allocation3 + $0x30] sm:$0xff]
      %v2912 = vld [vmem:[#allocation3 + $0x38] sm:$0xff]
      %v2913 = vld [vmem:[#allocation3 + $0x40] sm:$0xff]
      %v2914 = vld [vmem:[#allocation3 + $0x48] sm:$0xff]
      %v2915 = vld [vmem:[#allocation3 + $0x50] sm:$0xff]
      %v2916 = vld [vmem:[#allocation3 + $0x58] sm:$0xff]
      %v2917 = vld [vmem:[#allocation3 + $0x60] sm:$0xff]
      %v2918 = vld [vmem:[#allocation3 + $0x68] sm:$0xff]
      %v2919 = vld [vmem:[#allocation3 + $0x70] sm:$0xff]
      %v2920 = vld [vmem:[#allocation3 + $0x78] sm:$0xff]
      %v2921 = vld [vmem:[#allocation3 + $0x80] sm:$0xff]
      %v2922 = vld [vmem:[#allocation3 + $0x88] sm:$0xff]
      %v2923 = vld [vmem:[#allocation3 + $0x90] sm:$0xff]
      %v2924 = vld [vmem:[#allocation3 + $0x98] sm:$0xff]
      %v2925 = vld [vmem:[#allocation3 + $0xa0] sm:$0xff]
      %v2926 = vld [vmem:[#allocation3 + $0xa8] sm:$0xff]
      %v2927 = vld [vmem:[#allocation3 + $0xb0] sm:$0xff]
      %v2928 = vld [vmem:[#allocation3 + $0xb8] sm:$0xff]
      %v2929 = vld [vmem:[#allocation3 + $0xc0] sm:$0xff]
      %v2930 = vld [vmem:[#allocation3 + $0xc8] sm:$0xff]
      %v2931 = vld [vmem:[#allocation3 + $0xd0] sm:$0xff]
      %v2932 = vld [vmem:[#allocation3 + $0xd8] sm:$0xff]
      %v2933 = vld [vmem:[#allocation3 + $0xe0] sm:$0xff]
      %v2934 = vld [vmem:[#allocation3 + $0xe8] sm:$0xff]
      %v2935 = vld [vmem:[#allocation3 + $0xf0] sm:$0xff]
      %v2936 = vld [vmem:[#allocation3 + $0xf8] sm:$0xff]
      %v2937 = vld [vmem:[#allocation3 + $0x100] sm:$0xff]
      %v2938 = vld [vmem:[#allocation3 + $0x108] sm:$0xff]
      %v2939 = vld [vmem:[#allocation3 + $0x110] sm:$0xff]
      %v2940 = vld [vmem:[#allocation3 + $0x118] sm:$0xff]
      %v2941 = vld [vmem:[#allocation3 + $0x120] sm:$0xff]
      %v2942 = vld [vmem:[#allocation3 + $0x128] sm:$0xff]
      %v2943 = vld [vmem:[#allocation3 + $0x130] sm:$0xff]
      %v2944 = vld [vmem:[#allocation3 + $0x138] sm:$0xff]
      %v2945 = vld [vmem:[#allocation3 + $0x140] sm:$0xff]
      %v2946 = vld [vmem:[#allocation3 + $0x148] sm:$0xff]
      %v2947 = vld [vmem:[#allocation3 + $0x150] sm:$0xff]
      %v2948 = vld [vmem:[#allocation3 + $0x158] sm:$0xff]
      %v2949 = vld [vmem:[#allocation3 + $0x160] sm:$0xff]
      %v2950 = vld [vmem:[#allocation3 + $0x168] sm:$0xff]
      %v2951 = vld [vmem:[#allocation3 + $0x170] sm:$0xff]
      %v2952 = vld [vmem:[#allocation3 + $0x178] sm:$0xff]
      %v2953 = vld [vmem:[#allocation3 + $0x180] sm:$0xff]
      %v2954 = vld [vmem:[#allocation3 + $0x188] sm:$0xff]
      %v2955 = vld [vmem:[%s6] sm:$0xff]
      %v2956 = vld [vmem:[%s6 + $0x8] sm:$0xff]
      %2958 = vset.pattern.permute.xlu0 0
      %2959 = vperm.xlu0 %2958, %v2955
      %v2960 = vpop.permute.xlu0 %2959
      %2963 = vset.pattern.permute.xlu0 0
      %2964 = vperm.xlu0 %2963, %v2956
      %v2965 = vpop.permute.xlu0 %2964
      %v2971 = vunpack.c.l.b16 %v2901
      %v2972 = vunpack.c.h.b16 %v2901
      %v2973 = vunpack.c.l.b16 %v2902
      %v2974 = vunpack.c.h.b16 %v2902
      %v2975 = vunpack.c.l.b16 %v2903
      %v2976 = vunpack.c.h.b16 %v2903
      %v2977 = vunpack.c.l.b16 %v2904
      %v2978 = vunpack.c.h.b16 %v2904
      %v2979 = vpack.c.b16 %v2975, %v2971
      %v2980 = vpack.c.b16 %v2976, %v2972
      %v2981 = vpack.c.b16 %v2977, %v2973
      %v2982 = vpack.c.b16 %v2978, %v2974
      %v2987 = vsel %vm1296, %v2982, 0
      %2989 = vmatprep.subr.bf16.mxu0 %v2906
      %2990 = vmatpush1.bf16.msra.mxu0 %v2905
      %2991 = vmatprep.subr.bf16.mxu0 %v2908
      %2992 = vmatpush1.bf16.msra.mxu0 %v2907
      %2993 = vmatprep.subr.bf16.mxu0 %v2910
      %2994 = vmatpush1.bf16.msra.mxu0 %v2909
      %2995 = vmatprep.subr.bf16.mxu0 %v2912
      %2996 = vmatpush1.bf16.msra.mxu0 %v2911
      %2997 = vmatprep.subr.bf16.mxu0 %v2914
      %2998 = vmatpush1.bf16.msra.mxu0 %v2913
      %2999 = vmatprep.subr.bf16.mxu0 %v2916
      %3000 = vmatpush1.bf16.msra.mxu0 %v2915
      %3001 = vmatprep.subr.bf16.mxu0 %v2918
      %3002 = vmatpush1.bf16.msra.mxu0 %v2917
      %3003 = vmatprep.subr.bf16.mxu0 %v2920
      %3004 = vmatpush1.bf16.msra.mxu0 %v2919
      %3005 = vmatprep.subr.bf16.mxu0 %v2922
      %3006 = vmatpush1.bf16.msra.mxu0 %v2921
      %3007 = vmatprep.subr.bf16.mxu0 %v2924
      %3008 = vmatpush1.bf16.msra.mxu0 %v2923
      %3009 = vmatprep.subr.bf16.mxu0 %v2926
      %3010 = vmatpush1.bf16.msra.mxu0 %v2925
      %3011 = vmatprep.subr.bf16.mxu0 %v2928
      %3012 = vmatpush1.bf16.msra.mxu0 %v2927
      %3013 = vmatprep.subr.bf16.mxu0 %v2930
      %3014 = vmatpush1.bf16.msra.mxu0 %v2929
      %3015 = vmatprep.subr.bf16.mxu0 %v2932
      %3016 = vmatpush1.bf16.msra.mxu0 %v2931
      %3017 = vmatprep.subr.bf16.mxu0 %v2934
      %3018 = vmatpush1.bf16.msra.mxu0 %v2933
      %3019 = vmatprep.subr.bf16.mxu0 %v2936
      %3020 = vmatpush1.bf16.msra.mxu0 %v2935
      %3021 = vmatprep.mubr.bf16.mxu0 %v2980
      %3022 = vmatmul.mubr.bf16.gmra.mrb[0].mxu0 %v2979
      %v3023 = vpop.f32.mrb[0].mxu0
      %v3024 = vadd.f32 %v2960, %v3023
      %v3025 = vpop.f32.mrb[0].mxu0
      %v3026 = vadd.f32 %v2960, %v3025
      %v3027 = vpop.f32.mrb[0].mxu0
      %v3028 = vadd.f32 %v2965, %v3027
      %v3029 = vpop.f32.mrb[0].mxu0
      %v3030 = vadd.f32 %v2965, %v3029
      %3031 = vdwg.mxu0
      %3032 = vmatprep.subr.bf16.mxu0 %v2938
      %3033 = vmatpush1.bf16.msra.mxu0 %v2937
      %3034 = vmatprep.subr.bf16.mxu0 %v2940
      %3035 = vmatpush1.bf16.msra.mxu0 %v2939
      %3036 = vmatprep.subr.bf16.mxu0 %v2942
      %3037 = vmatpush1.bf16.msra.mxu0 %v2941
      %3038 = vmatprep.subr.bf16.mxu0 %v2944
      %3039 = vmatpush1.bf16.msra.mxu0 %v2943
      %3040 = vmatprep.subr.bf16.mxu0 %v2946
      %3041 = vmatpush1.bf16.msra.mxu0 %v2945
      %3042 = vmatprep.subr.bf16.mxu0 %v2948
      %3043 = vmatpush1.bf16.msra.mxu0 %v2947
      %3044 = vmatprep.subr.bf16.mxu0 %v2950
      %3045 = vmatpush1.bf16.msra.mxu0 %v2949
      %3046 = vmatprep.subr.bf16.mxu0 %v2952
      %3047 = vmatpush1.bf16.msra.mxu0 %v2951
      %3048 = vmatprep.subr.bf16.mxu0 %v2954
      %3049 = vmatpush1.bf16.msra.mxu0 %v2953
      %3050 = vmatprep.subr.bf16.mxu0 0
      %3051 = vmatpush1.bf16.msra.mxu0 0
      %3052 = vmatprep.subr.bf16.mxu0 0
      %3053 = vmatpush1.bf16.msra.mxu0 0
      %3054 = vmatprep.subr.bf16.mxu0 0
      %3055 = vmatpush1.bf16.msra.mxu0 0
      %3056 = vmatprep.subr.bf16.mxu0 0
      %3057 = vmatpush1.bf16.msra.mxu0 0
      %3058 = vmatprep.subr.bf16.mxu0 0
      %3059 = vmatpush1.bf16.msra.mxu0 0
      %3060 = vmatprep.subr.bf16.mxu0 0
      %3061 = vmatpush1.bf16.msra.mxu0 0
      %3062 = vmatprep.subr.bf16.mxu0 0
      %3063 = vmatpush1.bf16.msra.mxu0 0
      %3064 = vmatprep.mubr.bf16.mxu0 %v2987
      %3065 = vmatmul.mubr.bf16.gmra.mrb[0].mxu0 %v2981
      %v3066 = vpop.f32.mrb[0].mxu0
      %v3067 = vadd.f32 %v3024, %v3066
      %v3068 = vpop.f32.mrb[0].mxu0
      %v3069 = vadd.f32 %v3026, %v3068
      %v3070 = vpop.f32.mrb[0].mxu0
      %v3071 = vadd.f32 %v3028, %v3070
      %v3072 = vpop.f32.mrb[0].mxu0
      %v3073 = vadd.f32 %v3030, %v3072
      %3074 = vdwg.mxu0
      %v3075 = vmax.f32 %v3067, 0.0
      %v3076 = vmax.f32 %v3069, 0.0
      %v3077 = vmax.f32 %v3071, 0.0
      %v3078 = vmax.f32 %v3073, 0.0
      %3081 = vrot.lane.b32.xlu0 %v3075, 127
      %v3082 = vpop.permute.xlu0 %3081
      %3083 = vrot.lane.b32.xlu0 %v3077, 127
      %v3084 = vpop.permute.xlu0 %3083
      %v3087 = vmax.f32 %v3075, %v3082
      %v3088 = vmax.f32 %v3077, %v3084
      %3091 = vrot.lane.b32.xlu0 %v3076, 127
      %v3092 = vpop.permute.xlu0 %3091
      %3093 = vrot.lane.b32.xlu0 %v3078, 127
      %v3094 = vpop.permute.xlu0 %3093
      %v3095 = vsel %vm1696, %v3082, %v3092
      %v3096 = vsel %vm1696, %v3084, %v3094
      %v3101 = vmax.f32 %v3075, %v3095
      %v3102 = vmax.f32 %v3076, %v3092
      %v3103 = vmax.f32 %v3077, %v3096
      %v3104 = vmax.f32 %v3078, %v3094
      %3109 = vrot.lane.b32.xlu0 %v3101, 114
      %v3110 = vpop.permute.xlu0 %3109
      %3111 = vrot.lane.b32.xlu0 %v3102, 114
      %v3112 = vpop.permute.xlu0 %3111
      %3113 = vrot.lane.b32.xlu0 %v3103, 114
      %v3114 = vpop.permute.xlu0 %3113
      %3115 = vrot.lane.b32.xlu0 %v3104, 114
      %v3116 = vpop.permute.xlu0 %3115
      %vm3117 = vcmask 932864
      %v3118 = vsel %vm3117, %v3110, %v3112
      %v3119 = vsel %vm3117, %v3114, %v3116
      %v3122 = vmax.f32 %v3087, %v3118
      %v3123 = vmax.f32 %v3088, %v3119
      %v3124 = vpack.c.bf16 %v3123, %v3122
      %v3125 = vld [vmem:[%s7] sm:$0xf]
      %v3126 = vld [vmem:[%s7 + $0x4] sm:$0xf]
      %v3127 = vld [vmem:[%s7 + $0x8] sm:$0xf]
      %v3128 = vld [vmem:[%s7 + $0xc] sm:$0xf]
      %v3129 = vld [vmem:[%s7 + $0x10] sm:$0xf]
      %v3130 = vld [vmem:[%s7 + $0x14] sm:$0xf]
      %v3131 = vld [vmem:[%s7 + $0x18] sm:$0xf]
      %v3132 = vld [vmem:[%s7 + $0x1c] sm:$0xf]
      %v3133 = vld [vmem:[%s7 + $0x20] sm:$0xf]
      %v3134 = vld [vmem:[%s7 + $0x24] sm:$0xf]
      %v3135 = vld [vmem:[%s7 + $0x28] sm:$0xf]
      %v3136 = vld [vmem:[%s7 + $0x2c] sm:$0xf]
      %v3137 = vld [vmem:[%s7 + $0x30] sm:$0xf]
      %v3138 = vld [vmem:[%s7 + $0x34] sm:$0xf]
      %v3139 = vld [vmem:[%s7 + $0x38] sm:$0xf]
      %v3140 = vld [vmem:[%s7 + $0x3c] sm:$0x7]
      %v3157 = vunpack.c.l.b16 %v3125
      %v3158 = vunpack.c.l.b16 %v3126
      %v3159 = vunpack.c.l.b16 %v3127
      %v3160 = vunpack.c.l.b16 %v3128
      %v3161 = vunpack.c.l.b16 %v3129
      %v3162 = vunpack.c.l.b16 %v3130
      %v3163 = vunpack.c.l.b16 %v3131
      %v3164 = vunpack.c.l.b16 %v3132
      %v3165 = vunpack.c.l.b16 %v3133
      %v3166 = vunpack.c.l.b16 %v3134
      %v3167 = vunpack.c.l.b16 %v3135
      %v3168 = vunpack.c.l.b16 %v3136
      %v3169 = vunpack.c.l.b16 %v3137
      %v3170 = vunpack.c.l.b16 %v3138
      %v3171 = vunpack.c.l.b16 %v3139
      %v3172 = vunpack.c.l.b16 %v3140
      %v3173 = vpack.c.b16 %v3158, %v3157
      %v3174 = vpack.c.b16 %v3160, %v3159
      %v3175 = vpack.c.b16 %v3162, %v3161
      %v3176 = vpack.c.b16 %v3164, %v3163
      %v3177 = vpack.c.b16 %v3166, %v3165
      %v3178 = vpack.c.b16 %v3168, %v3167
      %v3179 = vpack.c.b16 %v3170, %v3169
      %v3180 = vpack.c.b16 %v3172, %v3171
      %vm3188 = vcmask 1022976
      %v3190 = vsel %vm3188, %v3124, 0
      %vm3192 = vcmask 1045504
      %v3193 = vsel %vm3192, 4294967295, 65535
      %v3194 = vsel %vm2477, %v3193, 0
      %v3196 = vand.u32 %v3180, %v3194
      %3198 = vmatprep.subr.bf16.mxu0 0
      %3199 = vmatpush1.bf16.msra.mxu0 %v3173
      %3200 = vmatprep.subr.bf16.mxu0 0
      %3201 = vmatpush1.bf16.msra.mxu0 %v3174
      %3202 = vmatprep.subr.bf16.mxu0 0
      %3203 = vmatpush1.bf16.msra.mxu0 %v3175
      %3204 = vmatprep.subr.bf16.mxu0 0
      %3205 = vmatpush1.bf16.msra.mxu0 %v3176
      %3206 = vmatprep.subr.bf16.mxu0 0
      %3207 = vmatpush1.bf16.msra.mxu0 %v3177
      %3208 = vmatprep.subr.bf16.mxu0 0
      %3209 = vmatpush1.bf16.msra.mxu0 %v3178
      %3210 = vmatprep.subr.bf16.mxu0 0
      %3211 = vmatpush1.bf16.msra.mxu0 %v3179
      %3212 = vmatprep.subr.bf16.mxu0 0
      %3213 = vmatpush1.bf16.msra.mxu0 %v3196
      %3214 = vmatprep.subr.bf16.mxu0 0
      %3215 = vmatpush1.bf16.msra.mxu0 0
      %3216 = vmatprep.subr.bf16.mxu0 0
      %3217 = vmatpush1.bf16.msra.mxu0 0
      %3218 = vmatprep.subr.bf16.mxu0 0
      %3219 = vmatpush1.bf16.msra.mxu0 0
      %3220 = vmatprep.subr.bf16.mxu0 0
      %3221 = vmatpush1.bf16.msra.mxu0 0
      %3222 = vmatprep.subr.bf16.mxu0 0
      %3223 = vmatpush1.bf16.msra.mxu0 0
      %3224 = vmatprep.subr.bf16.mxu0 0
      %3225 = vmatpush1.bf16.msra.mxu0 0
      %3226 = vmatprep.subr.bf16.mxu0 0
      %3227 = vmatpush1.bf16.msra.mxu0 0
      %3228 = vmatprep.subr.bf16.mxu0 0
      %3229 = vmatpush1.bf16.msra.mxu0 0
      %3230 = vmatprep.mubr.bf16.mxu0 0
      %3231 = vmatmul.mubr.bf16.gmra.mrb[0].mxu0 %v3190
      %v3232 = vpop.f32.mrb[0].mxu0
      %v3233 = vadd.f32 0.0, %v3232
      %v3234 = vpop.f32.mrb[0].mxu0
      %v3235 = vpop.f32.mrb[0].mxu0
      %v3236 = vadd.f32 0.0, %v3235
      %v3237 = vpop.f32.mrb[0].mxu0
      %3238 = vdwg.mxu0
      %s3239 = smul.u32 %s45, 4
      %s3240 = scalar_lea.vmem %s8, %s3239
      %v3241 = vlaneseq
      %vm3242 = vcmp.ge.s32.totalorder %v3241, 0
      %vm3243 = vcmp.lt.s32.totalorder %v3241, 25
      %vm3244 = vmand %vm3242, %vm3243
      %3245 = vst.msk [vmem:[%s3240] sm:$0x1] %vm3244, %v3233
      %v3248 = vunpack.c.l.s4 1966171168
      %v3249 = vunpack.c.0.s8 %v3248
      %v3250 = vlaneseq
      %v3251 = vshrl.u32 %v3250, 7
      %v3252 = vsub.s32 %v3249, %v3251
      %v3253 = vrot.slane %v3233, %v3252
      %v3254 = vcombine.high %v3253, %v3253
      %v3256 = vunpack.c.l.s4 1966171168
      %v3257 = vunpack.c.0.s8 %v3256
      %v3258 = vlaneseq
      %v3259 = vshrl.u32 %v3258, 7
      %v3260 = vsub.s32 %v3257, %v3259
      %v3261 = vrot.slane %v3253, %v3260
      %v3263 = vunpack.c.l.s4 1966171168
      %v3264 = vunpack.c.0.s8 %v3263
      %v3265 = vlaneseq
      %v3266 = vshrl.u32 %v3265, 7
      %v3267 = vsub.s32 %v3264, %v3266
      %v3268 = vrot.slane %v3254, %v3267
      %3269 = vrot.lane.b32.xlu0 %v3268, 25
      %v3270 = vpop.permute.xlu0 %3269
      %vm3272 = vcmp.ge.s32.totalorder %v3241, 25
      %vm3273 = vcmp.lt.s32.totalorder %v3241, 50
      %vm3274 = vmand %vm3272, %vm3273
      %3275 = vst.msk [vmem:[%s3240] sm:$0x1] %vm3274, %v3270
      %v3276 = vcombine.high %v3261, %v3261
      %3277 = vrot.lane.b32.xlu0 %v3276, 50
      %v3278 = vpop.permute.xlu0 %3277
      %vm3280 = vcmp.ge.s32.totalorder %v3241, 50
      %vm3281 = vcmp.lt.s32.totalorder %v3241, 75
      %vm3282 = vmand %vm3280, %vm3281
      %3283 = vst.msk [vmem:[%s3240] sm:$0x1] %vm3282, %v3278
      %v3284 = vcombine.high %v3268, %v3268
      %3285 = vrot.lane.b32.xlu0 %v3284, 75
      %v3286 = vpop.permute.xlu0 %3285
      %vm3288 = vcmp.ge.s32.totalorder %v3241, 75
      %vm3289 = vcmp.lt.s32.totalorder %v3241, 100
      %vm3290 = vmand %vm3288, %vm3289
      %3291 = vst.msk [vmem:[%s3240] sm:$0x1] %vm3290, %v3286
      %v3292 = vcombine.high %v3233, %v3233
      %v3294 = vunpack.c.l.s4 1966171168
      %v3295 = vunpack.c.0.s8 %v3294
      %v3296 = vlaneseq
      %v3297 = vshrl.u32 %v3296, 7
      %v3298 = vsub.s32 %v3295, %v3297
      %v3299 = vrot.slane %v3292, %v3298
      %v3301 = vunpack.c.l.s4 1966171168
      %v3302 = vunpack.c.0.s8 %v3301
      %v3303 = vlaneseq
      %v3304 = vshrl.u32 %v3303, 7
      %v3305 = vsub.s32 %v3302, %v3304
      %v3306 = vrot.slane %v3299, %v3305
      %3307 = vrot.lane.b32.xlu0 %v3306, 100
      %v3308 = vpop.permute.xlu0 %3307
      %vm3310 = vcmp.ge.s32.totalorder %v3241, 100
      %vm3311 = vcmp.lt.s32.totalorder %v3241, 125
      %vm3312 = vmand %vm3310, %vm3311
      %3313 = vst.msk [vmem:[%s3240] sm:$0x1] %vm3312, %v3308
      %v3314 = vcombine.high %v3299, %v3299
      %v3316 = vunpack.c.l.s4 1966171168
      %v3317 = vunpack.c.0.s8 %v3316
      %v3318 = vlaneseq
      %v3319 = vshrl.u32 %v3318, 7
      %v3320 = vsub.s32 %v3317, %v3319
      %v3321 = vrot.slane %v3314, %v3320
      %3322 = vrot.lane.b32.xlu0 %v3321, 125
      %v3323 = vpop.permute.xlu0 %3322
      %v3324 = vrot.slane %v3323, 7
      %v3325 = vsel %vm3188, %v3324, %v3323
      %vm3327 = vcmp.ge.s32.totalorder %v3241, 125
      %vm3328 = vcmp.lt.s32.totalorder %v3241, 150
      %vm3329 = vmand %vm3327, %vm3328
      %3330 = vst.msk [vmem:[%s3240] sm:$0x3] %vm3329, %v3325
      %v3331 = vcombine.high %v3306, %v3306
      %3332 = vrot.lane.b32.xlu0 %v3331, 22
      %v3333 = vpop.permute.xlu0 %3332
      %vm3335 = vcmp.ge.s32.totalorder %v3241, 22
      %vm3336 = vcmp.lt.s32.totalorder %v3241, 47
      %vm3337 = vmand %vm3335, %vm3336
      %3338 = vst.msk [vmem:[%s3240 + $0x1] sm:$0x1] %vm3337, %v3333
      %v3339 = vcombine.high %v3321, %v3321
      %3340 = vrot.lane.b32.xlu0 %v3339, 47
      %v3341 = vpop.permute.xlu0 %3340
      %vm3343 = vcmp.ge.s32.totalorder %v3241, 47
      %vm3344 = vcmp.lt.s32.totalorder %v3241, 72
      %vm3345 = vmand %vm3343, %vm3344
      %3346 = vst.msk [vmem:[%s3240 + $0x1] sm:$0x1] %vm3345, %v3341
      %v3349 = vunpack.c.l.s4 1966171168
      %v3350 = vunpack.c.0.s8 %v3349
      %v3351 = vlaneseq
      %v3352 = vshrl.u32 %v3351, 7
      %v3353 = vsub.s32 %v3350, %v3352
      %v3354 = vrot.slane %v3236, %v3353
      %v3356 = vunpack.c.l.s4 1966171168
      %v3357 = vunpack.c.0.s8 %v3356
      %v3358 = vlaneseq
      %v3359 = vshrl.u32 %v3358, 7
      %v3360 = vsub.s32 %v3357, %v3359
      %v3361 = vrot.slane %v3354, %v3360
      %3362 = vrot.lane.b32.xlu0 %v3361, 72
      %v3363 = vpop.permute.xlu0 %3362
      %vm3365 = vcmp.ge.s32.totalorder %v3241, 72
      %vm3366 = vcmp.lt.s32.totalorder %v3241, 97
      %vm3367 = vmand %vm3365, %vm3366
      %3368 = vst.msk [vmem:[%s3240 + $0x1] sm:$0x1] %vm3367, %v3363
      %v3369 = vcombine.high %v3354, %v3354
      %v3371 = vunpack.c.l.s4 1966171168
      %v3372 = vunpack.c.0.s8 %v3371
      %v3373 = vlaneseq
      %v3374 = vshrl.u32 %v3373, 7
      %v3375 = vsub.s32 %v3372, %v3374
      %v3376 = vrot.slane %v3369, %v3375
      %3377 = vrot.lane.b32.xlu0 %v3376, 97
      %v3378 = vpop.permute.xlu0 %3377
      %vm3380 = vcmp.ge.s32.totalorder %v3241, 97
      %vm3381 = vcmp.lt.s32.totalorder %v3241, 122
      %vm3382 = vmand %vm3380, %vm3381
      %3383 = vst.msk [vmem:[%s3240 + $0x1] sm:$0x1] %vm3382, %v3378
      %v3384 = vcombine.high %v3361, %v3361
      %3385 = vrot.lane.b32.xlu0 %v3384, 122
      %v3386 = vpop.permute.xlu0 %3385
      %v3387 = vrot.slane %v3386, 7
      %vm3388 = vcmask 998400
      %v3389 = vsel %vm3388, %v3387, %v3386
      %vm3391 = vcmp.ge.s32.totalorder %v3241, 122
      %vm3392 = vcmp.lt.s32.totalorder %v3241, 147
      %vm3393 = vmand %vm3391, %vm3392
      %3394 = vst.msk [vmem:[%s3240 + $0x1] sm:$0x3] %vm3393, %v3389
      %v3395 = vcombine.high %v3376, %v3376
      %3396 = vrot.lane.b32.xlu0 %v3395, 19
      %v3397 = vpop.permute.xlu0 %3396
      %vm3399 = vcmp.ge.s32.totalorder %v3241, 19
      %vm3400 = vcmp.lt.s32.totalorder %v3241, 44
      %vm3401 = vmand %vm3399, %vm3400
      %3402 = vst.msk [vmem:[%s3240 + $0x2] sm:$0x1] %vm3401, %v3397
      %v3403 = vcombine.high %v3236, %v3236
      %v3405 = vunpack.c.l.s4 1966171168
      %v3406 = vunpack.c.0.s8 %v3405
      %v3407 = vlaneseq
      %v3408 = vshrl.u32 %v3407, 7
      %v3409 = vsub.s32 %v3406, %v3408
      %v3410 = vrot.slane %v3403, %v3409
      %v3412 = vunpack.c.l.s4 1966171168
      %v3413 = vunpack.c.0.s8 %v3412
      %v3414 = vlaneseq
      %v3415 = vshrl.u32 %v3414, 7
      %v3416 = vsub.s32 %v3413, %v3415
      %v3417 = vrot.slane %v3410, %v3416
      %3418 = vrot.lane.b32.xlu0 %v3417, 44
      %v3419 = vpop.permute.xlu0 %3418
      %vm3421 = vcmp.ge.s32.totalorder %v3241, 44
      %vm3422 = vcmp.lt.s32.totalorder %v3241, 69
      %vm3423 = vmand %vm3421, %vm3422
      %3424 = vst.msk [vmem:[%s3240 + $0x2] sm:$0x1] %vm3423, %v3419
      %v3425 = vcombine.high %v3410, %v3410
      %v3427 = vunpack.c.l.s4 1966171168
      %v3428 = vunpack.c.0.s8 %v3427
      %v3429 = vlaneseq
      %v3430 = vshrl.u32 %v3429, 7
      %v3431 = vsub.s32 %v3428, %v3430
      %v3432 = vrot.slane %v3425, %v3431
      %3433 = vrot.lane.b32.xlu0 %v3432, 69
      %v3434 = vpop.permute.xlu0 %3433
      %vm3436 = vcmp.ge.s32.totalorder %v3241, 69
      %vm3437 = vcmp.lt.s32.totalorder %v3241, 94
      %vm3438 = vmand %vm3436, %vm3437
      %3439 = vst.msk [vmem:[%s3240 + $0x2] sm:$0x1] %vm3438, %v3434
      %v3440 = vcombine.high %v3417, %v3417
      %3441 = vrot.lane.b32.xlu0 %v3440, 94
      %v3442 = vpop.permute.xlu0 %3441
      %vm3444 = vcmp.ge.s32.totalorder %v3241, 94
      %vm3445 = vcmp.lt.s32.totalorder %v3241, 119
      %vm3446 = vmand %vm3444, %vm3445
      %3447 = vst.msk [vmem:[%s3240 + $0x2] sm:$0x1] %vm3446, %v3442
      %v3448 = vcombine.high %v3432, %v3432
      %3449 = vrot.lane.b32.xlu0 %v3448, 119
      %v3450 = vpop.permute.xlu0 %3449
      %v3451 = vrot.slane %v3450, 7
      %vm3452 = vcmask 973824
      %v3453 = vsel %vm3452, %v3451, %v3450
      %vm3455 = vcmp.ge.s32.totalorder %v3241, 119
      %vm3456 = vcmp.lt.s32.totalorder %v3241, 144
      %vm3457 = vmand %vm3455, %vm3456
      %3458 = vst.msk [vmem:[%s3240 + $0x2] sm:$0x3] %vm3457, %v3453
    $region42: #{net_forward.2} parent=1 // loop_footer
      %s49 = sadd.s32 1, %s45
    $region43: #{net_forward.2} parent=1 // loop_footer_branch
      %44 = sbr.rel target = $region39
    $region44: #{net_forward.2} parent=1 // loop_exit
      _
    // Predicated region
    $region45: #{net_forward.2} parent=1 // pred_check
      _
    $region46: #{net_forward.2} parent=1 // pred_check_branch
      %3460 = sbr.rel (0) target = $region48
    $region47: #{net_forward.2} parent=1 // pred_region
      _
    $region48: #{net_forward.2} parent=1 // pred_fallthru
      _
    // Predicated region
    $region49: #{net_forward.2} parent=1 // pred_check
      _
    $region50: #{net_forward.2} parent=1 // pred_check_branch
      %3462 = sbr.rel (0) target = $region52
    $region51: #{net_forward.2} parent=1 // pred_region
      _
    $region52: #{net_forward.2} parent=1 // pred_fallthru
      _
    %3463 = vsyncpa [#allocation5], 1

</llo_original>
